<compile_context>
chip_gen: v6e
topology: v6e:2x2x1
jax: 0.10.0
libtpu: 0.0.40
codegen_flags: <defaults>
</compile_context>

<pallas_src>
import jax
import jax.numpy as jnp
from jax.experimental import pallas as pl
from jax.experimental.pallas import tpu as pltpu

BN_EPS = 1e-5          # PyTorch BatchNorm2d default
LANE = 128
_MM_ROW_CAP = 512      # matmul M-tile target (>=512 rows ~85% of HBM roofline)
_NORM_ROW_CAP = 1024   # normalize-kernel M-tile target
_HEAD_LANE_CAP = 2048  # head lane-tile target
_VMEM_LIMIT = 32 * 1024 * 1024  # safe on v5e/v6e (128 MiB) and v7x (64 MiB)


# ------------------------------- helpers ----------------------------------- #

def _round_up(x, m):
    return (x + m - 1) // m * m


def _pick_rows_tile(m, cap):
    """Largest divisor of m that is <= cap and a multiple of 8 (or m itself)."""
    if m <= cap:
        return m
    for t in range(cap, 7, -1):
        if m % t == 0 and t % 8 == 0:
            return t
    return m


def _pick_lane_tile(m, cap):
    """Largest divisor of m that is <= cap and a multiple of 128 (or m itself)."""
    if m <= cap:
        return m
    for t in range(cap, LANE - 1, -1):
        if m % t == 0 and t % LANE == 0:
            return t
    return m


def _mosaic_params(ndims):
    return pltpu.CompilerParams(
        dimension_semantics=("parallel",) * ndims,
        vmem_limit_bytes=_VMEM_LIMIT,
    )


# ----------------------------- Pallas kernels ------------------------------ #

def _matmul_stats_kernel(p_ref, w_ref, y_ref, s_ref):
    """(TM, K) @ (K, C) on the MXU (bf16 in, f32 acc) + per-tile channel stats."""
    y = jnp.dot(p_ref[0], w_ref[0], preferred_element_type=jnp.float32)
    y_ref[0] = y
    ssum = jnp.sum(y, axis=0, keepdims=True)       # (1, C)
    ssq = jnp.sum(y * y, axis=0, keepdims=True)    # (1, C)
    s_ref[...] = jnp.concatenate([ssum, ssq], axis=0).reshape(s_ref.shape)


def _bn_relu_kernel(y_ref, sc_ref, sh_ref, o_ref):
    """Lane-dense fused BatchNorm(affine-folded) + ReLU, bf16 output."""
    o_ref[...] = jnp.maximum(
        y_ref[...] * sc_ref[...] + sh_ref[...], 0.0
    ).astype(o_ref.dtype)


def _matmul_bias_tanh_t_kernel(w_ref, p_ref, b_ref, o_ref):
    """Transposed head: (nc, K) @ (K, TM) so M sits on the 128-lane axis."""
    y = jnp.dot(w_ref[0], p_ref[0], preferred_element_type=jnp.float32)
    o_ref[0] = jnp.tanh(y + b_ref[...])


# ------------------------------ Pallas drivers ----------------------------- #

def _matmul_with_stats(patches, wmat):
    """patches: (G, M, K) bf16, wmat: (G, K, C) bf16.
    Returns y: (G, M, C) f32 and stats (2, C) f32 = [sum, sum_sq] over G and M."""
    G, M, K = patches.shape
    C = wmat.shape[-1]
    tm = _pick_rows_tile(M, _MM_ROW_CAP)
    nmt = M // tm
    cost = pl.CostEstimate(
        flops=2 * G * M * K * C,
        transcendentals=0,
        bytes_accessed=patches.size * 2 + wmat.size * 2 + G * M * C * 4,
    )
    y, partial = pl.pallas_call(
        _matmul_stats_kernel,
        grid=(G, nmt),
        in_specs=[
            pl.BlockSpec((1, tm, K), lambda g, i: (g, i, 0)),
            pl.BlockSpec((1, K, C), lambda g, i: (g, 0, 0)),   # weight resident over M
        ],
        out_specs=(
            pl.BlockSpec((1, tm, C), lambda g, i: (g, i, 0)),
            pl.BlockSpec((1, 1, 2, C), lambda g, i: (g, i, 0, 0)),
        ),
        out_shape=(
            jax.ShapeDtypeStruct((G, M, C), jnp.float32),
            jax.ShapeDtypeStruct((G, nmt, 2, C), jnp.float32),
        ),
        compiler_params=_mosaic_params(2),
        cost_estimate=cost,
    )(patches, wmat)
    stats = jnp.sum(partial, axis=(0, 1))                       # (2, C)
    return y, stats


def _bn_scale_shift(stats, count, gamma, beta, cpad):
    """Fold train-mode BN (biased variance, PyTorch eps placement) into a
    per-channel scale/shift. Padded channels get scale=shift=0."""
    cout = gamma.shape[0]
    gp = jnp.pad(gamma.astype(jnp.float32), (0, cpad - cout))
    bp = jnp.pad(beta.astype(jnp.float32), (0, cpad - cout))
    mean = stats[0] / count
    var = jnp.maximum(stats[1] / count - mean * mean, 0.0)
    scale = gp * jax.lax.rsqrt(var + BN_EPS)
    shift = bp - mean * scale
    return scale.reshape(1, cpad), shift.reshape(1, cpad)


def _bn_relu_rows(y_rows, scale, shift):
    """y_rows: (M, C) f32 -> bf16 (M, C) normalized + ReLU'd, tiled over M."""
    M, C = y_rows.shape
    tm = _pick_rows_tile(M, _NORM_ROW_CAP)
    nmt = M // tm
    cost = pl.CostEstimate(
        flops=2 * M * C, transcendentals=0,
        bytes_accessed=M * C * 4 + M * C * 2 + 4 * C * 4,
    )
    return pl.pallas_call(
        _bn_relu_kernel,
        grid=(nmt,),
        in_specs=[
            pl.BlockSpec((tm, C), lambda i: (i, 0)),
            pl.BlockSpec((1, C), lambda i: (0, 0)),
            pl.BlockSpec((1, C), lambda i: (0, 0)),
        ],
        out_specs=pl.BlockSpec((tm, C), lambda i: (i, 0)),
        out_shape=jax.ShapeDtypeStruct((M, C), jnp.bfloat16),
        compiler_params=_mosaic_params(1),
        cost_estimate=cost,
    )(y_rows, scale, shift)


# ------------- ConvTranspose (k=4, s=2, p=1) phase decomposition ------------ #
# out[n, 2o+ph, 2q+pw, co] = sum_{dh,dw,ci} xp[n, o+dh+ph, q+dw+pw, ci]
#                                         * w[ci, co, 3-ph-2dh, 3-pw-2dw]
# with xp = NHWC activation zero-padded by 1 on each spatial side.

_PHASES = [(ph, pw) for ph in (0, 1) for pw in (0, 1)]


def _phase_patches(a, transposed=False):
    """a: NHWC (N,H,W,C) bf16 -> (4, N*H*W, 4C) or transposed (4, 4C, N*H*W)."""
    N, H, W, C = a.shape
    ap = jnp.pad(a, ((0, 0), (1, 1), (1, 1), (0, 0)))
    per_phase = []
    for ph, pw in _PHASES:
        cols = [ap[:, ph + dh: ph + dh + H, pw + dw: pw + dw + W, :]
                for dh in (0, 1) for dw in (0, 1)]
        if not transposed:
            pat = jnp.stack(cols, axis=3)                       # (N,H,W,4,C)
            per_phase.append(pat.reshape(N * H * W, 4 * C))     # cols (dh,dw,ci)
        else:
            pat = jnp.stack(cols, axis=0)                       # (4,N,H,W,C)
            pat = jnp.transpose(pat, (0, 4, 1, 2, 3))           # (4,C,N,H,W)
            per_phase.append(pat.reshape(4 * C, N * H * W))     # rows (dh,dw,ci)
    return jnp.stack(per_phase, axis=0)


def _phase_weights(w, cpad=None, transposed=False):
    """w: PyTorch ConvTranspose2d weight (Cin, Cout, 4, 4).
    Returns (4, 4Cin, cpad) or transposed (4, Cout, 4Cin), bf16."""
    Cin, Cout = w.shape[0], w.shape[1]
    mats = []
    for ph, pw in _PHASES:
        sub = jnp.stack([w[:, :, 3 - ph - 2 * dh, 3 - pw - 2 * dw]
                         for dh in (0, 1) for dw in (0, 1)], axis=0)   # (4,Cin,Cout)
        if not transposed:
            m = sub.reshape(4 * Cin, Cout)                       # rows (dh,dw,ci)
            if cpad is not None and cpad != Cout:
                m = jnp.pad(m, ((0, 0), (0, cpad - Cout)))
        else:
            m = jnp.transpose(sub, (2, 0, 1)).reshape(Cout, 4 * Cin)
        mats.append(m)
    return jnp.stack(mats, axis=0).astype(jnp.bfloat16)


# -------------------------------- layers ----------------------------------- #

def conv_t_s1_1x1_bn_relu(x2d, w, gamma, beta):
    """Input layer: ConvT(k4,s1,p0) on a 1x1 input == (N,Cin)@(Cin,16*Cout),
    fused with train-mode BN + ReLU. Returns NHWC (N, 4, 4, Cout) bf16."""
    N, Cin = x2d.shape
    Cout = w.shape[1]
    cpad = _round_up(Cout, LANE)
    wm = jnp.transpose(w, (0, 2, 3, 1))                          # (Cin,4,4,Cout)
    if cpad != Cout:
        wm = jnp.pad(wm, ((0, 0), (0, 0), (0, 0), (0, cpad - Cout)))
    wm = wm.reshape(Cin, 16 * cpad).astype(jnp.bfloat16)
    y, stats = _matmul_with_stats(x2d[None], wm[None])           # y (1,N,16*cpad)
    y_rows = y.reshape(N * 16, cpad)                             # rows (n,oh,ow)
    stats_c = stats.reshape(2, 16, cpad).sum(axis=1)             # per-channel
    scale, shift = _bn_scale_shift(stats_c, N * 16, gamma, beta, cpad)
    act = _bn_relu_rows(y_rows, scale, shift)                    # (N*16,cpad) bf16
    return act.reshape(N, 4, 4, cpad)[..., :Cout]


def conv_t_s2_bn_relu(a, w, gamma, beta):
    """ConvT(k4,s2,p1,bias=False)+BN+ReLU via 4 phase sub-convs.
    a: NHWC (N,H,W,Cin) bf16 -> (N,2H,2W,Cout) bf16."""
    N, H, W, Cin = a.shape
    Cout = w.shape[1]
    cpad = _round_up(Cout, LANE)
    patches = _phase_patches(a, transposed=False)                # (4, NHW, 4Cin)
    wmat = _phase_weights(w, cpad=cpad, transposed=False)        # (4, 4Cin, cpad)
    y, stats = _matmul_with_stats(patches, wmat)                 # (4, NHW, cpad)
    Mp = N * H * W
    scale, shift = _bn_scale_shift(stats, 4 * Mp, gamma, beta, cpad)
    rows = _bn_relu_rows(y.reshape(4 * Mp, cpad), scale, shift)  # (4*Mp, cpad)
    out = rows.reshape(2, 2, N, H, W, cpad)
    out = jnp.transpose(out, (2, 3, 0, 4, 1, 5)).reshape(N, 2 * H, 2 * W, cpad)
    return out[..., :Cout]


def conv_t_s2_bias_tanh(a, w, bias):
    """Output layer: ConvT(k4,s2,p1,bias=True)+Tanh, computed transposed so the
    big M dim is lane-dense. a NHWC bf16 -> NCHW f32 (N, nc, 2H, 2W)."""
    N, H, W, Cin = a.shape
    Cout = w.shape[1]
    Mp = N * H * W
    K4 = 4 * Cin
    patches_t = _phase_patches(a, transposed=True)               # (4, 4Cin, Mp)
    wmat_t = _phase_weights(w, transposed=True)                  # (4, Cout, 4Cin)
    b2 = bias.astype(jnp.float32).reshape(Cout, 1)
    tm = _pick_lane_tile(Mp, _HEAD_LANE_CAP)
    nmt = Mp // tm
    cost = pl.CostEstimate(
        flops=2 * 4 * Mp * K4 * Cout,
        transcendentals=4 * Mp * Cout,
        bytes_accessed=patches_t.size * 2 + wmat_t.size * 2 + 4 * Mp * Cout * 4,
    )
    out_t = pl.pallas_call(
        _matmul_bias_tanh_t_kernel,
        grid=(4, nmt),
        in_specs=[
            pl.BlockSpec((1, Cout, K4), lambda g, i: (g, 0, 0)),
            pl.BlockSpec((1, K4, tm), lambda g, i: (g, 0, i)),
            pl.BlockSpec((Cout, 1), lambda g, i: (0, 0)),
        ],
        out_specs=pl.BlockSpec((1, Cout, tm), lambda g, i: (g, 0, i)),
        out_shape=jax.ShapeDtypeStruct((4, Cout, Mp), jnp.float32),
        compiler_params=_mosaic_params(2),
        cost_estimate=cost,
    )(wmat_t, patches_t, b2)
    out = out_t.reshape(2, 2, Cout, N, H, W)
    out = jnp.transpose(out, (3, 2, 4, 0, 5, 1)).reshape(N, Cout, 2 * H, 2 * W)
    return out


# ------------------------- Parameter construction --------------------------- #

def init_generator_params(key, nz, nc, ngf, num_class):
    ks = jax.random.split(key, 8)

    def conv_w(k, cin, cout):
        # DCGAN-style N(0, 0.02) init; deterministic given the key.
        return 0.02 * jax.random.normal(k, (cin, cout, 4, 4), jnp.float32)

    return {
        "w1": conv_w(ks[0], nz + num_class, ngf * 4),
        "g1": 1.0 + 0.02 * jax.random.normal(ks[1], (ngf * 4,), jnp.float32),
        "b1": jnp.zeros((ngf * 4,), jnp.float32),
        "w2": conv_w(ks[2], ngf * 4, ngf * 2),
        "g2": 1.0 + 0.02 * jax.random.normal(ks[3], (ngf * 2,), jnp.float32),
        "b2": jnp.zeros((ngf * 2,), jnp.float32),
        "w3": conv_w(ks[4], ngf * 2, ngf),
        "g3": 1.0 + 0.02 * jax.random.normal(ks[5], (ngf,), jnp.float32),
        "b3": jnp.zeros((ngf,), jnp.float32),
        "w4": conv_w(ks[6], ngf, nc),
        "bias4": 0.02 * jax.random.normal(ks[7], (nc,), jnp.float32),
    }


@jax.jit
def generator_forward(params, x):
    # x: NCHW (N, nz+num_class, 1, 1) at the module boundary.
    N = x.shape[0]
    x2d = x.reshape(N, x.shape[1]).astype(jnp.bfloat16)
    # input_layer: ConvT(nz+10 -> 4*ngf, k4, s1, p0) + BN + ReLU : 1x1 -> 4x4
    a = conv_t_s1_1x1_bn_relu(x2d, params["w1"], params["g1"], params["b1"])
    # layer2: ConvT(4*ngf -> 2*ngf, k4, s2, p1) + BN + ReLU : 4x4 -> 8x8
    a = conv_t_s2_bn_relu(a, params["w2"], params["g2"], params["b2"])
    # layer3: ConvT(2*ngf -> ngf, k4, s2, p1) + BN + ReLU : 8x8 -> 16x16
    a = conv_t_s2_bn_relu(a, params["w3"], params["g3"], params["b3"])
    # output_layer: ConvT(ngf -> nc, k4, s2, p1, bias=True) + Tanh : 16x16 -> 32x32
    return conv_t_s2_bias_tanh(a, params["w4"], params["bias4"])


if __name__ == "__main__":
    nz, nc, ngf, num_class = 8, 1, 8, 10
    batch = 2
    key = jax.random.PRNGKey(0)
    k_param, k_x = jax.random.split(key)
    params = init_generator_params(k_param, nz, nc, ngf, num_class)
    x = jax.random.normal(k_x, (batch, nz + num_class, 1, 1), jnp.float32)

    out = generator_forward(params, x)
    out = jax.block_until_ready(out)

    assert out.shape == (batch, nc, 32, 32), out.shape
    assert bool(jnp.all(jnp.isfinite(out)))
    assert bool(jnp.all(jnp.abs(out) <= 1.0))  # tanh range
    print("KERNEL_OK")
</pallas_src>

<mosaic_0001>
module attributes {stable_mosaic.version = 11 : i64} {
  func.func @_matmul_stats_kernel(%arg0: i32, %arg1: i32, %arg2: memref<1x2x18xbf16, #tpu.memory_space<vmem>>, %arg3: memref<1x18x2048xbf16, #tpu.memory_space<vmem>>, %arg4: memref<1x2x2048xf32, #tpu.memory_space<vmem>>, %arg5: memref<1x1x2x2048xf32, #tpu.memory_space<vmem>>) attributes {dimension_semantics = [#tpu.dimension_semantics<parallel>, #tpu.dimension_semantics<parallel>], iteration_bounds = array<i64: 1, 1>, scalar_prefetch = 0 : i64, scratch_operands = 0 : i64, tpu.core_type = #tpu.core_type<tc>, window_params = [{transform_indices = @transform_0, window_bounds = array<i64: 1, 2, 18>}, {transform_indices = @transform_1, window_bounds = array<i64: 1, 18, 2048>}, {transform_indices = @transform_2, window_bounds = array<i64: 1, 2, 2048>}, {transform_indices = @transform_3, window_bounds = array<i64: 1, 1, 2, 2048>}]} {
    %c0 = arith.constant 0 : index
    %c0_0 = arith.constant 0 : index
    %c0_1 = arith.constant 0 : index
    %0 = vector.load %arg2[%c0, %c0_0, %c0_1] : memref<1x2x18xbf16, #tpu.memory_space<vmem>>, vector<1x2x18xbf16>
    %1 = vector.shape_cast %0 : vector<1x2x18xbf16> to vector<2x18xbf16>
    %c0_2 = arith.constant 0 : index
    %c0_3 = arith.constant 0 : index
    %c0_4 = arith.constant 0 : index
    %2 = vector.load %arg3[%c0_2, %c0_3, %c0_4] : memref<1x18x2048xbf16, #tpu.memory_space<vmem>>, vector<1x18x2048xbf16>
    %3 = vector.shape_cast %2 : vector<1x18x2048xbf16> to vector<18x2048xbf16>
    %cst = arith.constant dense<0.000000e+00> : vector<2x2048xf32>
    %4 = tpu.matmul %1, %3, %cst {dimension_numbers = #tpu.dot_dimension_numbers<[1], [0], [0], [1], [0, 0, 1, 1], [], []>} : vector<2x18xbf16>, vector<18x2048xbf16>, vector<2x2048xf32> -> vector<2x2048xf32>
    %c0_5 = arith.constant 0 : index
    %c0_6 = arith.constant 0 : index
    %c0_7 = arith.constant 0 : index
    %5 = vector.load %arg4[%c0_5, %c0_6, %c0_7] : memref<1x2x2048xf32, #tpu.memory_space<vmem>>, vector<1x2x2048xf32>
    %6 = vector.shape_cast %5 : vector<1x2x2048xf32> to vector<2x2048xf32>
    %7 = vector.shape_cast %4 : vector<2x2048xf32> to vector<1x2x2048xf32>
    tpu.vector_store %arg4[%c0_5, %c0_6, %c0_7], %7 {strides = array<i32>} : memref<1x2x2048xf32, #tpu.memory_space<vmem>>, vector<1x2x2048xf32>,
    %cst_8 = arith.constant dense<0.000000e+00> : vector<2048xf32>
    %8 = vector.multi_reduction <add>, %4, %cst_8 [0] : vector<2x2048xf32> to vector<2048xf32>
    %9 = vector.shape_cast %8 : vector<2048xf32> to vector<1x2048xf32>
    %10 = arith.mulf %4, %4 : vector<2x2048xf32>
    %cst_9 = arith.constant dense<0.000000e+00> : vector<2048xf32>
    %11 = vector.multi_reduction <add>, %10, %cst_9 [0] : vector<2x2048xf32> to vector<2048xf32>
    %12 = vector.shape_cast %11 : vector<2048xf32> to vector<1x2048xf32>
    %13 = tpu.concatenate %9, %12 in 0 : vector<1x2048xf32>, vector<1x2048xf32> -> vector<2x2048xf32>
    %14 = vector.shape_cast %13 : vector<2x2048xf32> to vector<1x1x2x2048xf32>
    %c0_10 = arith.constant 0 : index
    %c0_11 = arith.constant 0 : index
    %c0_12 = arith.constant 0 : index
    %c0_13 = arith.constant 0 : index
    %15 = vector.load %arg5[%c0_10, %c0_11, %c0_12, %c0_13] : memref<1x1x2x2048xf32, #tpu.memory_space<vmem>>, vector<1x1x2x2048xf32>
    tpu.vector_store %arg5[%c0_10, %c0_11, %c0_12, %c0_13], %14 {strides = array<i32>} : memref<1x1x2x2048xf32, #tpu.memory_space<vmem>>, vector<1x1x2x2048xf32>,
    return
  }
  func.func @transform_0(%arg0: i32, %arg1: i32) -> (i32, i32, i32) {
    %c0_i32 = arith.constant 0 : i32
    %c0_i32_0 = arith.constant 0 : i32
    return %arg0, %arg1, %c0_i32 : i32, i32, i32
  }
  func.func @transform_1(%arg0: i32, %arg1: i32) -> (i32, i32, i32) {
    %c0_i32 = arith.constant 0 : i32
    %c0_i32_0 = arith.constant 0 : i32
    %c0_i32_1 = arith.constant 0 : i32
    return %arg0, %c0_i32, %c0_i32_0 : i32, i32, i32
  }
  func.func @transform_2(%arg0: i32, %arg1: i32) -> (i32, i32, i32) {
    %c0_i32 = arith.constant 0 : i32
    %c0_i32_0 = arith.constant 0 : i32
    return %arg0, %arg1, %c0_i32 : i32, i32, i32
  }
  func.func @transform_3(%arg0: i32, %arg1: i32) -> (i32, i32, i32, i32) {
    %c0_i32 = arith.constant 0 : i32
    %c0_i32_0 = arith.constant 0 : i32
    %c0_i32_1 = arith.constant 0 : i32
    return %arg0, %arg1, %c0_i32, %c0_i32_0 : i32, i32, i32, i32
  }
}

module attributes {stable_mosaic.version = 11 : i64} {
  func.func @_bn_relu_kernel(%arg0: i32, %arg1: memref<32x128xf32, #tpu.memory_space<vmem>>, %arg2: memref<1x128xf32, #tpu.memory_space<vmem>>, %arg3: memref<1x128xf32, #tpu.memory_space<vmem>>, %arg4: memref<32x128xbf16, #tpu.memory_space<vmem>>) attributes {dimension_semantics = [#tpu.dimension_semantics<parallel>], iteration_bounds = array<i64: 1>, scalar_prefetch = 0 : i64, scratch_operands = 0 : i64, tpu.core_type = #tpu.core_type<tc>, window_params = [{transform_indices = @transform_0, window_bounds = array<i64: 32, 128>}, {pipeline_mode = #tpu.pipeline_mode<synchronous>, transform_indices = @transform_1, window_bounds = array<i64: 1, 128>}, {pipeline_mode = #tpu.pipeline_mode<synchronous>, transform_indices = @transform_2, window_bounds = array<i64: 1, 128>}, {transform_indices = @transform_3, window_bounds = array<i64: 32, 128>}]} {
    %c0 = arith.constant 0 : index
    %c0_0 = arith.constant 0 : index
    %0 = vector.load %arg1[%c0, %c0_0] : memref<32x128xf32, #tpu.memory_space<vmem>>, vector<32x128xf32>
    %c0_1 = arith.constant 0 : index
    %c0_2 = arith.constant 0 : index
    %1 = vector.load %arg2[%c0_1, %c0_2] : memref<1x128xf32, #tpu.memory_space<vmem>>, vector<1x128xf32>
    %2 = vector.broadcast %1 : vector<1x128xf32> to vector<32x128xf32>
    %3 = arith.mulf %0, %2 : vector<32x128xf32>
    %c0_3 = arith.constant 0 : index
    %c0_4 = arith.constant 0 : index
    %4 = vector.load %arg3[%c0_3, %c0_4] : memref<1x128xf32, #tpu.memory_space<vmem>>, vector<1x128xf32>
    %5 = vector.broadcast %4 : vector<1x128xf32> to vector<32x128xf32>
    %6 = arith.addf %3, %5 : vector<32x128xf32>
    %cst = arith.constant 0.000000e+00 : f32
    %7 = vector.broadcast %cst : f32 to vector<32x128xf32>
    %8 = arith.maximumf %6, %7 : vector<32x128xf32>
    %9 = arith.truncf %8 : vector<32x128xf32> to vector<32x128xbf16>
    %c0_5 = arith.constant 0 : index
    %c0_6 = arith.constant 0 : index
    %10 = vector.load %arg4[%c0_5, %c0_6] : memref<32x128xbf16, #tpu.memory_space<vmem>>, vector<32x128xbf16>
    tpu.vector_store %arg4[%c0_5, %c0_6], %9 {strides = array<i32>} : memref<32x128xbf16, #tpu.memory_space<vmem>>, vector<32x128xbf16>,
    return
  }
  func.func @transform_0(%arg0: i32) -> (i32, i32) {
    %c0_i32 = arith.constant 0 : i32
    %c0_i32_0 = arith.constant 0 : i32
    return %arg0, %c0_i32 : i32, i32
  }
  func.func @transform_1(%arg0: i32) -> (i32, i32) {
    %c0_i32 = arith.constant 0 : i32
    %c0_i32_0 = arith.constant 0 : i32
    %c0_i32_1 = arith.constant 0 : i32
    return %c0_i32, %c0_i32_0 : i32, i32
  }
  func.func @transform_2(%arg0: i32) -> (i32, i32) {
    %c0_i32 = arith.constant 0 : i32
    %c0_i32_0 = arith.constant 0 : i32
    %c0_i32_1 = arith.constant 0 : i32
    return %c0_i32, %c0_i32_0 : i32, i32
  }
  func.func @transform_3(%arg0: i32) -> (i32, i32) {
    %c0_i32 = arith.constant 0 : i32
    %c0_i32_0 = arith.constant 0 : i32
    return %arg0, %c0_i32 : i32, i32
  }
}

module attributes {stable_mosaic.version = 11 : i64} {
  func.func @_matmul_stats_kernel(%arg0: i32, %arg1: i32, %arg2: memref<1x32x128xbf16, #tpu.memory_space<vmem>>, %arg3: memref<1x128x128xbf16, #tpu.memory_space<vmem>>, %arg4: memref<1x32x128xf32, #tpu.memory_space<vmem>>, %arg5: memref<1x1x2x128xf32, #tpu.memory_space<vmem>>) attributes {dimension_semantics = [#tpu.dimension_semantics<parallel>, #tpu.dimension_semantics<parallel>], iteration_bounds = array<i64: 4, 1>, scalar_prefetch = 0 : i64, scratch_operands = 0 : i64, tpu.core_type = #tpu.core_type<tc>, window_params = [{transform_indices = @transform_0, window_bounds = array<i64: 1, 32, 128>}, {transform_indices = @transform_1, window_bounds = array<i64: 1, 128, 128>}, {transform_indices = @transform_2, window_bounds = array<i64: 1, 32, 128>}, {transform_indices = @transform_3, window_bounds = array<i64: 1, 1, 2, 128>}]} {
    %c0 = arith.constant 0 : index
    %c0_0 = arith.constant 0 : index
    %c0_1 = arith.constant 0 : index
    %0 = vector.load %arg2[%c0, %c0_0, %c0_1] : memref<1x32x128xbf16, #tpu.memory_space<vmem>>, vector<1x32x128xbf16>
    %1 = vector.shape_cast %0 : vector<1x32x128xbf16> to vector<32x128xbf16>
    %c0_2 = arith.constant 0 : index
    %c0_3 = arith.constant 0 : index
    %c0_4 = arith.constant 0 : index
    %2 = vector.load %arg3[%c0_2, %c0_3, %c0_4] : memref<1x128x128xbf16, #tpu.memory_space<vmem>>, vector<1x128x128xbf16>
    %3 = vector.shape_cast %2 : vector<1x128x128xbf16> to vector<128x128xbf16>
    %cst = arith.constant dense<0.000000e+00> : vector<32x128xf32>
    %4 = tpu.matmul %1, %3, %cst {dimension_numbers = #tpu.dot_dimension_numbers<[1], [0], [0], [1], [0, 0, 1, 1], [], []>} : vector<32x128xbf16>, vector<128x128xbf16>, vector<32x128xf32> -> vector<32x128xf32>
    %c0_5 = arith.constant 0 : index
    %c0_6 = arith.constant 0 : index
    %c0_7 = arith.constant 0 : index
    %5 = vector.load %arg4[%c0_5, %c0_6, %c0_7] : memref<1x32x128xf32, #tpu.memory_space<vmem>>, vector<1x32x128xf32>
    %6 = vector.shape_cast %5 : vector<1x32x128xf32> to vector<32x128xf32>
    %7 = vector.shape_cast %4 : vector<32x128xf32> to vector<1x32x128xf32>
    tpu.vector_store %arg4[%c0_5, %c0_6, %c0_7], %7 {strides = array<i32>} : memref<1x32x128xf32, #tpu.memory_space<vmem>>, vector<1x32x128xf32>,
    %cst_8 = arith.constant dense<0.000000e+00> : vector<128xf32>
    %8 = vector.multi_reduction <add>, %4, %cst_8 [0] : vector<32x128xf32> to vector<128xf32>
    %9 = vector.shape_cast %8 : vector<128xf32> to vector<1x128xf32>
    %10 = arith.mulf %4, %4 : vector<32x128xf32>
    %cst_9 = arith.constant dense<0.000000e+00> : vector<128xf32>
    %11 = vector.multi_reduction <add>, %10, %cst_9 [0] : vector<32x128xf32> to vector<128xf32>
    %12 = vector.shape_cast %11 : vector<128xf32> to vector<1x128xf32>
    %13 = tpu.concatenate %9, %12 in 0 : vector<1x128xf32>, vector<1x128xf32> -> vector<2x128xf32>
    %14 = vector.shape_cast %13 : vector<2x128xf32> to vector<1x1x2x128xf32>
    %c0_10 = arith.constant 0 : index
    %c0_11 = arith.constant 0 : index
    %c0_12 = arith.constant 0 : index
    %c0_13 = arith.constant 0 : index
    %15 = vector.load %arg5[%c0_10, %c0_11, %c0_12, %c0_13] : memref<1x1x2x128xf32, #tpu.memory_space<vmem>>, vector<1x1x2x128xf32>
    tpu.vector_store %arg5[%c0_10, %c0_11, %c0_12, %c0_13], %14 {strides = array<i32>} : memref<1x1x2x128xf32, #tpu.memory_space<vmem>>, vector<1x1x2x128xf32>,
    return
  }
  func.func @transform_0(%arg0: i32, %arg1: i32) -> (i32, i32, i32) {
    %c0_i32 = arith.constant 0 : i32
    %c0_i32_0 = arith.constant 0 : i32
    return %arg0, %arg1, %c0_i32 : i32, i32, i32
  }
  func.func @transform_1(%arg0: i32, %arg1: i32) -> (i32, i32, i32) {
    %c0_i32 = arith.constant 0 : i32
    %c0_i32_0 = arith.constant 0 : i32
    %c0_i32_1 = arith.constant 0 : i32
    return %arg0, %c0_i32, %c0_i32_0 : i32, i32, i32
  }
  func.func @transform_2(%arg0: i32, %arg1: i32) -> (i32, i32, i32) {
    %c0_i32 = arith.constant 0 : i32
    %c0_i32_0 = arith.constant 0 : i32
    return %arg0, %arg1, %c0_i32 : i32, i32, i32
  }
  func.func @transform_3(%arg0: i32, %arg1: i32) -> (i32, i32, i32, i32) {
    %c0_i32 = arith.constant 0 : i32
    %c0_i32_0 = arith.constant 0 : i32
    %c0_i32_1 = arith.constant 0 : i32
    return %arg0, %arg1, %c0_i32, %c0_i32_0 : i32, i32, i32, i32
  }
}

module attributes {stable_mosaic.version = 11 : i64} {
  func.func @_bn_relu_kernel(%arg0: i32, %arg1: memref<128x128xf32, #tpu.memory_space<vmem>>, %arg2: memref<1x128xf32, #tpu.memory_space<vmem>>, %arg3: memref<1x128xf32, #tpu.memory_space<vmem>>, %arg4: memref<128x128xbf16, #tpu.memory_space<vmem>>) attributes {dimension_semantics = [#tpu.dimension_semantics<parallel>], iteration_bounds = array<i64: 1>, scalar_prefetch = 0 : i64, scratch_operands = 0 : i64, tpu.core_type = #tpu.core_type<tc>, window_params = [{transform_indices = @transform_0, window_bounds = array<i64: 128, 128>}, {pipeline_mode = #tpu.pipeline_mode<synchronous>, transform_indices = @transform_1, window_bounds = array<i64: 1, 128>}, {pipeline_mode = #tpu.pipeline_mode<synchronous>, transform_indices = @transform_2, window_bounds = array<i64: 1, 128>}, {transform_indices = @transform_3, window_bounds = array<i64: 128, 128>}]} {
    %c0 = arith.constant 0 : index
    %c0_0 = arith.constant 0 : index
    %0 = vector.load %arg1[%c0, %c0_0] : memref<128x128xf32, #tpu.memory_space<vmem>>, vector<128x128xf32>
    %c0_1 = arith.constant 0 : index
    %c0_2 = arith.constant 0 : index
    %1 = vector.load %arg2[%c0_1, %c0_2] : memref<1x128xf32, #tpu.memory_space<vmem>>, vector<1x128xf32>
    %2 = vector.broadcast %1 : vector<1x128xf32> to vector<128x128xf32>
    %3 = arith.mulf %0, %2 : vector<128x128xf32>
    %c0_3 = arith.constant 0 : index
    %c0_4 = arith.constant 0 : index
    %4 = vector.load %arg3[%c0_3, %c0_4] : memref<1x128xf32, #tpu.memory_space<vmem>>, vector<1x128xf32>
    %5 = vector.broadcast %4 : vector<1x128xf32> to vector<128x128xf32>
    %6 = arith.addf %3, %5 : vector<128x128xf32>
    %cst = arith.constant 0.000000e+00 : f32
    %7 = vector.broadcast %cst : f32 to vector<128x128xf32>
    %8 = arith.maximumf %6, %7 : vector<128x128xf32>
    %9 = arith.truncf %8 : vector<128x128xf32> to vector<128x128xbf16>
    %c0_5 = arith.constant 0 : index
    %c0_6 = arith.constant 0 : index
    %10 = vector.load %arg4[%c0_5, %c0_6] : memref<128x128xbf16, #tpu.memory_space<vmem>>, vector<128x128xbf16>
    tpu.vector_store %arg4[%c0_5, %c0_6], %9 {strides = array<i32>} : memref<128x128xbf16, #tpu.memory_space<vmem>>, vector<128x128xbf16>,
    return
  }
  func.func @transform_0(%arg0: i32) -> (i32, i32) {
    %c0_i32 = arith.constant 0 : i32
    %c0_i32_0 = arith.constant 0 : i32
    return %arg0, %c0_i32 : i32, i32
  }
  func.func @transform_1(%arg0: i32) -> (i32, i32) {
    %c0_i32 = arith.constant 0 : i32
    %c0_i32_0 = arith.constant 0 : i32
    %c0_i32_1 = arith.constant 0 : i32
    return %c0_i32, %c0_i32_0 : i32, i32
  }
  func.func @transform_2(%arg0: i32) -> (i32, i32) {
    %c0_i32 = arith.constant 0 : i32
    %c0_i32_0 = arith.constant 0 : i32
    %c0_i32_1 = arith.constant 0 : i32
    return %c0_i32, %c0_i32_0 : i32, i32
  }
  func.func @transform_3(%arg0: i32) -> (i32, i32) {
    %c0_i32 = arith.constant 0 : i32
    %c0_i32_0 = arith.constant 0 : i32
    return %arg0, %c0_i32 : i32, i32
  }
}

module attributes {stable_mosaic.version = 11 : i64} {
  func.func @_bn_relu_kernel(%arg0: i32, %arg1: memref<512x128xf32, #tpu.memory_space<vmem>>, %arg2: memref<1x128xf32, #tpu.memory_space<vmem>>, %arg3: memref<1x128xf32, #tpu.memory_space<vmem>>, %arg4: memref<512x128xbf16, #tpu.memory_space<vmem>>) attributes {dimension_semantics = [#tpu.dimension_semantics<parallel>], iteration_bounds = array<i64: 1>, scalar_prefetch = 0 : i64, scratch_operands = 0 : i64, tpu.core_type = #tpu.core_type<tc>, window_params = [{transform_indices = @transform_0, window_bounds = array<i64: 512, 128>}, {pipeline_mode = #tpu.pipeline_mode<synchronous>, transform_indices = @transform_1, window_bounds = array<i64: 1, 128>}, {pipeline_mode = #tpu.pipeline_mode<synchronous>, transform_indices = @transform_2, window_bounds = array<i64: 1, 128>}, {transform_indices = @transform_3, window_bounds = array<i64: 512, 128>}]} {
    %c0 = arith.constant 0 : index
    %c0_0 = arith.constant 0 : index
    %0 = vector.load %arg1[%c0, %c0_0] : memref<512x128xf32, #tpu.memory_space<vmem>>, vector<512x128xf32>
    %c0_1 = arith.constant 0 : index
    %c0_2 = arith.constant 0 : index
    %1 = vector.load %arg2[%c0_1, %c0_2] : memref<1x128xf32, #tpu.memory_space<vmem>>, vector<1x128xf32>
    %2 = vector.broadcast %1 : vector<1x128xf32> to vector<512x128xf32>
    %3 = arith.mulf %0, %2 : vector<512x128xf32>
    %c0_3 = arith.constant 0 : index
    %c0_4 = arith.constant 0 : index
    %4 = vector.load %arg3[%c0_3, %c0_4] : memref<1x128xf32, #tpu.memory_space<vmem>>, vector<1x128xf32>
    %5 = vector.broadcast %4 : vector<1x128xf32> to vector<512x128xf32>
    %6 = arith.addf %3, %5 : vector<512x128xf32>
    %cst = arith.constant 0.000000e+00 : f32
    %7 = vector.broadcast %cst : f32 to vector<512x128xf32>
    %8 = arith.maximumf %6, %7 : vector<512x128xf32>
    %9 = arith.truncf %8 : vector<512x128xf32> to vector<512x128xbf16>
    %c0_5 = arith.constant 0 : index
    %c0_6 = arith.constant 0 : index
    %10 = vector.load %arg4[%c0_5, %c0_6] : memref<512x128xbf16, #tpu.memory_space<vmem>>, vector<512x128xbf16>
    tpu.vector_store %arg4[%c0_5, %c0_6], %9 {strides = array<i32>} : memref<512x128xbf16, #tpu.memory_space<vmem>>, vector<512x128xbf16>,
    return
  }
  func.func @transform_0(%arg0: i32) -> (i32, i32) {
    %c0_i32 = arith.constant 0 : i32
    %c0_i32_0 = arith.constant 0 : i32
    return %arg0, %c0_i32 : i32, i32
  }
  func.func @transform_1(%arg0: i32) -> (i32, i32) {
    %c0_i32 = arith.constant 0 : i32
    %c0_i32_0 = arith.constant 0 : i32
    %c0_i32_1 = arith.constant 0 : i32
    return %c0_i32, %c0_i32_0 : i32, i32
  }
  func.func @transform_2(%arg0: i32) -> (i32, i32) {
    %c0_i32 = arith.constant 0 : i32
    %c0_i32_0 = arith.constant 0 : i32
    %c0_i32_1 = arith.constant 0 : i32
    return %c0_i32, %c0_i32_0 : i32, i32
  }
  func.func @transform_3(%arg0: i32) -> (i32, i32) {
    %c0_i32 = arith.constant 0 : i32
    %c0_i32_0 = arith.constant 0 : i32
    return %arg0, %c0_i32 : i32, i32
  }
}

module attributes {stable_mosaic.version = 11 : i64} {
  func.func @_matmul_stats_kernel(%arg0: i32, %arg1: i32, %arg2: memref<1x128x64xbf16, #tpu.memory_space<vmem>>, %arg3: memref<1x64x128xbf16, #tpu.memory_space<vmem>>, %arg4: memref<1x128x128xf32, #tpu.memory_space<vmem>>, %arg5: memref<1x1x2x128xf32, #tpu.memory_space<vmem>>) attributes {dimension_semantics = [#tpu.dimension_semantics<parallel>, #tpu.dimension_semantics<parallel>], iteration_bounds = array<i64: 4, 1>, scalar_prefetch = 0 : i64, scratch_operands = 0 : i64, tpu.core_type = #tpu.core_type<tc>, window_params = [{transform_indices = @transform_0, window_bounds = array<i64: 1, 128, 64>}, {transform_indices = @transform_1, window_bounds = array<i64: 1, 64, 128>}, {transform_indices = @transform_2, window_bounds = array<i64: 1, 128, 128>}, {transform_indices = @transform_3, window_bounds = array<i64: 1, 1, 2, 128>}]} {
    %c0 = arith.constant 0 : index
    %c0_0 = arith.constant 0 : index
    %c0_1 = arith.constant 0 : index
    %0 = vector.load %arg2[%c0, %c0_0, %c0_1] : memref<1x128x64xbf16, #tpu.memory_space<vmem>>, vector<1x128x64xbf16>
    %1 = vector.shape_cast %0 : vector<1x128x64xbf16> to vector<128x64xbf16>
    %c0_2 = arith.constant 0 : index
    %c0_3 = arith.constant 0 : index
    %c0_4 = arith.constant 0 : index
    %2 = vector.load %arg3[%c0_2, %c0_3, %c0_4] : memref<1x64x128xbf16, #tpu.memory_space<vmem>>, vector<1x64x128xbf16>
    %3 = vector.shape_cast %2 : vector<1x64x128xbf16> to vector<64x128xbf16>
    %cst = arith.constant dense<0.000000e+00> : vector<128x128xf32>
    %4 = tpu.matmul %1, %3, %cst {dimension_numbers = #tpu.dot_dimension_numbers<[1], [0], [0], [1], [0, 0, 1, 1], [], []>} : vector<128x64xbf16>, vector<64x128xbf16>, vector<128x128xf32> -> vector<128x128xf32>
    %c0_5 = arith.constant 0 : index
    %c0_6 = arith.constant 0 : index
    %c0_7 = arith.constant 0 : index
    %5 = vector.load %arg4[%c0_5, %c0_6, %c0_7] : memref<1x128x128xf32, #tpu.memory_space<vmem>>, vector<1x128x128xf32>
    %6 = vector.shape_cast %5 : vector<1x128x128xf32> to vector<128x128xf32>
    %7 = vector.shape_cast %4 : vector<128x128xf32> to vector<1x128x128xf32>
    tpu.vector_store %arg4[%c0_5, %c0_6, %c0_7], %7 {strides = array<i32>} : memref<1x128x128xf32, #tpu.memory_space<vmem>>, vector<1x128x128xf32>,
    %cst_8 = arith.constant dense<0.000000e+00> : vector<128xf32>
    %8 = vector.multi_reduction <add>, %4, %cst_8 [0] : vector<128x128xf32> to vector<128xf32>
    %9 = vector.shape_cast %8 : vector<128xf32> to vector<1x128xf32>
    %10 = arith.mulf %4, %4 : vector<128x128xf32>
    %cst_9 = arith.constant dense<0.000000e+00> : vector<128xf32>
    %11 = vector.multi_reduction <add>, %10, %cst_9 [0] : vector<128x128xf32> to vector<128xf32>
    %12 = vector.shape_cast %11 : vector<128xf32> to vector<1x128xf32>
    %13 = tpu.concatenate %9, %12 in 0 : vector<1x128xf32>, vector<1x128xf32> -> vector<2x128xf32>
    %14 = vector.shape_cast %13 : vector<2x128xf32> to vector<1x1x2x128xf32>
    %c0_10 = arith.constant 0 : index
    %c0_11 = arith.constant 0 : index
    %c0_12 = arith.constant 0 : index
    %c0_13 = arith.constant 0 : index
    %15 = vector.load %arg5[%c0_10, %c0_11, %c0_12, %c0_13] : memref<1x1x2x128xf32, #tpu.memory_space<vmem>>, vector<1x1x2x128xf32>
    tpu.vector_store %arg5[%c0_10, %c0_11, %c0_12, %c0_13], %14 {strides = array<i32>} : memref<1x1x2x128xf32, #tpu.memory_space<vmem>>, vector<1x1x2x128xf32>,
    return
  }
  func.func @transform_0(%arg0: i32, %arg1: i32) -> (i32, i32, i32) {
    %c0_i32 = arith.constant 0 : i32
    %c0_i32_0 = arith.constant 0 : i32
    return %arg0, %arg1, %c0_i32 : i32, i32, i32
  }
  func.func @transform_1(%arg0: i32, %arg1: i32) -> (i32, i32, i32) {
    %c0_i32 = arith.constant 0 : i32
    %c0_i32_0 = arith.constant 0 : i32
    %c0_i32_1 = arith.constant 0 : i32
    return %arg0, %c0_i32, %c0_i32_0 : i32, i32, i32
  }
  func.func @transform_2(%arg0: i32, %arg1: i32) -> (i32, i32, i32) {
    %c0_i32 = arith.constant 0 : i32
    %c0_i32_0 = arith.constant 0 : i32
    return %arg0, %arg1, %c0_i32 : i32, i32, i32
  }
  func.func @transform_3(%arg0: i32, %arg1: i32) -> (i32, i32, i32, i32) {
    %c0_i32 = arith.constant 0 : i32
    %c0_i32_0 = arith.constant 0 : i32
    %c0_i32_1 = arith.constant 0 : i32
    return %arg0, %arg1, %c0_i32, %c0_i32_0 : i32, i32, i32, i32
  }
}

module attributes {stable_mosaic.version = 11 : i64} {
  func.func @_matmul_bias_tanh_t_kernel(%arg0: i32, %arg1: i32, %arg2: memref<1x1x32xbf16, #tpu.memory_space<vmem>>, %arg3: memref<1x32x512xbf16, #tpu.memory_space<vmem>>, %arg4: memref<1x1xf32, #tpu.memory_space<vmem>>, %arg5: memref<1x1x512xf32, #tpu.memory_space<vmem>>) attributes {dimension_semantics = [#tpu.dimension_semantics<parallel>, #tpu.dimension_semantics<parallel>], iteration_bounds = array<i64: 4, 1>, scalar_prefetch = 0 : i64, scratch_operands = 0 : i64, tpu.core_type = #tpu.core_type<tc>, window_params = [{transform_indices = @transform_0, window_bounds = array<i64: 1, 1, 32>}, {transform_indices = @transform_1, window_bounds = array<i64: 1, 32, 512>}, {pipeline_mode = #tpu.pipeline_mode<synchronous>, transform_indices = @transform_2, window_bounds = array<i64: 1, 1>}, {transform_indices = @transform_3, window_bounds = array<i64: 1, 1, 512>}]} {
    %c0 = arith.constant 0 : index
    %c0_0 = arith.constant 0 : index
    %c0_1 = arith.constant 0 : index
    %0 = vector.load %arg2[%c0, %c0_0, %c0_1] : memref<1x1x32xbf16, #tpu.memory_space<vmem>>, vector<1x1x32xbf16>
    %1 = vector.shape_cast %0 : vector<1x1x32xbf16> to vector<1x32xbf16>
    %c0_2 = arith.constant 0 : index
    %c0_3 = arith.constant 0 : index
    %c0_4 = arith.constant 0 : index
    %2 = vector.load %arg3[%c0_2, %c0_3, %c0_4] : memref<1x32x512xbf16, #tpu.memory_space<vmem>>, vector<1x32x512xbf16>
    %3 = vector.shape_cast %2 : vector<1x32x512xbf16> to vector<32x512xbf16>
    %cst = arith.constant dense<0.000000e+00> : vector<1x512xf32>
    %4 = tpu.matmul %1, %3, %cst {dimension_numbers = #tpu.dot_dimension_numbers<[1], [0], [0], [1], [0, 0, 1, 1], [], []>} : vector<1x32xbf16>, vector<32x512xbf16>, vector<1x512xf32> -> vector<1x512xf32>
    %c0_5 = arith.constant 0 : index
    %c0_6 = arith.constant 0 : index
    %5 = vector.load %arg4[%c0_5, %c0_6] : memref<1x1xf32, #tpu.memory_space<vmem>>, vector<1x1xf32>
    %6 = vector.broadcast %5 : vector<1x1xf32> to vector<1x512xf32>
    %7 = arith.addf %4, %6 : vector<1x512xf32>
    %8 = math.tanh %7 : vector<1x512xf32>
    %c0_7 = arith.constant 0 : index
    %c0_8 = arith.constant 0 : index
    %c0_9 = arith.constant 0 : index
    %9 = vector.load %arg5[%c0_7, %c0_8, %c0_9] : memref<1x1x512xf32, #tpu.memory_space<vmem>>, vector<1x1x512xf32>
    %10 = vector.shape_cast %9 : vector<1x1x512xf32> to vector<1x512xf32>
    %11 = vector.shape_cast %8 : vector<1x512xf32> to vector<1x1x512xf32>
    tpu.vector_store %arg5[%c0_7, %c0_8, %c0_9], %11 {strides = array<i32>} : memref<1x1x512xf32, #tpu.memory_space<vmem>>, vector<1x1x512xf32>,
    return
  }
  func.func @transform_0(%arg0: i32, %arg1: i32) -> (i32, i32, i32) {
    %c0_i32 = arith.constant 0 : i32
    %c0_i32_0 = arith.constant 0 : i32
    %c0_i32_1 = arith.constant 0 : i32
    return %arg0, %c0_i32, %c0_i32_0 : i32, i32, i32
  }
  func.func @transform_1(%arg0: i32, %arg1: i32) -> (i32, i32, i32) {
    %c0_i32 = arith.constant 0 : i32
    %c0_i32_0 = arith.constant 0 : i32
    return %arg0, %c0_i32, %arg1 : i32, i32, i32
  }
  func.func @transform_2(%arg0: i32, %arg1: i32) -> (i32, i32) {
    %c0_i32 = arith.constant 0 : i32
    %c0_i32_0 = arith.constant 0 : i32
    %c0_i32_1 = arith.constant 0 : i32
    return %c0_i32, %c0_i32_0 : i32, i32
  }
  func.func @transform_3(%arg0: i32, %arg1: i32) -> (i32, i32, i32) {
    %c0_i32 = arith.constant 0 : i32
    %c0_i32_0 = arith.constant 0 : i32
    return %arg0, %c0_i32, %arg1 : i32, i32, i32
  }
}

</mosaic_0001>

<llo_original>
// kernel: generator_forward.8
$region0: #{generator_forward.8}
  #allocation0 [shape = 'u32[]', space=smem, size = 0x4, offset = 0x4, fixed_abs, tag = 'smem constant byte address 0x4 - core index']
  #allocation1 [shape = 'u32[144,128]{1,0:T(1,128)}', space=vmem, size = 0x12000, scoped, tag = 'internal scratch']
  %s0 = inlined_call_operand.vmem [shape: f32[32,128], index: 0, kind: input, shape index: {}]
  %s1 = inlined_call_operand.vmem [shape: f32[1,128], index: 1, kind: input, shape index: {}]
  %s2 = inlined_call_operand.vmem [shape: f32[1,128], index: 2, kind: input, shape index: {}]
  %s3 = inlined_call_operand.vmem [shape: bf16[32,128], index: 3, kind: output, shape index: {}]
  %s4 = sld [smem:[#allocation0]]
  $region22: #{generator_forward.8} parent=0
    _
  %s6 = ssub.s32 1, %s4
  %s7 = scalar_select 0, %s6, %s4
  // Predicated region
  $region2: #{generator_forward.8} parent=0 // pred_check
    _
  $region3: #{generator_forward.8} parent=0 // pred_check_branch
    %9 = sbr.rel (0) target = $region5
  $region4: #{generator_forward.8} parent=0 // pred_region
    _
  $region5: #{generator_forward.8} parent=0 // pred_fallthru
    _
  // Predicated region
  $region6: #{generator_forward.8} parent=0 // pred_check
    _
  $region7: #{generator_forward.8} parent=0 // pred_check_branch
    %11 = sbr.rel (0) target = $region9
  $region8: #{generator_forward.8} parent=0 // pred_region
    _
  $region9: #{generator_forward.8} parent=0 // pred_fallthru
    _
  // Predicated region
  $region10: #{generator_forward.8} parent=0 // pred_check
    _
  $region11: #{generator_forward.8} parent=0 // pred_check_branch
    %13 = sbr.rel (0) target = $region13
  $region12: #{generator_forward.8} parent=0 // pred_region
    _
  $region13: #{generator_forward.8} parent=0 // pred_fallthru
    _
  %v14 = vld [vmem:[%s0] sm:$0xff]
  %v15 = vld [vmem:[%s0 + $0x8] sm:$0xff]
  %v16 = vld [vmem:[%s0 + $0x10] sm:$0xff]
  %v17 = vld [vmem:[%s0 + $0x18] sm:$0xff]
  %v18 = vld [vmem:[%s1] sm:$0x1]
  %v20 = vlaneseq
  %v21 = vshrl.u32 %v20, 7
  %v22 = vsub.s32 0, %v21
  %v23 = vrot.slane %v18, %v22
  %v25 = vmul.f32 %v14, %v23
  %v26 = vmul.f32 %v15, %v23
  %v27 = vmul.f32 %v16, %v23
  %v28 = vmul.f32 %v17, %v23
  %v29 = vld [vmem:[%s2] sm:$0x1]
  %v31 = vlaneseq
  %v32 = vshrl.u32 %v31, 7
  %v33 = vsub.s32 0, %v32
  %v34 = vrot.slane %v29, %v33
  %v36 = vadd.f32 %v25, %v34
  %v37 = vadd.f32 %v26, %v34
  %v38 = vadd.f32 %v27, %v34
  %v39 = vadd.f32 %v28, %v34
  %v40 = vmax.f32 %v36, 0.0
  %v41 = vmax.f32 %v37, 0.0
  %v42 = vmax.f32 %v38, 0.0
  %v43 = vmax.f32 %v39, 0.0
  %v44 = vpack.c.bf16 %v41, %v40
  %v45 = vpack.c.bf16 %v43, %v42
  %v48 = vunpack.c.l.b16 %v44
  %v49 = vunpack.c.h.b16 %v44
  %v50 = vunpack.c.l.b16 %v45
  %v51 = vunpack.c.h.b16 %v45
  %v52 = vpack.c.b16 %v48, %v48
  %v53 = vpack.c.b16 %v49, %v49
  %v54 = vpack.c.b16 %v50, %v50
  %v55 = vpack.c.b16 %v51, %v51
  %60 = vst [vmem:[%s3] sm:$0xf] %v52
  %61 = vst [vmem:[%s3 + $0x4] sm:$0xf] %v53
  %62 = vst [vmem:[%s3 + $0x8] sm:$0xf] %v54
  %63 = vst [vmem:[%s3 + $0xc] sm:$0xf] %v55
  // Predicated region
  $region14: #{generator_forward.8} parent=0 // pred_check
    _
  $region15: #{generator_forward.8} parent=0 // pred_check_branch
    %65 = sbr.rel (0) target = $region17
  $region16: #{generator_forward.8} parent=0 // pred_region
    _
  $region17: #{generator_forward.8} parent=0 // pred_fallthru
    _
  // Predicated region
  $region18: #{generator_forward.8} parent=0 // pred_check
    _
  $region19: #{generator_forward.8} parent=0 // pred_check_branch
    %67 = sbr.rel (0) target = $region21
  $region20: #{generator_forward.8} parent=0 // pred_region
    _
  $region21: #{generator_forward.8} parent=0 // pred_fallthru
    _

// kernel: generator_forward.7
$region0: #{generator_forward.7}
  #allocation0 [shape = 'u32[]', space=smem, size = 0x4, offset = 0x4, fixed_abs, tag = 'smem constant byte address 0x4 - core index']
  #allocation1 [shape = 'u32[144,128]{1,0:T(1,128)}', space=vmem, size = 0x12000, scoped, tag = 'internal scratch']
  %s0 = inlined_call_operand.vmem [shape: bf16[1,2,18], index: 0, kind: input, shape index: {}]
  %s1 = inlined_call_operand.vmem [shape: bf16[1,18,2048], index: 1, kind: input, shape index: {}]
  %s2 = inlined_call_operand.vmem [shape: f32[1,2,2048], index: 2, kind: output, shape index: {0}]
  %s3 = inlined_call_operand.vmem [shape: f32[1,1,2,2048], index: 3, kind: output, shape index: {1}]
  %4 = xla_tuple %s2, %s3
  %s5 = sld [smem:[#allocation0]]
  $region26: #{generator_forward.7} parent=0
    _
  %s7 = ssub.s32 1, %s5
  %s8 = scalar_select 0, %s7, %s5
  // Predicated region
  $region2: #{generator_forward.7} parent=0 // pred_check
    _
  $region3: #{generator_forward.7} parent=0 // pred_check_branch
    %10 = sbr.rel (0) target = $region5
  $region4: #{generator_forward.7} parent=0 // pred_region
    _
  $region5: #{generator_forward.7} parent=0 // pred_fallthru
    _
  // Predicated region
  $region6: #{generator_forward.7} parent=0 // pred_check
    _
  $region7: #{generator_forward.7} parent=0 // pred_check_branch
    %12 = sbr.rel (0) target = $region9
  $region8: #{generator_forward.7} parent=0 // pred_region
    _
  $region9: #{generator_forward.7} parent=0 // pred_fallthru
    _
  %v14 = vld [vmem:[%s0] sm:$0x1]
  %v15 = vld [vmem:[%s1] sm:$0xff]
  %v16 = vld [vmem:[%s1 + $0x8] sm:$0xff]
  %v17 = vld [vmem:[%s1 + $0x10] sm:$0xff]
  %v18 = vld [vmem:[%s1 + $0x18] sm:$0xff]
  %v19 = vld [vmem:[%s1 + $0x20] sm:$0xff]
  %v20 = vld [vmem:[%s1 + $0x28] sm:$0xff]
  %v21 = vld [vmem:[%s1 + $0x30] sm:$0xff]
  %v22 = vld [vmem:[%s1 + $0x38] sm:$0xff]
  %v23 = vld [vmem:[%s1 + $0x40] sm:$0xff]
  %v24 = vld [vmem:[%s1 + $0x48] sm:$0xff]
  %v25 = vld [vmem:[%s1 + $0x50] sm:$0xff]
  %v26 = vld [vmem:[%s1 + $0x58] sm:$0xff]
  %v27 = vld [vmem:[%s1 + $0x60] sm:$0xff]
  %v28 = vld [vmem:[%s1 + $0x68] sm:$0xff]
  %v29 = vld [vmem:[%s1 + $0x70] sm:$0xff]
  %v30 = vld [vmem:[%s1 + $0x78] sm:$0xff]
  %v31 = vld [vmem:[%s1 + $0x80] sm:$0x11]
  %v32 = vld [vmem:[%s1 + $0x88] sm:$0x11]
  %v33 = vld [vmem:[%s1 + $0x90] sm:$0x11]
  %v34 = vld [vmem:[%s1 + $0x98] sm:$0x11]
  %v35 = vld [vmem:[%s1 + $0xa0] sm:$0x11]
  %v36 = vld [vmem:[%s1 + $0xa8] sm:$0x11]
  %v37 = vld [vmem:[%s1 + $0xb0] sm:$0x11]
  %v38 = vld [vmem:[%s1 + $0xb8] sm:$0x11]
  %v63 = vunpack.c.l.b16 %v15
  %v64 = vunpack.c.h.b16 %v15
  %v65 = vunpack.c.l.b16 %v16
  %v66 = vunpack.c.h.b16 %v16
  %v67 = vunpack.c.l.b16 %v17
  %v68 = vunpack.c.h.b16 %v17
  %v69 = vunpack.c.l.b16 %v18
  %v70 = vunpack.c.h.b16 %v18
  %v71 = vunpack.c.l.b16 %v19
  %v72 = vunpack.c.h.b16 %v19
  %v73 = vunpack.c.l.b16 %v20
  %v74 = vunpack.c.h.b16 %v20
  %v75 = vunpack.c.l.b16 %v21
  %v76 = vunpack.c.h.b16 %v21
  %v77 = vunpack.c.l.b16 %v22
  %v78 = vunpack.c.h.b16 %v22
  %v79 = vunpack.c.l.b16 %v23
  %v80 = vunpack.c.h.b16 %v23
  %v81 = vunpack.c.l.b16 %v24
  %v82 = vunpack.c.h.b16 %v24
  %v83 = vunpack.c.l.b16 %v25
  %v84 = vunpack.c.h.b16 %v25
  %v85 = vunpack.c.l.b16 %v26
  %v86 = vunpack.c.h.b16 %v26
  %v87 = vunpack.c.l.b16 %v27
  %v88 = vunpack.c.h.b16 %v27
  %v89 = vunpack.c.l.b16 %v28
  %v90 = vunpack.c.h.b16 %v28
  %v91 = vunpack.c.l.b16 %v29
  %v92 = vunpack.c.h.b16 %v29
  %v93 = vunpack.c.l.b16 %v30
  %v94 = vunpack.c.h.b16 %v30
  %v95 = vunpack.c.l.b16 %v31
  %v96 = vunpack.c.h.b16 %v31
  %v97 = vunpack.c.l.b16 %v32
  %v98 = vunpack.c.h.b16 %v32
  %v99 = vunpack.c.l.b16 %v33
  %v100 = vunpack.c.h.b16 %v33
  %v101 = vunpack.c.l.b16 %v34
  %v102 = vunpack.c.h.b16 %v34
  %v103 = vunpack.c.l.b16 %v35
  %v104 = vunpack.c.h.b16 %v35
  %v105 = vunpack.c.l.b16 %v36
  %v106 = vunpack.c.h.b16 %v36
  %v107 = vunpack.c.l.b16 %v37
  %v108 = vunpack.c.h.b16 %v37
  %v109 = vunpack.c.l.b16 %v38
  %v110 = vunpack.c.h.b16 %v38
  %v111 = vpack.c.b16 %v79, %v63
  %v112 = vpack.c.b16 %v80, %v64
  %v113 = vpack.c.b16 %v81, %v65
  %v114 = vpack.c.b16 %v82, %v66
  %v115 = vpack.c.b16 %v83, %v67
  %v116 = vpack.c.b16 %v84, %v68
  %v117 = vpack.c.b16 %v85, %v69
  %v118 = vpack.c.b16 %v86, %v70
  %v119 = vpack.c.b16 %v87, %v71
  %v120 = vpack.c.b16 %v88, %v72
  %v121 = vpack.c.b16 %v89, %v73
  %v122 = vpack.c.b16 %v90, %v74
  %v123 = vpack.c.b16 %v91, %v75
  %v124 = vpack.c.b16 %v92, %v76
  %v125 = vpack.c.b16 %v93, %v77
  %v126 = vpack.c.b16 %v94, %v78
  %v127 = vpack.c.b16 %v95, %v95
  %v128 = vpack.c.b16 %v96, %v96
  %v129 = vpack.c.b16 %v97, %v97
  %v130 = vpack.c.b16 %v98, %v98
  %v131 = vpack.c.b16 %v99, %v99
  %v132 = vpack.c.b16 %v100, %v100
  %v133 = vpack.c.b16 %v101, %v101
  %v134 = vpack.c.b16 %v102, %v102
  %v135 = vpack.c.b16 %v103, %v103
  %v136 = vpack.c.b16 %v104, %v104
  %v137 = vpack.c.b16 %v105, %v105
  %v138 = vpack.c.b16 %v106, %v106
  %v139 = vpack.c.b16 %v107, %v107
  %v140 = vpack.c.b16 %v108, %v108
  %v141 = vpack.c.b16 %v109, %v109
  %v142 = vpack.c.b16 %v110, %v110
  %vm159 = vcmask 146432
  %v161 = vsel %vm159, %v14, 0
  %vm163 = vcmask 1040384
  %v165 = vsel %vm163, %v127, 0
  %v168 = vsel %vm163, %v128, 0
  %v171 = vsel %vm163, %v129, 0
  %v174 = vsel %vm163, %v130, 0
  %v177 = vsel %vm163, %v131, 0
  %v180 = vsel %vm163, %v132, 0
  %v183 = vsel %vm163, %v133, 0
  %v186 = vsel %vm163, %v134, 0
  %v189 = vsel %vm163, %v135, 0
  %v192 = vsel %vm163, %v136, 0
  %v195 = vsel %vm163, %v137, 0
  %v198 = vsel %vm163, %v138, 0
  %v201 = vsel %vm163, %v139, 0
  %v204 = vsel %vm163, %v140, 0
  %v207 = vsel %vm163, %v141, 0
  %v210 = vsel %vm163, %v142, 0
  %212 = vmatprep.subr.bf16.mxu0 0
  %213 = vmatpush1.bf16.msra.mxu0 0
  %214 = vmatprep.subr.bf16.mxu0 0
  %215 = vmatpush1.bf16.msra.mxu0 0
  %216 = vmatprep.subr.bf16.mxu0 0
  %217 = vmatpush1.bf16.msra.mxu0 0
  %218 = vmatprep.subr.bf16.mxu0 0
  %219 = vmatpush1.bf16.msra.mxu0 0
  %220 = vmatprep.subr.bf16.mxu0 0
  %221 = vmatpush1.bf16.msra.mxu0 0
  %222 = vmatprep.subr.bf16.mxu0 0
  %223 = vmatpush1.bf16.msra.mxu0 0
  %224 = vmatprep.subr.bf16.mxu0 %v168
  %225 = vmatpush1.bf16.msra.mxu0 %v165
  %226 = vmatprep.subr.bf16.mxu0 %v112
  %227 = vmatpush1.bf16.msra.mxu0 %v111
  %228 = vmatprep.subr.bf16.mxu0 0
  %229 = vmatpush2.bf16.msra.mxu0 0
  %230 = vmatprep.subr.bf16.mxu0 0
  %231 = vmatpush2.bf16.msra.mxu0 0
  %232 = vmatprep.subr.bf16.mxu0 0
  %233 = vmatpush2.bf16.msra.mxu0 0
  %234 = vmatprep.subr.bf16.mxu0 0
  %235 = vmatpush2.bf16.msra.mxu0 0
  %236 = vmatprep.subr.bf16.mxu0 0
  %237 = vmatpush2.bf16.msra.mxu0 0
  %238 = vmatprep.subr.bf16.mxu0 0
  %239 = vmatpush2.bf16.msra.mxu0 0
  %240 = vmatprep.subr.bf16.mxu0 0
  %241 = vmatpush2.bf16.msra.mxu0 0
  %242 = vmatprep.subr.bf16.mxu0 0
  %243 = vmatpush2.bf16.msra.mxu0 0
  %244 = vmatprep.mubr.bf16.mxu0 0
  %245 = vmatmul.mubr.bf16.gmra.mxu0 %v161
  %v246 = vpop.f32.mrf.mxu0
  %v247 = vadd.f32 0.0, %v246
  %v248 = vpop.f32.mrf.mxu0
  %v249 = vadd.f32 0.0, %v248
  %v250 = vpop.f32.mrf.mxu0
  %v251 = vpop.f32.mrf.mxu0
  %252 = vdwg.mxu0
  %253 = vmatprep.subr.bf16.mxu0 0
  %254 = vmatpush1.bf16.msra.mxu0 0
  %255 = vmatprep.subr.bf16.mxu0 0
  %256 = vmatpush1.bf16.msra.mxu0 0
  %257 = vmatprep.subr.bf16.mxu0 0
  %258 = vmatpush1.bf16.msra.mxu0 0
  %259 = vmatprep.subr.bf16.mxu0 0
  %260 = vmatpush1.bf16.msra.mxu0 0
  %261 = vmatprep.subr.bf16.mxu0 0
  %262 = vmatpush1.bf16.msra.mxu0 0
  %263 = vmatprep.subr.bf16.mxu0 0
  %264 = vmatpush1.bf16.msra.mxu0 0
  %265 = vmatprep.subr.bf16.mxu0 %v174
  %266 = vmatpush1.bf16.msra.mxu0 %v171
  %267 = vmatprep.subr.bf16.mxu0 %v114
  %268 = vmatpush1.bf16.msra.mxu0 %v113
  %269 = vmatprep.subr.bf16.mxu0 0
  %270 = vmatpush2.bf16.msra.mxu0 0
  %271 = vmatprep.subr.bf16.mxu0 0
  %272 = vmatpush2.bf16.msra.mxu0 0
  %273 = vmatprep.subr.bf16.mxu0 0
  %274 = vmatpush2.bf16.msra.mxu0 0
  %275 = vmatprep.subr.bf16.mxu0 0
  %276 = vmatpush2.bf16.msra.mxu0 0
  %277 = vmatprep.subr.bf16.mxu0 0
  %278 = vmatpush2.bf16.msra.mxu0 0
  %279 = vmatprep.subr.bf16.mxu0 0
  %280 = vmatpush2.bf16.msra.mxu0 0
  %281 = vmatprep.subr.bf16.mxu0 0
  %282 = vmatpush2.bf16.msra.mxu0 0
  %283 = vmatprep.subr.bf16.mxu0 0
  %284 = vmatpush2.bf16.msra.mxu0 0
  %285 = vmatprep.mubr.bf16.mxu0 0
  %286 = vmatmul.mubr.bf16.gmra.mxu0 %v161
  %v287 = vpop.f32.mrf.mxu0
  %v288 = vadd.f32 0.0, %v287
  %v289 = vpop.f32.mrf.mxu0
  %v290 = vadd.f32 0.0, %v289
  %v291 = vpop.f32.mrf.mxu0
  %v292 = vpop.f32.mrf.mxu0
  %293 = vdwg.mxu0
  %294 = vmatprep.subr.bf16.mxu0 0
  %295 = vmatpush1.bf16.msra.mxu0 0
  %296 = vmatprep.subr.bf16.mxu0 0
  %297 = vmatpush1.bf16.msra.mxu0 0
  %298 = vmatprep.subr.bf16.mxu0 0
  %299 = vmatpush1.bf16.msra.mxu0 0
  %300 = vmatprep.subr.bf16.mxu0 0
  %301 = vmatpush1.bf16.msra.mxu0 0
  %302 = vmatprep.subr.bf16.mxu0 0
  %303 = vmatpush1.bf16.msra.mxu0 0
  %304 = vmatprep.subr.bf16.mxu0 0
  %305 = vmatpush1.bf16.msra.mxu0 0
  %306 = vmatprep.subr.bf16.mxu0 %v180
  %307 = vmatpush1.bf16.msra.mxu0 %v177
  %308 = vmatprep.subr.bf16.mxu0 %v116
  %309 = vmatpush1.bf16.msra.mxu0 %v115
  %310 = vmatprep.subr.bf16.mxu0 0
  %311 = vmatpush2.bf16.msra.mxu0 0
  %312 = vmatprep.subr.bf16.mxu0 0
  %313 = vmatpush2.bf16.msra.mxu0 0
  %314 = vmatprep.subr.bf16.mxu0 0
  %315 = vmatpush2.bf16.msra.mxu0 0
  %316 = vmatprep.subr.bf16.mxu0 0
  %317 = vmatpush2.bf16.msra.mxu0 0
  %318 = vmatprep.subr.bf16.mxu0 0
  %319 = vmatpush2.bf16.msra.mxu0 0
  %320 = vmatprep.subr.bf16.mxu0 0
  %321 = vmatpush2.bf16.msra.mxu0 0
  %322 = vmatprep.subr.bf16.mxu0 0
  %323 = vmatpush2.bf16.msra.mxu0 0
  %324 = vmatprep.subr.bf16.mxu0 0
  %325 = vmatpush2.bf16.msra.mxu0 0
  %326 = vmatprep.mubr.bf16.mxu0 0
  %327 = vmatmul.mubr.bf16.gmra.mxu0 %v161
  %v328 = vpop.f32.mrf.mxu0
  %v329 = vadd.f32 0.0, %v328
  %v330 = vpop.f32.mrf.mxu0
  %v331 = vadd.f32 0.0, %v330
  %v332 = vpop.f32.mrf.mxu0
  %v333 = vpop.f32.mrf.mxu0
  %334 = vdwg.mxu0
  %335 = vmatprep.subr.bf16.mxu0 0
  %336 = vmatpush1.bf16.msra.mxu0 0
  %337 = vmatprep.subr.bf16.mxu0 0
  %338 = vmatpush1.bf16.msra.mxu0 0
  %339 = vmatprep.subr.bf16.mxu0 0
  %340 = vmatpush1.bf16.msra.mxu0 0
  %341 = vmatprep.subr.bf16.mxu0 0
  %342 = vmatpush1.bf16.msra.mxu0 0
  %343 = vmatprep.subr.bf16.mxu0 0
  %344 = vmatpush1.bf16.msra.mxu0 0
  %345 = vmatprep.subr.bf16.mxu0 0
  %346 = vmatpush1.bf16.msra.mxu0 0
  %347 = vmatprep.subr.bf16.mxu0 %v186
  %348 = vmatpush1.bf16.msra.mxu0 %v183
  %349 = vmatprep.subr.bf16.mxu0 %v118
  %350 = vmatpush1.bf16.msra.mxu0 %v117
  %351 = vmatprep.subr.bf16.mxu0 0
  %352 = vmatpush2.bf16.msra.mxu0 0
  %353 = vmatprep.subr.bf16.mxu0 0
  %354 = vmatpush2.bf16.msra.mxu0 0
  %355 = vmatprep.subr.bf16.mxu0 0
  %356 = vmatpush2.bf16.msra.mxu0 0
  %357 = vmatprep.subr.bf16.mxu0 0
  %358 = vmatpush2.bf16.msra.mxu0 0
  %359 = vmatprep.subr.bf16.mxu0 0
  %360 = vmatpush2.bf16.msra.mxu0 0
  %361 = vmatprep.subr.bf16.mxu0 0
  %362 = vmatpush2.bf16.msra.mxu0 0
  %363 = vmatprep.subr.bf16.mxu0 0
  %364 = vmatpush2.bf16.msra.mxu0 0
  %365 = vmatprep.subr.bf16.mxu0 0
  %366 = vmatpush2.bf16.msra.mxu0 0
  %367 = vmatprep.mubr.bf16.mxu0 0
  %368 = vmatmul.mubr.bf16.gmra.mxu0 %v161
  %v369 = vpop.f32.mrf.mxu0
  %v370 = vadd.f32 0.0, %v369
  %v371 = vpop.f32.mrf.mxu0
  %v372 = vadd.f32 0.0, %v371
  %v373 = vpop.f32.mrf.mxu0
  %v374 = vpop.f32.mrf.mxu0
  %375 = vdwg.mxu0
  %376 = vmatprep.subr.bf16.mxu0 0
  %377 = vmatpush1.bf16.msra.mxu0 0
  %378 = vmatprep.subr.bf16.mxu0 0
  %379 = vmatpush1.bf16.msra.mxu0 0
  %380 = vmatprep.subr.bf16.mxu0 0
  %381 = vmatpush1.bf16.msra.mxu0 0
  %382 = vmatprep.subr.bf16.mxu0 0
  %383 = vmatpush1.bf16.msra.mxu0 0
  %384 = vmatprep.subr.bf16.mxu0 0
  %385 = vmatpush1.bf16.msra.mxu0 0
  %386 = vmatprep.subr.bf16.mxu0 0
  %387 = vmatpush1.bf16.msra.mxu0 0
  %388 = vmatprep.subr.bf16.mxu0 %v192
  %389 = vmatpush1.bf16.msra.mxu0 %v189
  %390 = vmatprep.subr.bf16.mxu0 %v120
  %391 = vmatpush1.bf16.msra.mxu0 %v119
  %392 = vmatprep.subr.bf16.mxu0 0
  %393 = vmatpush2.bf16.msra.mxu0 0
  %394 = vmatprep.subr.bf16.mxu0 0
  %395 = vmatpush2.bf16.msra.mxu0 0
  %396 = vmatprep.subr.bf16.mxu0 0
  %397 = vmatpush2.bf16.msra.mxu0 0
  %398 = vmatprep.subr.bf16.mxu0 0
  %399 = vmatpush2.bf16.msra.mxu0 0
  %400 = vmatprep.subr.bf16.mxu0 0
  %401 = vmatpush2.bf16.msra.mxu0 0
  %402 = vmatprep.subr.bf16.mxu0 0
  %403 = vmatpush2.bf16.msra.mxu0 0
  %404 = vmatprep.subr.bf16.mxu0 0
  %405 = vmatpush2.bf16.msra.mxu0 0
  %406 = vmatprep.subr.bf16.mxu0 0
  %407 = vmatpush2.bf16.msra.mxu0 0
  %408 = vmatprep.mubr.bf16.mxu0 0
  %409 = vmatmul.mubr.bf16.gmra.mxu0 %v161
  %v410 = vpop.f32.mrf.mxu0
  %v411 = vadd.f32 0.0, %v410
  %v412 = vpop.f32.mrf.mxu0
  %v413 = vadd.f32 0.0, %v412
  %v414 = vpop.f32.mrf.mxu0
  %v415 = vpop.f32.mrf.mxu0
  %416 = vdwg.mxu0
  %417 = vmatprep.subr.bf16.mxu0 0
  %418 = vmatpush1.bf16.msra.mxu0 0
  %419 = vmatprep.subr.bf16.mxu0 0
  %420 = vmatpush1.bf16.msra.mxu0 0
  %421 = vmatprep.subr.bf16.mxu0 0
  %422 = vmatpush1.bf16.msra.mxu0 0
  %423 = vmatprep.subr.bf16.mxu0 0
  %424 = vmatpush1.bf16.msra.mxu0 0
  %425 = vmatprep.subr.bf16.mxu0 0
  %426 = vmatpush1.bf16.msra.mxu0 0
  %427 = vmatprep.subr.bf16.mxu0 0
  %428 = vmatpush1.bf16.msra.mxu0 0
  %429 = vmatprep.subr.bf16.mxu0 %v198
  %430 = vmatpush1.bf16.msra.mxu0 %v195
  %431 = vmatprep.subr.bf16.mxu0 %v122
  %432 = vmatpush1.bf16.msra.mxu0 %v121
  %433 = vmatprep.subr.bf16.mxu0 0
  %434 = vmatpush2.bf16.msra.mxu0 0
  %435 = vmatprep.subr.bf16.mxu0 0
  %436 = vmatpush2.bf16.msra.mxu0 0
  %437 = vmatprep.subr.bf16.mxu0 0
  %438 = vmatpush2.bf16.msra.mxu0 0
  %439 = vmatprep.subr.bf16.mxu0 0
  %440 = vmatpush2.bf16.msra.mxu0 0
  %441 = vmatprep.subr.bf16.mxu0 0
  %442 = vmatpush2.bf16.msra.mxu0 0
  %443 = vmatprep.subr.bf16.mxu0 0
  %444 = vmatpush2.bf16.msra.mxu0 0
  %445 = vmatprep.subr.bf16.mxu0 0
  %446 = vmatpush2.bf16.msra.mxu0 0
  %447 = vmatprep.subr.bf16.mxu0 0
  %448 = vmatpush2.bf16.msra.mxu0 0
  %449 = vmatprep.mubr.bf16.mxu0 0
  %450 = vmatmul.mubr.bf16.gmra.mxu0 %v161
  %v451 = vpop.f32.mrf.mxu0
  %v452 = vadd.f32 0.0, %v451
  %v453 = vpop.f32.mrf.mxu0
  %v454 = vadd.f32 0.0, %v453
  %v455 = vpop.f32.mrf.mxu0
  %v456 = vpop.f32.mrf.mxu0
  %457 = vdwg.mxu0
  %458 = vmatprep.subr.bf16.mxu0 0
  %459 = vmatpush1.bf16.msra.mxu0 0
  %460 = vmatprep.subr.bf16.mxu0 0
  %461 = vmatpush1.bf16.msra.mxu0 0
  %462 = vmatprep.subr.bf16.mxu0 0
  %463 = vmatpush1.bf16.msra.mxu0 0
  %464 = vmatprep.subr.bf16.mxu0 0
  %465 = vmatpush1.bf16.msra.mxu0 0
  %466 = vmatprep.subr.bf16.mxu0 0
  %467 = vmatpush1.bf16.msra.mxu0 0
  %468 = vmatprep.subr.bf16.mxu0 0
  %469 = vmatpush1.bf16.msra.mxu0 0
  %470 = vmatprep.subr.bf16.mxu0 %v204
  %471 = vmatpush1.bf16.msra.mxu0 %v201
  %472 = vmatprep.subr.bf16.mxu0 %v124
  %473 = vmatpush1.bf16.msra.mxu0 %v123
  %474 = vmatprep.subr.bf16.mxu0 0
  %475 = vmatpush2.bf16.msra.mxu0 0
  %476 = vmatprep.subr.bf16.mxu0 0
  %477 = vmatpush2.bf16.msra.mxu0 0
  %478 = vmatprep.subr.bf16.mxu0 0
  %479 = vmatpush2.bf16.msra.mxu0 0
  %480 = vmatprep.subr.bf16.mxu0 0
  %481 = vmatpush2.bf16.msra.mxu0 0
  %482 = vmatprep.subr.bf16.mxu0 0
  %483 = vmatpush2.bf16.msra.mxu0 0
  %484 = vmatprep.subr.bf16.mxu0 0
  %485 = vmatpush2.bf16.msra.mxu0 0
  %486 = vmatprep.subr.bf16.mxu0 0
  %487 = vmatpush2.bf16.msra.mxu0 0
  %488 = vmatprep.subr.bf16.mxu0 0
  %489 = vmatpush2.bf16.msra.mxu0 0
  %490 = vmatprep.mubr.bf16.mxu0 0
  %491 = vmatmul.mubr.bf16.gmra.mxu0 %v161
  %v492 = vpop.f32.mrf.mxu0
  %v493 = vadd.f32 0.0, %v492
  %v494 = vpop.f32.mrf.mxu0
  %v495 = vadd.f32 0.0, %v494
  %v496 = vpop.f32.mrf.mxu0
  %v497 = vpop.f32.mrf.mxu0
  %498 = vdwg.mxu0
  %499 = vmatprep.subr.bf16.mxu0 0
  %500 = vmatpush1.bf16.msra.mxu0 0
  %501 = vmatprep.subr.bf16.mxu0 0
  %502 = vmatpush1.bf16.msra.mxu0 0
  %503 = vmatprep.subr.bf16.mxu0 0
  %504 = vmatpush1.bf16.msra.mxu0 0
  %505 = vmatprep.subr.bf16.mxu0 0
  %506 = vmatpush1.bf16.msra.mxu0 0
  %507 = vmatprep.subr.bf16.mxu0 0
  %508 = vmatpush1.bf16.msra.mxu0 0
  %509 = vmatprep.subr.bf16.mxu0 0
  %510 = vmatpush1.bf16.msra.mxu0 0
  %511 = vmatprep.subr.bf16.mxu0 %v210
  %512 = vmatpush1.bf16.msra.mxu0 %v207
  %513 = vmatprep.subr.bf16.mxu0 %v126
  %514 = vmatpush1.bf16.msra.mxu0 %v125
  %515 = vmatprep.subr.bf16.mxu0 0
  %516 = vmatpush2.bf16.msra.mxu0 0
  %517 = vmatprep.subr.bf16.mxu0 0
  %518 = vmatpush2.bf16.msra.mxu0 0
  %519 = vmatprep.subr.bf16.mxu0 0
  %520 = vmatpush2.bf16.msra.mxu0 0
  %521 = vmatprep.subr.bf16.mxu0 0
  %522 = vmatpush2.bf16.msra.mxu0 0
  %523 = vmatprep.subr.bf16.mxu0 0
  %524 = vmatpush2.bf16.msra.mxu0 0
  %525 = vmatprep.subr.bf16.mxu0 0
  %526 = vmatpush2.bf16.msra.mxu0 0
  %527 = vmatprep.subr.bf16.mxu0 0
  %528 = vmatpush2.bf16.msra.mxu0 0
  %529 = vmatprep.subr.bf16.mxu0 0
  %530 = vmatpush2.bf16.msra.mxu0 0
  %531 = vmatprep.mubr.bf16.mxu0 0
  %532 = vmatmul.mubr.bf16.gmra.mxu0 %v161
  %v533 = vpop.f32.mrf.mxu0
  %v534 = vadd.f32 0.0, %v533
  %v535 = vpop.f32.mrf.mxu0
  %v536 = vadd.f32 0.0, %v535
  %v537 = vpop.f32.mrf.mxu0
  %v538 = vpop.f32.mrf.mxu0
  %539 = vdwg.mxu0
  %v556 = vcombine.low %v247, %v249
  %v557 = vcombine.low %v288, %v290
  %v559 = vunpack.c.l.s4 1983009808
  %v560 = vunpack.c.0.s8 %v559
  %v561 = vlaneseq
  %v562 = vshrl.u32 %v561, 7
  %v563 = vsub.s32 %v560, %v562
  %v564 = vrot.slane %v556, %v563
  %v566 = vunpack.c.l.s4 1983009808
  %v567 = vunpack.c.0.s8 %v566
  %v568 = vlaneseq
  %v569 = vshrl.u32 %v568, 7
  %v570 = vsub.s32 %v567, %v569
  %v571 = vrot.slane %v557, %v570
  %v572 = vcombine.low %v564, %v571
  %v573 = vcombine.low %v329, %v331
  %v574 = vcombine.low %v370, %v372
  %v576 = vunpack.c.l.s4 1983009808
  %v577 = vunpack.c.0.s8 %v576
  %v578 = vlaneseq
  %v579 = vshrl.u32 %v578, 7
  %v580 = vsub.s32 %v577, %v579
  %v581 = vrot.slane %v573, %v580
  %v583 = vunpack.c.l.s4 1983009808
  %v584 = vunpack.c.0.s8 %v583
  %v585 = vlaneseq
  %v586 = vshrl.u32 %v585, 7
  %v587 = vsub.s32 %v584, %v586
  %v588 = vrot.slane %v574, %v587
  %v589 = vcombine.low %v581, %v588
  %v590 = vcombine.low %v411, %v413
  %v591 = vcombine.low %v452, %v454
  %v593 = vunpack.c.l.s4 1983009808
  %v594 = vunpack.c.0.s8 %v593
  %v595 = vlaneseq
  %v596 = vshrl.u32 %v595, 7
  %v597 = vsub.s32 %v594, %v596
  %v598 = vrot.slane %v590, %v597
  %v600 = vunpack.c.l.s4 1983009808
  %v601 = vunpack.c.0.s8 %v600
  %v602 = vlaneseq
  %v603 = vshrl.u32 %v602, 7
  %v604 = vsub.s32 %v601, %v603
  %v605 = vrot.slane %v591, %v604
  %v606 = vcombine.low %v598, %v605
  %v607 = vcombine.low %v493, %v495
  %v608 = vcombine.low %v534, %v536
  %v610 = vunpack.c.l.s4 1983009808
  %v611 = vunpack.c.0.s8 %v610
  %v612 = vlaneseq
  %v613 = vshrl.u32 %v612, 7
  %v614 = vsub.s32 %v611, %v613
  %v615 = vrot.slane %v607, %v614
  %v617 = vunpack.c.l.s4 1983009808
  %v618 = vunpack.c.0.s8 %v617
  %v619 = vlaneseq
  %v620 = vshrl.u32 %v619, 7
  %v621 = vsub.s32 %v618, %v620
  %v622 = vrot.slane %v608, %v621
  %v623 = vcombine.low %v615, %v622
  %628 = vst [vmem:[%s2] sm:$0xff] %v572
  %629 = vst [vmem:[%s2 + $0x8] sm:$0xff] %v589
  %630 = vst [vmem:[%s2 + $0x10] sm:$0xff] %v606
  %631 = vst [vmem:[%s2 + $0x18] sm:$0xff] %v623
  %vm632 = vcmask 1041408
  %v633 = vsel %vm632, %v247, 0.0
  %v634 = vrot.slane %v633, 4
  %v635 = vadd.f32 %v633, %v634
  %v636 = vrot.slane %v635, 2
  %v637 = vadd.f32 %v635, %v636
  %v638 = vrot.slane %v637, 1
  %v639 = vadd.f32 %v637, %v638
  %v640 = vsel %vm632, %v249, 0.0
  %v641 = vrot.slane %v640, 4
  %v642 = vadd.f32 %v640, %v641
  %v643 = vrot.slane %v642, 2
  %v644 = vadd.f32 %v642, %v643
  %v645 = vrot.slane %v644, 1
  %v646 = vadd.f32 %v644, %v645
  %v647 = vsel %vm632, %v288, 0.0
  %v648 = vrot.slane %v647, 4
  %v649 = vadd.f32 %v647, %v648
  %v650 = vrot.slane %v649, 2
  %v651 = vadd.f32 %v649, %v650
  %v652 = vrot.slane %v651, 1
  %v653 = vadd.f32 %v651, %v652
  %v654 = vsel %vm632, %v290, 0.0
  %v655 = vrot.slane %v654, 4
  %v656 = vadd.f32 %v654, %v655
  %v657 = vrot.slane %v656, 2
  %v658 = vadd.f32 %v656, %v657
  %v659 = vrot.slane %v658, 1
  %v660 = vadd.f32 %v658, %v659
  %v661 = vsel %vm632, %v329, 0.0
  %v662 = vrot.slane %v661, 4
  %v663 = vadd.f32 %v661, %v662
  %v664 = vrot.slane %v663, 2
  %v665 = vadd.f32 %v663, %v664
  %v666 = vrot.slane %v665, 1
  %v667 = vadd.f32 %v665, %v666
  %v668 = vsel %vm632, %v331, 0.0
  %v669 = vrot.slane %v668, 4
  %v670 = vadd.f32 %v668, %v669
  %v671 = vrot.slane %v670, 2
  %v672 = vadd.f32 %v670, %v671
  %v673 = vrot.slane %v672, 1
  %v674 = vadd.f32 %v672, %v673
  %v675 = vsel %vm632, %v370, 0.0
  %v676 = vrot.slane %v675, 4
  %v677 = vadd.f32 %v675, %v676
  %v678 = vrot.slane %v677, 2
  %v679 = vadd.f32 %v677, %v678
  %v680 = vrot.slane %v679, 1
  %v681 = vadd.f32 %v679, %v680
  %v682 = vsel %vm632, %v372, 0.0
  %v683 = vrot.slane %v682, 4
  %v684 = vadd.f32 %v682, %v683
  %v685 = vrot.slane %v684, 2
  %v686 = vadd.f32 %v684, %v685
  %v687 = vrot.slane %v686, 1
  %v688 = vadd.f32 %v686, %v687
  %v689 = vsel %vm632, %v411, 0.0
  %v690 = vrot.slane %v689, 4
  %v691 = vadd.f32 %v689, %v690
  %v692 = vrot.slane %v691, 2
  %v693 = vadd.f32 %v691, %v692
  %v694 = vrot.slane %v693, 1
  %v695 = vadd.f32 %v693, %v694
  %v696 = vsel %vm632, %v413, 0.0
  %v697 = vrot.slane %v696, 4
  %v698 = vadd.f32 %v696, %v697
  %v699 = vrot.slane %v698, 2
  %v700 = vadd.f32 %v698, %v699
  %v701 = vrot.slane %v700, 1
  %v702 = vadd.f32 %v700, %v701
  %v703 = vsel %vm632, %v452, 0.0
  %v704 = vrot.slane %v703, 4
  %v705 = vadd.f32 %v703, %v704
  %v706 = vrot.slane %v705, 2
  %v707 = vadd.f32 %v705, %v706
  %v708 = vrot.slane %v707, 1
  %v709 = vadd.f32 %v707, %v708
  %v710 = vsel %vm632, %v454, 0.0
  %v711 = vrot.slane %v710, 4
  %v712 = vadd.f32 %v710, %v711
  %v713 = vrot.slane %v712, 2
  %v714 = vadd.f32 %v712, %v713
  %v715 = vrot.slane %v714, 1
  %v716 = vadd.f32 %v714, %v715
  %v717 = vsel %vm632, %v493, 0.0
  %v718 = vrot.slane %v717, 4
  %v719 = vadd.f32 %v717, %v718
  %v720 = vrot.slane %v719, 2
  %v721 = vadd.f32 %v719, %v720
  %v722 = vrot.slane %v721, 1
  %v723 = vadd.f32 %v721, %v722
  %v724 = vsel %vm632, %v495, 0.0
  %v725 = vrot.slane %v724, 4
  %v726 = vadd.f32 %v724, %v725
  %v727 = vrot.slane %v726, 2
  %v728 = vadd.f32 %v726, %v727
  %v729 = vrot.slane %v728, 1
  %v730 = vadd.f32 %v728, %v729
  %v731 = vsel %vm632, %v534, 0.0
  %v732 = vrot.slane %v731, 4
  %v733 = vadd.f32 %v731, %v732
  %v734 = vrot.slane %v733, 2
  %v735 = vadd.f32 %v733, %v734
  %v736 = vrot.slane %v735, 1
  %v737 = vadd.f32 %v735, %v736
  %v738 = vsel %vm632, %v536, 0.0
  %v739 = vrot.slane %v738, 4
  %v740 = vadd.f32 %v738, %v739
  %v741 = vrot.slane %v740, 2
  %v742 = vadd.f32 %v740, %v741
  %v743 = vrot.slane %v742, 1
  %v744 = vadd.f32 %v742, %v743
  %v745 = vmul.f32 %v247, %v247
  %v746 = vmul.f32 %v249, %v249
  %v747 = vmul.f32 %v288, %v288
  %v748 = vmul.f32 %v290, %v290
  %v749 = vmul.f32 %v329, %v329
  %v750 = vmul.f32 %v331, %v331
  %v751 = vmul.f32 %v370, %v370
  %v752 = vmul.f32 %v372, %v372
  %v753 = vmul.f32 %v411, %v411
  %v754 = vmul.f32 %v413, %v413
  %v755 = vmul.f32 %v452, %v452
  %v756 = vmul.f32 %v454, %v454
  %v757 = vmul.f32 %v493, %v493
  %v758 = vmul.f32 %v495, %v495
  %v759 = vmul.f32 %v534, %v534
  %v760 = vmul.f32 %v536, %v536
  %v761 = vsel %vm632, %v745, 0.0
  %v762 = vrot.slane %v761, 4
  %v763 = vadd.f32 %v761, %v762
  %v764 = vrot.slane %v763, 2
  %v765 = vadd.f32 %v763, %v764
  %v766 = vrot.slane %v765, 1
  %v767 = vadd.f32 %v765, %v766
  %v768 = vsel %vm632, %v746, 0.0
  %v769 = vrot.slane %v768, 4
  %v770 = vadd.f32 %v768, %v769
  %v771 = vrot.slane %v770, 2
  %v772 = vadd.f32 %v770, %v771
  %v773 = vrot.slane %v772, 1
  %v774 = vadd.f32 %v772, %v773
  %v775 = vsel %vm632, %v747, 0.0
  %v776 = vrot.slane %v775, 4
  %v777 = vadd.f32 %v775, %v776
  %v778 = vrot.slane %v777, 2
  %v779 = vadd.f32 %v777, %v778
  %v780 = vrot.slane %v779, 1
  %v781 = vadd.f32 %v779, %v780
  %v782 = vsel %vm632, %v748, 0.0
  %v783 = vrot.slane %v782, 4
  %v784 = vadd.f32 %v782, %v783
  %v785 = vrot.slane %v784, 2
  %v786 = vadd.f32 %v784, %v785
  %v787 = vrot.slane %v786, 1
  %v788 = vadd.f32 %v786, %v787
  %v789 = vsel %vm632, %v749, 0.0
  %v790 = vrot.slane %v789, 4
  %v791 = vadd.f32 %v789, %v790
  %v792 = vrot.slane %v791, 2
  %v793 = vadd.f32 %v791, %v792
  %v794 = vrot.slane %v793, 1
  %v795 = vadd.f32 %v793, %v794
  %v796 = vsel %vm632, %v750, 0.0
  %v797 = vrot.slane %v796, 4
  %v798 = vadd.f32 %v796, %v797
  %v799 = vrot.slane %v798, 2
  %v800 = vadd.f32 %v798, %v799
  %v801 = vrot.slane %v800, 1
  %v802 = vadd.f32 %v800, %v801
  %v803 = vsel %vm632, %v751, 0.0
  %v804 = vrot.slane %v803, 4
  %v805 = vadd.f32 %v803, %v804
  %v806 = vrot.slane %v805, 2
  %v807 = vadd.f32 %v805, %v806
  %v808 = vrot.slane %v807, 1
  %v809 = vadd.f32 %v807, %v808
  %v810 = vsel %vm632, %v752, 0.0
  %v811 = vrot.slane %v810, 4
  %v812 = vadd.f32 %v810, %v811
  %v813 = vrot.slane %v812, 2
  %v814 = vadd.f32 %v812, %v813
  %v815 = vrot.slane %v814, 1
  %v816 = vadd.f32 %v814, %v815
  %v817 = vsel %vm632, %v753, 0.0
  %v818 = vrot.slane %v817, 4
  %v819 = vadd.f32 %v817, %v818
  %v820 = vrot.slane %v819, 2
  %v821 = vadd.f32 %v819, %v820
  %v822 = vrot.slane %v821, 1
  %v823 = vadd.f32 %v821, %v822
  %v824 = vsel %vm632, %v754, 0.0
  %v825 = vrot.slane %v824, 4
  %v826 = vadd.f32 %v824, %v825
  %v827 = vrot.slane %v826, 2
  %v828 = vadd.f32 %v826, %v827
  %v829 = vrot.slane %v828, 1
  %v830 = vadd.f32 %v828, %v829
  %v831 = vsel %vm632, %v755, 0.0
  %v832 = vrot.slane %v831, 4
  %v833 = vadd.f32 %v831, %v832
  %v834 = vrot.slane %v833, 2
  %v835 = vadd.f32 %v833, %v834
  %v836 = vrot.slane %v835, 1
  %v837 = vadd.f32 %v835, %v836
  %v838 = vsel %vm632, %v756, 0.0
  %v839 = vrot.slane %v838, 4
  %v840 = vadd.f32 %v838, %v839
  %v841 = vrot.slane %v840, 2
  %v842 = vadd.f32 %v840, %v841
  %v843 = vrot.slane %v842, 1
  %v844 = vadd.f32 %v842, %v843
  %v845 = vsel %vm632, %v757, 0.0
  %v846 = vrot.slane %v845, 4
  %v847 = vadd.f32 %v845, %v846
  %v848 = vrot.slane %v847, 2
  %v849 = vadd.f32 %v847, %v848
  %v850 = vrot.slane %v849, 1
  %v851 = vadd.f32 %v849, %v850
  %v852 = vsel %vm632, %v758, 0.0
  %v853 = vrot.slane %v852, 4
  %v854 = vadd.f32 %v852, %v853
  %v855 = vrot.slane %v854, 2
  %v856 = vadd.f32 %v854, %v855
  %v857 = vrot.slane %v856, 1
  %v858 = vadd.f32 %v856, %v857
  %v859 = vsel %vm632, %v759, 0.0
  %v860 = vrot.slane %v859, 4
  %v861 = vadd.f32 %v859, %v860
  %v862 = vrot.slane %v861, 2
  %v863 = vadd.f32 %v861, %v862
  %v864 = vrot.slane %v863, 1
  %v865 = vadd.f32 %v863, %v864
  %v866 = vsel %vm632, %v760, 0.0
  %v867 = vrot.slane %v866, 4
  %v868 = vadd.f32 %v866, %v867
  %v869 = vrot.slane %v868, 2
  %v870 = vadd.f32 %v868, %v869
  %v871 = vrot.slane %v870, 1
  %v872 = vadd.f32 %v870, %v871
  %v873 = vsel %vm163, %v639, %v767
  %v874 = vsel %vm163, %v646, %v774
  %v875 = vsel %vm163, %v653, %v781
  %v876 = vsel %vm163, %v660, %v788
  %v877 = vsel %vm163, %v667, %v795
  %v878 = vsel %vm163, %v674, %v802
  %v879 = vsel %vm163, %v681, %v809
  %v880 = vsel %vm163, %v688, %v816
  %v881 = vsel %vm163, %v695, %v823
  %v882 = vsel %vm163, %v702, %v830
  %v883 = vsel %vm163, %v709, %v837
  %v884 = vsel %vm163, %v716, %v844
  %v885 = vsel %vm163, %v723, %v851
  %v886 = vsel %vm163, %v730, %v858
  %v887 = vsel %vm163, %v737, %v865
  %v888 = vsel %vm163, %v744, %v872
  %v905 = vcombine.low %v873, %v874
  %v906 = vcombine.low %v875, %v876
  %v908 = vunpack.c.l.s4 1983009808
  %v909 = vunpack.c.0.s8 %v908
  %v910 = vlaneseq
  %v911 = vshrl.u32 %v910, 7
  %v912 = vsub.s32 %v909, %v911
  %v913 = vrot.slane %v905, %v912
  %v915 = vunpack.c.l.s4 1983009808
  %v916 = vunpack.c.0.s8 %v915
  %v917 = vlaneseq
  %v918 = vshrl.u32 %v917, 7
  %v919 = vsub.s32 %v916, %v918
  %v920 = vrot.slane %v906, %v919
  %v921 = vcombine.low %v913, %v920
  %v922 = vcombine.low %v877, %v878
  %v923 = vcombine.low %v879, %v880
  %v925 = vunpack.c.l.s4 1983009808
  %v926 = vunpack.c.0.s8 %v925
  %v927 = vlaneseq
  %v928 = vshrl.u32 %v927, 7
  %v929 = vsub.s32 %v926, %v928
  %v930 = vrot.slane %v922, %v929
  %v932 = vunpack.c.l.s4 1983009808
  %v933 = vunpack.c.0.s8 %v932
  %v934 = vlaneseq
  %v935 = vshrl.u32 %v934, 7
  %v936 = vsub.s32 %v933, %v935
  %v937 = vrot.slane %v923, %v936
  %v938 = vcombine.low %v930, %v937
  %v939 = vcombine.low %v881, %v882
  %v940 = vcombine.low %v883, %v884
  %v942 = vunpack.c.l.s4 1983009808
  %v943 = vunpack.c.0.s8 %v942
  %v944 = vlaneseq
  %v945 = vshrl.u32 %v944, 7
  %v946 = vsub.s32 %v943, %v945
  %v947 = vrot.slane %v939, %v946
  %v949 = vunpack.c.l.s4 1983009808
  %v950 = vunpack.c.0.s8 %v949
  %v951 = vlaneseq
  %v952 = vshrl.u32 %v951, 7
  %v953 = vsub.s32 %v950, %v952
  %v954 = vrot.slane %v940, %v953
  %v955 = vcombine.low %v947, %v954
  %v956 = vcombine.low %v885, %v886
  %v957 = vcombine.low %v887, %v888
  %v959 = vunpack.c.l.s4 1983009808
  %v960 = vunpack.c.0.s8 %v959
  %v961 = vlaneseq
  %v962 = vshrl.u32 %v961, 7
  %v963 = vsub.s32 %v960, %v962
  %v964 = vrot.slane %v956, %v963
  %v966 = vunpack.c.l.s4 1983009808
  %v967 = vunpack.c.0.s8 %v966
  %v968 = vlaneseq
  %v969 = vshrl.u32 %v968, 7
  %v970 = vsub.s32 %v967, %v969
  %v971 = vrot.slane %v957, %v970
  %v972 = vcombine.low %v964, %v971
  %977 = vst [vmem:[%s3] sm:$0xff] %v921
  %978 = vst [vmem:[%s3 + $0x8] sm:$0xff] %v938
  %979 = vst [vmem:[%s3 + $0x10] sm:$0xff] %v955
  %980 = vst [vmem:[%s3 + $0x18] sm:$0xff] %v972
  // Predicated region
  $region10: #{generator_forward.7} parent=0 // pred_check
    _
  $region11: #{generator_forward.7} parent=0 // pred_check_branch
    %982 = sbr.rel (0) target = $region13
  $region12: #{generator_forward.7} parent=0 // pred_region
    _
  $region13: #{generator_forward.7} parent=0 // pred_fallthru
    _
  // Predicated region
  $region14: #{generator_forward.7} parent=0 // pred_check
    _
  $region15: #{generator_forward.7} parent=0 // pred_check_branch
    %984 = sbr.rel (0) target = $region17
  $region16: #{generator_forward.7} parent=0 // pred_region
    _
  $region17: #{generator_forward.7} parent=0 // pred_fallthru
    _
  // Predicated region
  $region18: #{generator_forward.7} parent=0 // pred_check
    _
  $region19: #{generator_forward.7} parent=0 // pred_check_branch
    %986 = sbr.rel (0) target = $region21
  $region20: #{generator_forward.7} parent=0 // pred_region
    _
  $region21: #{generator_forward.7} parent=0 // pred_fallthru
    _
  // Predicated region
  $region22: #{generator_forward.7} parent=0 // pred_check
    _
  $region23: #{generator_forward.7} parent=0 // pred_check_branch
    %988 = sbr.rel (0) target = $region25
  $region24: #{generator_forward.7} parent=0 // pred_region
    _
  $region25: #{generator_forward.7} parent=0 // pred_fallthru
    _

// kernel: generator_forward.10
$region0: #{generator_forward.10}
  #allocation0 [shape = 'u32[]', space=smem, size = 0x4, offset = 0x4, fixed_abs, tag = 'smem constant byte address 0x4 - core index']
  #allocation1 [shape = 'u32[144,128]{1,0:T(1,128)}', space=vmem, size = 0x12000, scoped, tag = 'internal scratch']
  %s0 = inlined_call_operand.vmem [shape: f32[128,128], index: 0, kind: input, shape index: {}]
  %s1 = inlined_call_operand.vmem [shape: f32[1,128], index: 1, kind: input, shape index: {}]
  %s2 = inlined_call_operand.vmem [shape: f32[1,128], index: 2, kind: input, shape index: {}]
  %s3 = inlined_call_operand.vmem [shape: bf16[128,128], index: 3, kind: output, shape index: {}]
  %s4 = sld [smem:[#allocation0]]
  $region22: #{generator_forward.10} parent=0
    _
  %s6 = ssub.s32 1, %s4
  %s7 = scalar_select 0, %s6, %s4
  // Predicated region
  $region2: #{generator_forward.10} parent=0 // pred_check
    _
  $region3: #{generator_forward.10} parent=0 // pred_check_branch
    %9 = sbr.rel (0) target = $region5
  $region4: #{generator_forward.10} parent=0 // pred_region
    _
  $region5: #{generator_forward.10} parent=0 // pred_fallthru
    _
  // Predicated region
  $region6: #{generator_forward.10} parent=0 // pred_check
    _
  $region7: #{generator_forward.10} parent=0 // pred_check_branch
    %11 = sbr.rel (0) target = $region9
  $region8: #{generator_forward.10} parent=0 // pred_region
    _
  $region9: #{generator_forward.10} parent=0 // pred_fallthru
    _
  // Predicated region
  $region10: #{generator_forward.10} parent=0 // pred_check
    _
  $region11: #{generator_forward.10} parent=0 // pred_check_branch
    %13 = sbr.rel (0) target = $region13
  $region12: #{generator_forward.10} parent=0 // pred_region
    _
  $region13: #{generator_forward.10} parent=0 // pred_fallthru
    _
  %v14 = vld [vmem:[%s0] sm:$0xff]
  %v15 = vld [vmem:[%s0 + $0x8] sm:$0xff]
  %v16 = vld [vmem:[%s0 + $0x10] sm:$0xff]
  %v17 = vld [vmem:[%s0 + $0x18] sm:$0xff]
  %v18 = vld [vmem:[%s0 + $0x20] sm:$0xff]
  %v19 = vld [vmem:[%s0 + $0x28] sm:$0xff]
  %v20 = vld [vmem:[%s0 + $0x30] sm:$0xff]
  %v21 = vld [vmem:[%s0 + $0x38] sm:$0xff]
  %v22 = vld [vmem:[%s0 + $0x40] sm:$0xff]
  %v23 = vld [vmem:[%s0 + $0x48] sm:$0xff]
  %v24 = vld [vmem:[%s0 + $0x50] sm:$0xff]
  %v25 = vld [vmem:[%s0 + $0x58] sm:$0xff]
  %v26 = vld [vmem:[%s0 + $0x60] sm:$0xff]
  %v27 = vld [vmem:[%s0 + $0x68] sm:$0xff]
  %v28 = vld [vmem:[%s0 + $0x70] sm:$0xff]
  %v29 = vld [vmem:[%s0 + $0x78] sm:$0xff]
  %v30 = vld [vmem:[%s1] sm:$0x1]
  %v32 = vlaneseq
  %v33 = vshrl.u32 %v32, 7
  %v34 = vsub.s32 0, %v33
  %v35 = vrot.slane %v30, %v34
  %v37 = vmul.f32 %v14, %v35
  %v38 = vmul.f32 %v15, %v35
  %v39 = vmul.f32 %v16, %v35
  %v40 = vmul.f32 %v17, %v35
  %v41 = vmul.f32 %v18, %v35
  %v42 = vmul.f32 %v19, %v35
  %v43 = vmul.f32 %v20, %v35
  %v44 = vmul.f32 %v21, %v35
  %v45 = vmul.f32 %v22, %v35
  %v46 = vmul.f32 %v23, %v35
  %v47 = vmul.f32 %v24, %v35
  %v48 = vmul.f32 %v25, %v35
  %v49 = vmul.f32 %v26, %v35
  %v50 = vmul.f32 %v27, %v35
  %v51 = vmul.f32 %v28, %v35
  %v52 = vmul.f32 %v29, %v35
  %v53 = vld [vmem:[%s2] sm:$0x1]
  %v55 = vlaneseq
  %v56 = vshrl.u32 %v55, 7
  %v57 = vsub.s32 0, %v56
  %v58 = vrot.slane %v53, %v57
  %v60 = vadd.f32 %v37, %v58
  %v61 = vadd.f32 %v38, %v58
  %v62 = vadd.f32 %v39, %v58
  %v63 = vadd.f32 %v40, %v58
  %v64 = vadd.f32 %v41, %v58
  %v65 = vadd.f32 %v42, %v58
  %v66 = vadd.f32 %v43, %v58
  %v67 = vadd.f32 %v44, %v58
  %v68 = vadd.f32 %v45, %v58
  %v69 = vadd.f32 %v46, %v58
  %v70 = vadd.f32 %v47, %v58
  %v71 = vadd.f32 %v48, %v58
  %v72 = vadd.f32 %v49, %v58
  %v73 = vadd.f32 %v50, %v58
  %v74 = vadd.f32 %v51, %v58
  %v75 = vadd.f32 %v52, %v58
  %v76 = vmax.f32 %v60, 0.0
  %v77 = vmax.f32 %v61, 0.0
  %v78 = vmax.f32 %v62, 0.0
  %v79 = vmax.f32 %v63, 0.0
  %v80 = vmax.f32 %v64, 0.0
  %v81 = vmax.f32 %v65, 0.0
  %v82 = vmax.f32 %v66, 0.0
  %v83 = vmax.f32 %v67, 0.0
  %v84 = vmax.f32 %v68, 0.0
  %v85 = vmax.f32 %v69, 0.0
  %v86 = vmax.f32 %v70, 0.0
  %v87 = vmax.f32 %v71, 0.0
  %v88 = vmax.f32 %v72, 0.0
  %v89 = vmax.f32 %v73, 0.0
  %v90 = vmax.f32 %v74, 0.0
  %v91 = vmax.f32 %v75, 0.0
  %v92 = vpack.c.bf16 %v77, %v76
  %v93 = vpack.c.bf16 %v79, %v78
  %v94 = vpack.c.bf16 %v81, %v80
  %v95 = vpack.c.bf16 %v83, %v82
  %v96 = vpack.c.bf16 %v85, %v84
  %v97 = vpack.c.bf16 %v87, %v86
  %v98 = vpack.c.bf16 %v89, %v88
  %v99 = vpack.c.bf16 %v91, %v90
  %v108 = vunpack.c.l.b16 %v92
  %v109 = vunpack.c.h.b16 %v92
  %v110 = vunpack.c.l.b16 %v93
  %v111 = vunpack.c.h.b16 %v93
  %v112 = vunpack.c.l.b16 %v94
  %v113 = vunpack.c.h.b16 %v94
  %v114 = vunpack.c.l.b16 %v95
  %v115 = vunpack.c.h.b16 %v95
  %v116 = vunpack.c.l.b16 %v96
  %v117 = vunpack.c.h.b16 %v96
  %v118 = vunpack.c.l.b16 %v97
  %v119 = vunpack.c.h.b16 %v97
  %v120 = vunpack.c.l.b16 %v98
  %v121 = vunpack.c.h.b16 %v98
  %v122 = vunpack.c.l.b16 %v99
  %v123 = vunpack.c.h.b16 %v99
  %v124 = vpack.c.b16 %v108, %v108
  %v125 = vpack.c.b16 %v109, %v109
  %v126 = vpack.c.b16 %v110, %v110
  %v127 = vpack.c.b16 %v111, %v111
  %v128 = vpack.c.b16 %v112, %v112
  %v129 = vpack.c.b16 %v113, %v113
  %v130 = vpack.c.b16 %v114, %v114
  %v131 = vpack.c.b16 %v115, %v115
  %v132 = vpack.c.b16 %v116, %v116
  %v133 = vpack.c.b16 %v117, %v117
  %v134 = vpack.c.b16 %v118, %v118
  %v135 = vpack.c.b16 %v119, %v119
  %v136 = vpack.c.b16 %v120, %v120
  %v137 = vpack.c.b16 %v121, %v121
  %v138 = vpack.c.b16 %v122, %v122
  %v139 = vpack.c.b16 %v123, %v123
  %156 = vst [vmem:[%s3] sm:$0xf] %v124
  %157 = vst [vmem:[%s3 + $0x4] sm:$0xf] %v125
  %158 = vst [vmem:[%s3 + $0x8] sm:$0xf] %v126
  %159 = vst [vmem:[%s3 + $0xc] sm:$0xf] %v127
  %160 = vst [vmem:[%s3 + $0x10] sm:$0xf] %v128
  %161 = vst [vmem:[%s3 + $0x14] sm:$0xf] %v129
  %162 = vst [vmem:[%s3 + $0x18] sm:$0xf] %v130
  %163 = vst [vmem:[%s3 + $0x1c] sm:$0xf] %v131
  %164 = vst [vmem:[%s3 + $0x20] sm:$0xf] %v132
  %165 = vst [vmem:[%s3 + $0x24] sm:$0xf] %v133
  %166 = vst [vmem:[%s3 + $0x28] sm:$0xf] %v134
  %167 = vst [vmem:[%s3 + $0x2c] sm:$0xf] %v135
  %168 = vst [vmem:[%s3 + $0x30] sm:$0xf] %v136
  %169 = vst [vmem:[%s3 + $0x34] sm:$0xf] %v137
  %170 = vst [vmem:[%s3 + $0x38] sm:$0xf] %v138
  %171 = vst [vmem:[%s3 + $0x3c] sm:$0xf] %v139
  // Predicated region
  $region14: #{generator_forward.10} parent=0 // pred_check
    _
  $region15: #{generator_forward.10} parent=0 // pred_check_branch
    %173 = sbr.rel (0) target = $region17
  $region16: #{generator_forward.10} parent=0 // pred_region
    _
  $region17: #{generator_forward.10} parent=0 // pred_fallthru
    _
  // Predicated region
  $region18: #{generator_forward.10} parent=0 // pred_check
    _
  $region19: #{generator_forward.10} parent=0 // pred_check_branch
    %175 = sbr.rel (0) target = $region21
  $region20: #{generator_forward.10} parent=0 // pred_region
    _
  $region21: #{generator_forward.10} parent=0 // pred_fallthru
    _

// kernel: generator_forward.9
$region0: #{generator_forward.9}
  #allocation0 [shape = 'u32[]', space=smem, size = 0x4, offset = 0x4, fixed_abs, tag = 'smem constant byte address 0x4 - core index']
  #allocation1 [shape = 'u32[144,128]{1,0:T(1,128)}', space=vmem, size = 0x12000, scoped, tag = 'internal scratch']
  %s0 = inlined_call_operand.vmem [shape: bf16[4,32,128], index: 0, kind: input, shape index: {}]
  %s1 = inlined_call_operand.vmem [shape: bf16[4,128,128], index: 1, kind: input, shape index: {}]
  %s2 = inlined_call_operand.vmem [shape: f32[4,32,128], index: 2, kind: output, shape index: {0}]
  %s3 = inlined_call_operand.vmem [shape: f32[4,1,2,128], index: 3, kind: output, shape index: {1}]
  %4 = xla_tuple %s2, %s3
  %s5 = sld [smem:[#allocation0]]
  $region49: #{generator_forward.9} parent=0
    _
  %s7 = ssub.s32 1, %s5
  %s8 = scalar_select 0, %s7, %s5
  loop: start=0, step=1, limit=6
  $region2: #{generator_forward.9} parent=0 // loop_pre_header
    _
  $region3: #{generator_forward.9} parent=0 // loop_header
    %s10 = sphi 0, %s14
    %p11 = scmp.ge.s32.totalorder %s10, 6
    %s17 = sphi 0, %s29
    %s18 = sphi 0, %s25
    %s19 = sphi 0, %s17
    %s20 = sphi 0, %s18
    %s21 = sphi 0, %s19
    %s22 = sphi 0, %s20
    %s34 = sphi 0, %s36
    %s37 = sphi 0, %s34
    %s38 = sphi 0, %s37
    %s54 = sphi 0, %s38
    %s60 = sphi 0, %s62
    %s63 = sphi 0, %s60
    %s64 = sphi 0, %s63
    %s80 = sphi 0, %s64
    %s88 = sphi 0, %s90
    %s91 = sphi 0, %s88
    %s92 = sphi 0, %s91
    %s108 = sphi 0, %s92
    %s116 = sphi 0, %s118
    %s119 = sphi 0, %s116
    %s120 = sphi 0, %s119
    %s136 = sphi 0, %s120
  $region4: #{generator_forward.9} parent=0 // loop_header_branch
    %13 = sbr.rel (%p11) target = $region8
  $region5: #{generator_forward.9} parent=0 // loop_body
    %s15 = ssub.s32 %s10, 1
    %s16 = ssub.s32 %s10, 2
    %s23 = sadd.s32 1, %s18
    %p24 = scmp.ge.s32.totalorder %s23, 1
    %s25 = scalar_select %p24, 0, %s23
    %s26 = sadd.s32 1, %s17
    %s27 = scalar_select %p24, %s26, %s17
    %p28 = scmp.ge.s32.totalorder %s27, 4
    %s29 = scalar_select %p28, 0, %s27
    %s30 = ssub.s32 %s17, %s29
    %s31 = ssub.s32 %s18, %s25
    %s32 = sor.u32 %s30, %s31
    %p33 = scmp.eq.s32.totalorder %s32, 0
    %s35 = sadd.s32 %s34, 1
    %s36 = scalar_select %p33, %s34, %s35
    %p39 = pneg %p33
    %p40 = scmp.eq.s32.totalorder %s10, 3
    %p41 = por %p39, %p40
    %p42 = scmp.ne.s32.totalorder %s34, %s37
    %p43 = scmp.eq.s32.totalorder %s10, 0
    %p44 = por %p42, %p43
    %p45 = scmp.ne.s32.totalorder %s34, %s37
    %p46 = scmp.eq.s32.totalorder %s15, 3
    %p47 = por %p45, %p46
    %p48 = scmp.ne.s32.totalorder %s37, %s38
    %p49 = scmp.eq.s32.totalorder %s15, 0
    %p50 = por %p48, %p49
    %p51 = scmp.ne.s32.totalorder %s37, %s38
    %p52 = scmp.eq.s32.totalorder %s16, 3
    %p53 = por %p51, %p52
    %p55 = scmp.ne.s32.totalorder %s38, %s54
    %p56 = scmp.eq.s32.totalorder %s16, 0
    %p57 = por %p55, %p56
    %s58 = ssub.s32 %s17, %s29
    %p59 = scmp.eq.s32.totalorder %s58, 0
    %s61 = sadd.s32 %s60, 1
    %s62 = scalar_select %p59, %s60, %s61
    %p65 = pneg %p59
    %p66 = scmp.eq.s32.totalorder %s10, 3
    %p67 = por %p65, %p66
    %p68 = scmp.ne.s32.totalorder %s60, %s63
    %p69 = scmp.eq.s32.totalorder %s10, 0
    %p70 = por %p68, %p69
    %p71 = scmp.ne.s32.totalorder %s60, %s63
    %p72 = scmp.eq.s32.totalorder %s15, 3
    %p73 = por %p71, %p72
    %p74 = scmp.ne.s32.totalorder %s63, %s64
    %p75 = scmp.eq.s32.totalorder %s15, 0
    %p76 = por %p74, %p75
    %p77 = scmp.ne.s32.totalorder %s63, %s64
    %p78 = scmp.eq.s32.totalorder %s16, 3
    %p79 = por %p77, %p78
    %p81 = scmp.ne.s32.totalorder %s64, %s80
    %p82 = scmp.eq.s32.totalorder %s16, 0
    %p83 = por %p81, %p82
    %s84 = ssub.s32 %s17, %s29
    %s85 = ssub.s32 %s18, %s25
    %s86 = sor.u32 %s84, %s85
    %p87 = scmp.eq.s32.totalorder %s86, 0
    %s89 = sadd.s32 %s88, 1
    %s90 = scalar_select %p87, %s88, %s89
    %p93 = pneg %p87
    %p94 = scmp.eq.s32.totalorder %s10, 3
    %p95 = por %p93, %p94
    %p96 = scmp.ne.s32.totalorder %s88, %s91
    %p97 = scmp.eq.s32.totalorder %s10, 0
    %p98 = por %p96, %p97
    %p99 = scmp.ne.s32.totalorder %s88, %s91
    %p100 = scmp.eq.s32.totalorder %s15, 3
    %p101 = por %p99, %p100
    %p102 = scmp.ne.s32.totalorder %s91, %s92
    %p103 = scmp.eq.s32.totalorder %s15, 0
    %p104 = por %p102, %p103
    %p105 = scmp.ne.s32.totalorder %s91, %s92
    %p106 = scmp.eq.s32.totalorder %s16, 3
    %p107 = por %p105, %p106
    %p109 = scmp.ne.s32.totalorder %s92, %s108
    %p110 = scmp.eq.s32.totalorder %s16, 0
    %p111 = por %p109, %p110
    %s112 = ssub.s32 %s17, %s29
    %s113 = ssub.s32 %s18, %s25
    %s114 = sor.u32 %s112, %s113
    %p115 = scmp.eq.s32.totalorder %s114, 0
    %s117 = sadd.s32 %s116, 1
    %s118 = scalar_select %p115, %s116, %s117
    %p121 = pneg %p115
    %p122 = scmp.eq.s32.totalorder %s10, 3
    %p123 = por %p121, %p122
    %p124 = scmp.ne.s32.totalorder %s116, %s119
    %p125 = scmp.eq.s32.totalorder %s10, 0
    %p126 = por %p124, %p125
    %p127 = scmp.ne.s32.totalorder %s116, %s119
    %p128 = scmp.eq.s32.totalorder %s15, 3
    %p129 = por %p127, %p128
    %p130 = scmp.ne.s32.totalorder %s119, %s120
    %p131 = scmp.eq.s32.totalorder %s15, 0
    %p132 = por %p130, %p131
    %p133 = scmp.ne.s32.totalorder %s119, %s120
    %p134 = scmp.eq.s32.totalorder %s16, 3
    %p135 = por %p133, %p134
    %p137 = scmp.ne.s32.totalorder %s120, %s136
    %p138 = scmp.eq.s32.totalorder %s16, 0
    %p139 = por %p137, %p138
    %p140 = scmp.le.s32.totalorder 1, %s10
    %p141 = scmp.lt.s32.totalorder %s10, 5
    %p142 = pnand %p140, %p141
    %p143 = pneg %p142
    // Predicated region
    $region9: #{generator_forward.9} parent=5 // pred_check
      _
    $region10: #{generator_forward.9} parent=5 // pred_check_branch
      %145 = sbr.rel (%p142) target = $region12
    $region11: #{generator_forward.9} parent=5 // pred_region
      %s146 = ssub.s32 %s10, 1
    $region12: #{generator_forward.9} parent=5 // pred_fallthru
      _
    %p147 = scmp.lt.s32.totalorder %s10, 4
    // Predicated region
    $region13: #{generator_forward.9} parent=5 // pred_check
      %p148 = pneg %p147
    $region14: #{generator_forward.9} parent=5 // pred_check_branch
      %150 = sbr.rel (%p148) target = $region16
    $region15: #{generator_forward.9} parent=5 // pred_region
      // Predicated region
      $region17: #{generator_forward.9} parent=15 // pred_check
        %p151 = pneg %p44
      $region18: #{generator_forward.9} parent=15 // pred_check_branch
        %153 = sbr.rel (%p151) target = $region20
      $region19: #{generator_forward.9} parent=15 // pred_region
        %s154 = smul.u32 4, %s18
        %p155 = scmp.lt.s32.totalorder %s17, 3
        %s156 = scalar_select %p155, %s17, 3
        %p157 = scmp.lt.s32.totalorder %s154, 3
        %s158 = scalar_select %p157, %s154, 3
        %s159 = smul.addr %s156, 4
        %s160 = sadd.s32 %s158, %s159
        %s161 = smul.addr %s160, 4
        %s162 = scalar_lea.vmem %s0, %s161
        %s163 = smul.u32 4, %s18
      $region20: #{generator_forward.9} parent=15 // pred_fallthru
        _
      // Predicated region
      $region21: #{generator_forward.9} parent=15 // pred_check
        %p164 = pneg %p70
      $region22: #{generator_forward.9} parent=15 // pred_check_branch
        %166 = sbr.rel (%p164) target = $region24
      $region23: #{generator_forward.9} parent=15 // pred_region
        %p167 = scmp.lt.s32.totalorder %s17, 3
        %s168 = scalar_select %p167, %s17, 3
        %s169 = smul.addr %s168, 16
        %s170 = smul.addr %s169, 4
        %s171 = scalar_lea.vmem %s1, %s170
      $region24: #{generator_forward.9} parent=15 // pred_fallthru
        _
    $region16: #{generator_forward.9} parent=5 // pred_fallthru
      _
    %p172 = scmp.le.s32.totalorder 1, %s10
    %p173 = scmp.lt.s32.totalorder %s10, 5
    %p174 = pnand %p172, %p173
    %p175 = pneg %p174
    // Predicated region
    $region25: #{generator_forward.9} parent=5 // pred_check
      _
    $region26: #{generator_forward.9} parent=5 // pred_check_branch
      %177 = sbr.rel (%p174) target = $region28
    $region27: #{generator_forward.9} parent=5 // pred_region
      %s178 = ssub.s32 %s10, 1
      %s179 = smul.u32 4, %s20
      %p180 = scmp.lt.s32.totalorder %s19, 3
      %s181 = scalar_select %p180, %s19, 3
      %p182 = scmp.lt.s32.totalorder %s179, 3
      %s183 = scalar_select %p182, %s179, 3
      %s184 = smul.addr %s181, 4
      %s185 = sadd.s32 %s183, %s184
      %s186 = smul.addr %s185, 4
      %s187 = scalar_lea.vmem %s0, %s186
      %p188 = pneg %p50
      %p189 = pneg %p47
      %p190 = scmp.lt.s32.totalorder %s19, 3
      %s191 = scalar_select %p190, %s19, 3
      %s192 = smul.addr %s191, 16
      %s193 = smul.addr %s192, 4
      %s194 = scalar_lea.vmem %s1, %s193
      %p195 = pneg %p76
      %p196 = pneg %p73
      %p197 = pneg %p104
      %p198 = pneg %p101
      %s199 = smul.u32 4, %s20
      %p200 = scmp.lt.s32.totalorder %s19, 3
      %s201 = scalar_select %p200, %s19, 3
      %p202 = scmp.lt.s32.totalorder %s199, 3
      %s203 = scalar_select %p202, %s199, 3
      %s204 = smul.addr %s201, 4
      %s205 = sadd.s32 %s203, %s204
      %s206 = smul.addr %s205, 8
      %s207 = scalar_lea.vmem %s2, %s206
      %p208 = pneg %p132
      %p209 = pneg %p129
      %p210 = scmp.lt.s32.totalorder %s19, 3
      %s211 = scalar_select %p210, %s19, 3
      %p212 = scmp.lt.s32.totalorder %s20, 0
      %s213 = scalar_select %p212, %s20, 0
      %s214 = sadd.s32 %s213, %s211
      %s215 = smul.addr %s214, 2
      %s216 = scalar_lea.vmem %s3, %s215
      %s217 = smul.u32 4, %s20
      %p218 = scmp.lt.s32.totalorder %s19, 3
      %s219 = scalar_select %p218, %s19, 3
      %p220 = scmp.lt.s32.totalorder %s217, 3
      %s221 = scalar_select %p220, %s217, 3
      %s222 = smul.addr %s219, 4
      %s223 = sadd.s32 %s221, %s222
      %s224 = smul.addr %s223, 4
      %s225 = scalar_lea.vmem %s0, %s224
      %s226 = smul.u32 4, %s20
      %p227 = scmp.lt.s32.totalorder %s19, 3
      %s228 = scalar_select %p227, %s19, 3
      %s229 = smul.addr %s228, 16
      %s230 = smul.addr %s229, 4
      %s231 = scalar_lea.vmem %s1, %s230
      %s232 = smul.u32 4, %s20
      %p233 = scmp.lt.s32.totalorder %s19, 3
      %s234 = scalar_select %p233, %s19, 3
      %p235 = scmp.lt.s32.totalorder %s232, 3
      %s236 = scalar_select %p235, %s232, 3
      %s237 = smul.addr %s234, 4
      %s238 = sadd.s32 %s236, %s237
      %s239 = smul.addr %s238, 8
      %s240 = scalar_lea.vmem %s2, %s239
      %s241 = smul.u32 4, %s20
      %p242 = scmp.lt.s32.totalorder %s19, 3
      %s243 = scalar_select %p242, %s19, 3
      %p244 = scmp.lt.s32.totalorder %s20, 0
      %s245 = scalar_select %p244, %s20, 0
      %s246 = sadd.s32 %s245, %s243
      %s247 = smul.addr %s246, 2
      %s248 = scalar_lea.vmem %s3, %s247
      %v250 = vld [vmem:[%s225] sm:$0xf]
      %v251 = vld [vmem:[%s225 + $0x4] sm:$0xf]
      %v252 = vld [vmem:[%s225 + $0x8] sm:$0xf]
      %v253 = vld [vmem:[%s225 + $0xc] sm:$0xf]
      %v254 = vld [vmem:[%s231] sm:$0xf]
      %v255 = vld [vmem:[%s231 + $0x4] sm:$0xf]
      %v256 = vld [vmem:[%s231 + $0x8] sm:$0xf]
      %v257 = vld [vmem:[%s231 + $0xc] sm:$0xf]
      %v258 = vld [vmem:[%s231 + $0x10] sm:$0xf]
      %v259 = vld [vmem:[%s231 + $0x14] sm:$0xf]
      %v260 = vld [vmem:[%s231 + $0x18] sm:$0xf]
      %v261 = vld [vmem:[%s231 + $0x1c] sm:$0xf]
      %v262 = vld [vmem:[%s231 + $0x20] sm:$0xf]
      %v263 = vld [vmem:[%s231 + $0x24] sm:$0xf]
      %v264 = vld [vmem:[%s231 + $0x28] sm:$0xf]
      %v265 = vld [vmem:[%s231 + $0x2c] sm:$0xf]
      %v266 = vld [vmem:[%s231 + $0x30] sm:$0xf]
      %v267 = vld [vmem:[%s231 + $0x34] sm:$0xf]
      %v268 = vld [vmem:[%s231 + $0x38] sm:$0xf]
      %v269 = vld [vmem:[%s231 + $0x3c] sm:$0xf]
      %v274 = vunpack.c.l.b16 %v250
      %v275 = vunpack.c.l.b16 %v251
      %v276 = vunpack.c.l.b16 %v252
      %v277 = vunpack.c.l.b16 %v253
      %v278 = vpack.c.b16 %v275, %v274
      %v279 = vpack.c.b16 %v277, %v276
      %v298 = vunpack.c.l.b16 %v254
      %v299 = vunpack.c.l.b16 %v255
      %v300 = vunpack.c.l.b16 %v256
      %v301 = vunpack.c.l.b16 %v257
      %v302 = vunpack.c.l.b16 %v258
      %v303 = vunpack.c.l.b16 %v259
      %v304 = vunpack.c.l.b16 %v260
      %v305 = vunpack.c.l.b16 %v261
      %v306 = vunpack.c.l.b16 %v262
      %v307 = vunpack.c.l.b16 %v263
      %v308 = vunpack.c.l.b16 %v264
      %v309 = vunpack.c.l.b16 %v265
      %v310 = vunpack.c.l.b16 %v266
      %v311 = vunpack.c.l.b16 %v267
      %v312 = vunpack.c.l.b16 %v268
      %v313 = vunpack.c.l.b16 %v269
      %v314 = vpack.c.b16 %v299, %v298
      %v315 = vpack.c.b16 %v301, %v300
      %v316 = vpack.c.b16 %v303, %v302
      %v317 = vpack.c.b16 %v305, %v304
      %v318 = vpack.c.b16 %v307, %v306
      %v319 = vpack.c.b16 %v309, %v308
      %v320 = vpack.c.b16 %v311, %v310
      %v321 = vpack.c.b16 %v313, %v312
      %330 = vmatprep.subr.bf16.mxu0 0
      %331 = vmatpush1.bf16.msra.mxu0 %v321
      %332 = vmatprep.subr.bf16.mxu0 0
      %333 = vmatpush1.bf16.msra.mxu0 %v320
      %334 = vmatprep.subr.bf16.mxu0 0
      %335 = vmatpush1.bf16.msra.mxu0 %v319
      %336 = vmatprep.subr.bf16.mxu0 0
      %337 = vmatpush1.bf16.msra.mxu0 %v318
      %338 = vmatprep.subr.bf16.mxu0 0
      %339 = vmatpush1.bf16.msra.mxu0 %v317
      %340 = vmatprep.subr.bf16.mxu0 0
      %341 = vmatpush1.bf16.msra.mxu0 %v316
      %342 = vmatprep.subr.bf16.mxu0 0
      %343 = vmatpush1.bf16.msra.mxu0 %v315
      %344 = vmatprep.subr.bf16.mxu0 0
      %345 = vmatpush1.bf16.msra.mxu0 %v314
      %346 = vmatprep.subr.bf16.mxu0 0
      %347 = vmatpush2.bf16.msra.mxu0 0
      %348 = vmatprep.subr.bf16.mxu0 0
      %349 = vmatpush2.bf16.msra.mxu0 0
      %350 = vmatprep.subr.bf16.mxu0 0
      %351 = vmatpush2.bf16.msra.mxu0 0
      %352 = vmatprep.subr.bf16.mxu0 0
      %353 = vmatpush2.bf16.msra.mxu0 0
      %354 = vmatprep.subr.bf16.mxu0 0
      %355 = vmatpush2.bf16.msra.mxu0 0
      %356 = vmatprep.subr.bf16.mxu0 0
      %357 = vmatpush2.bf16.msra.mxu0 0
      %358 = vmatprep.subr.bf16.mxu0 0
      %359 = vmatpush2.bf16.msra.mxu0 0
      %360 = vmatprep.subr.bf16.mxu0 0
      %361 = vmatpush2.bf16.msra.mxu0 0
      %362 = vmatprep.mubr.bf16.mxu0 0
      %363 = vmatmul.mubr.bf16.gmra.mxu0 %v278
      %v364 = vpop.f32.mrf.mxu0
      %v365 = vadd.f32 0.0, %v364
      %v366 = vpop.f32.mrf.mxu0
      %v367 = vpop.f32.mrf.mxu0
      %v368 = vadd.f32 0.0, %v367
      %v369 = vpop.f32.mrf.mxu0
      %370 = vmatprep.mubr.bf16.mxu0 0
      %371 = vmatmul.mubr.bf16.gmra.mxu0 %v279
      %v372 = vpop.f32.mrf.mxu0
      %v373 = vadd.f32 0.0, %v372
      %v374 = vpop.f32.mrf.mxu0
      %v375 = vpop.f32.mrf.mxu0
      %v376 = vadd.f32 0.0, %v375
      %v377 = vpop.f32.mrf.mxu0
      %378 = vdwg.mxu0
      %379 = vst [vmem:[%s240] sm:$0xff] %v365
      %380 = vst [vmem:[%s240 + $0x8] sm:$0xff] %v368
      %381 = vst [vmem:[%s240 + $0x10] sm:$0xff] %v373
      %382 = vst [vmem:[%s240 + $0x18] sm:$0xff] %v376
      %v383 = vadd.f32 %v365, %v368
      %v384 = vadd.f32 %v383, %v373
      %v385 = vadd.f32 %v384, %v376
      %v386 = vrot.slane %v385, 4
      %v387 = vadd.f32 %v385, %v386
      %v388 = vrot.slane %v387, 2
      %v389 = vadd.f32 %v387, %v388
      %v390 = vrot.slane %v389, 1
      %v391 = vadd.f32 %v389, %v390
      %v392 = vmul.f32 %v365, %v365
      %v393 = vmul.f32 %v368, %v368
      %v394 = vmul.f32 %v373, %v373
      %v395 = vmul.f32 %v376, %v376
      %v396 = vadd.f32 %v392, %v393
      %v397 = vadd.f32 %v396, %v394
      %v398 = vadd.f32 %v397, %v395
      %v399 = vrot.slane %v398, 4
      %v400 = vadd.f32 %v398, %v399
      %v401 = vrot.slane %v400, 2
      %v402 = vadd.f32 %v400, %v401
      %v403 = vrot.slane %v402, 1
      %v404 = vadd.f32 %v402, %v403
      %vm405 = vcmask 1040384
      %v406 = vsel %vm405, %v391, %v404
      %407 = vst [vmem:[%s248] sm:$0x3] %v406
      %s408 = smul.u32 4, %s20
      %p409 = scmp.lt.s32.totalorder %s19, 3
      %s410 = scalar_select %p409, %s19, 3
      %p411 = scmp.lt.s32.totalorder %s408, 3
      %s412 = scalar_select %p411, %s408, 3
      %s413 = smul.addr %s410, 4
      %s414 = sadd.s32 %s412, %s413
      %s415 = smul.addr %s414, 8
      %s416 = scalar_lea.vmem %s2, %s415
      %p417 = scmp.lt.s32.totalorder %s19, 3
      %s418 = scalar_select %p417, %s19, 3
      %p419 = scmp.lt.s32.totalorder %s20, 0
      %s420 = scalar_select %p419, %s20, 0
      %s421 = sadd.s32 %s420, %s418
      %s422 = smul.addr %s421, 2
      %s423 = scalar_lea.vmem %s3, %s422
      // Predicated region
      $region29: #{generator_forward.9} parent=27 // pred_check
        %p424 = pneg %p101
      $region30: #{generator_forward.9} parent=27 // pred_check_branch
        %426 = sbr.rel (%p424) target = $region32
      $region31: #{generator_forward.9} parent=27 // pred_region
        %s427 = smul.u32 4, %s20
      $region32: #{generator_forward.9} parent=27 // pred_fallthru
        _
      // Predicated region
      $region33: #{generator_forward.9} parent=27 // pred_check
        %p428 = pneg %p129
      $region34: #{generator_forward.9} parent=27 // pred_check_branch
        %430 = sbr.rel (%p428) target = $region36
      $region35: #{generator_forward.9} parent=27 // pred_region
        _
      $region36: #{generator_forward.9} parent=27 // pred_fallthru
        _
    $region28: #{generator_forward.9} parent=5 // pred_fallthru
      _
    %p431 = scmp.le.s32.totalorder 2, %s10
    // Predicated region
    $region37: #{generator_forward.9} parent=5 // pred_check
      %p432 = pneg %p431
    $region38: #{generator_forward.9} parent=5 // pred_check_branch
      %434 = sbr.rel (%p432) target = $region40
    $region39: #{generator_forward.9} parent=5 // pred_region
      %s435 = ssub.s32 %s10, 2
      // Predicated region
      $region41: #{generator_forward.9} parent=39 // pred_check
        %p436 = pneg %p107
      $region42: #{generator_forward.9} parent=39 // pred_check_branch
        %438 = sbr.rel (%p436) target = $region44
      $region43: #{generator_forward.9} parent=39 // pred_region
        %s439 = smul.u32 4, %s22
        %p440 = scmp.lt.s32.totalorder %s21, 3
        %s441 = scalar_select %p440, %s21, 3
        %p442 = scmp.lt.s32.totalorder %s439, 3
        %s443 = scalar_select %p442, %s439, 3
        %s444 = smul.addr %s441, 4
        %s445 = sadd.s32 %s443, %s444
        %s446 = smul.addr %s445, 8
        %s447 = scalar_lea.vmem %s2, %s446
      $region44: #{generator_forward.9} parent=39 // pred_fallthru
        _
      // Predicated region
      $region45: #{generator_forward.9} parent=39 // pred_check
        %p448 = pneg %p135
      $region46: #{generator_forward.9} parent=39 // pred_check_branch
        %450 = sbr.rel (%p448) target = $region48
      $region47: #{generator_forward.9} parent=39 // pred_region
        %p451 = scmp.lt.s32.totalorder %s21, 3
        %s452 = scalar_select %p451, %s21, 3
        %p453 = scmp.lt.s32.totalorder %s22, 0
        %s454 = scalar_select %p453, %s22, 0
        %s455 = sadd.s32 %s454, %s452
        %s456 = smul.addr %s455, 2
        %s457 = scalar_lea.vmem %s3, %s456
      $region48: #{generator_forward.9} parent=39 // pred_fallthru
        _
    $region40: #{generator_forward.9} parent=5 // pred_fallthru
      _
  $region6: #{generator_forward.9} parent=0 // loop_footer
    %s14 = sadd.s32 1, %s10
  $region7: #{generator_forward.9} parent=0 // loop_footer_branch
    %9 = sbr.rel target = $region3
  $region8: #{generator_forward.9} parent=0 // loop_exit
    _

// kernel: generator_forward.11
$region0: #{generator_forward.11}
  #allocation0 [shape = 'u32[]', space=smem, size = 0x4, offset = 0x4, fixed_abs, tag = 'smem constant byte address 0x4 - core index']
  #allocation1 [shape = 'u32[144,128]{1,0:T(1,128)}', space=vmem, size = 0x12000, scoped, tag = 'internal scratch']
  %s0 = inlined_call_operand.vmem [shape: bf16[4,128,64], index: 0, kind: input, shape index: {}]
  %s1 = inlined_call_operand.vmem [shape: bf16[4,64,128], index: 1, kind: input, shape index: {}]
  %s2 = inlined_call_operand.vmem [shape: f32[4,128,128], index: 2, kind: output, shape index: {0}]
  %s3 = inlined_call_operand.vmem [shape: f32[4,1,2,128], index: 3, kind: output, shape index: {1}]
  %4 = xla_tuple %s2, %s3
  %s5 = sld [smem:[#allocation0]]
  $region49: #{generator_forward.11} parent=0
    _
  %s7 = ssub.s32 1, %s5
  %s8 = scalar_select 0, %s7, %s5
  loop: start=0, step=1, limit=6
  $region2: #{generator_forward.11} parent=0 // loop_pre_header
    _
  $region3: #{generator_forward.11} parent=0 // loop_header
    %s10 = sphi 0, %s14
    %p11 = scmp.ge.s32.totalorder %s10, 6
    %s17 = sphi 0, %s29
    %s18 = sphi 0, %s25
    %s19 = sphi 0, %s17
    %s20 = sphi 0, %s18
    %s21 = sphi 0, %s19
    %s22 = sphi 0, %s20
    %s34 = sphi 0, %s36
    %s37 = sphi 0, %s34
    %s38 = sphi 0, %s37
    %s54 = sphi 0, %s38
    %s60 = sphi 0, %s62
    %s63 = sphi 0, %s60
    %s64 = sphi 0, %s63
    %s80 = sphi 0, %s64
    %s88 = sphi 0, %s90
    %s91 = sphi 0, %s88
    %s92 = sphi 0, %s91
    %s108 = sphi 0, %s92
    %s116 = sphi 0, %s118
    %s119 = sphi 0, %s116
    %s120 = sphi 0, %s119
    %s136 = sphi 0, %s120
  $region4: #{generator_forward.11} parent=0 // loop_header_branch
    %13 = sbr.rel (%p11) target = $region8
  $region5: #{generator_forward.11} parent=0 // loop_body
    %s15 = ssub.s32 %s10, 1
    %s16 = ssub.s32 %s10, 2
    %s23 = sadd.s32 1, %s18
    %p24 = scmp.ge.s32.totalorder %s23, 1
    %s25 = scalar_select %p24, 0, %s23
    %s26 = sadd.s32 1, %s17
    %s27 = scalar_select %p24, %s26, %s17
    %p28 = scmp.ge.s32.totalorder %s27, 4
    %s29 = scalar_select %p28, 0, %s27
    %s30 = ssub.s32 %s17, %s29
    %s31 = ssub.s32 %s18, %s25
    %s32 = sor.u32 %s30, %s31
    %p33 = scmp.eq.s32.totalorder %s32, 0
    %s35 = sadd.s32 %s34, 1
    %s36 = scalar_select %p33, %s34, %s35
    %p39 = pneg %p33
    %p40 = scmp.eq.s32.totalorder %s10, 3
    %p41 = por %p39, %p40
    %p42 = scmp.ne.s32.totalorder %s34, %s37
    %p43 = scmp.eq.s32.totalorder %s10, 0
    %p44 = por %p42, %p43
    %p45 = scmp.ne.s32.totalorder %s34, %s37
    %p46 = scmp.eq.s32.totalorder %s15, 3
    %p47 = por %p45, %p46
    %p48 = scmp.ne.s32.totalorder %s37, %s38
    %p49 = scmp.eq.s32.totalorder %s15, 0
    %p50 = por %p48, %p49
    %p51 = scmp.ne.s32.totalorder %s37, %s38
    %p52 = scmp.eq.s32.totalorder %s16, 3
    %p53 = por %p51, %p52
    %p55 = scmp.ne.s32.totalorder %s38, %s54
    %p56 = scmp.eq.s32.totalorder %s16, 0
    %p57 = por %p55, %p56
    %s58 = ssub.s32 %s17, %s29
    %p59 = scmp.eq.s32.totalorder %s58, 0
    %s61 = sadd.s32 %s60, 1
    %s62 = scalar_select %p59, %s60, %s61
    %p65 = pneg %p59
    %p66 = scmp.eq.s32.totalorder %s10, 3
    %p67 = por %p65, %p66
    %p68 = scmp.ne.s32.totalorder %s60, %s63
    %p69 = scmp.eq.s32.totalorder %s10, 0
    %p70 = por %p68, %p69
    %p71 = scmp.ne.s32.totalorder %s60, %s63
    %p72 = scmp.eq.s32.totalorder %s15, 3
    %p73 = por %p71, %p72
    %p74 = scmp.ne.s32.totalorder %s63, %s64
    %p75 = scmp.eq.s32.totalorder %s15, 0
    %p76 = por %p74, %p75
    %p77 = scmp.ne.s32.totalorder %s63, %s64
    %p78 = scmp.eq.s32.totalorder %s16, 3
    %p79 = por %p77, %p78
    %p81 = scmp.ne.s32.totalorder %s64, %s80
    %p82 = scmp.eq.s32.totalorder %s16, 0
    %p83 = por %p81, %p82
    %s84 = ssub.s32 %s17, %s29
    %s85 = ssub.s32 %s18, %s25
    %s86 = sor.u32 %s84, %s85
    %p87 = scmp.eq.s32.totalorder %s86, 0
    %s89 = sadd.s32 %s88, 1
    %s90 = scalar_select %p87, %s88, %s89
    %p93 = pneg %p87
    %p94 = scmp.eq.s32.totalorder %s10, 3
    %p95 = por %p93, %p94
    %p96 = scmp.ne.s32.totalorder %s88, %s91
    %p97 = scmp.eq.s32.totalorder %s10, 0
    %p98 = por %p96, %p97
    %p99 = scmp.ne.s32.totalorder %s88, %s91
    %p100 = scmp.eq.s32.totalorder %s15, 3
    %p101 = por %p99, %p100
    %p102 = scmp.ne.s32.totalorder %s91, %s92
    %p103 = scmp.eq.s32.totalorder %s15, 0
    %p104 = por %p102, %p103
    %p105 = scmp.ne.s32.totalorder %s91, %s92
    %p106 = scmp.eq.s32.totalorder %s16, 3
    %p107 = por %p105, %p106
    %p109 = scmp.ne.s32.totalorder %s92, %s108
    %p110 = scmp.eq.s32.totalorder %s16, 0
    %p111 = por %p109, %p110
    %s112 = ssub.s32 %s17, %s29
    %s113 = ssub.s32 %s18, %s25
    %s114 = sor.u32 %s112, %s113
    %p115 = scmp.eq.s32.totalorder %s114, 0
    %s117 = sadd.s32 %s116, 1
    %s118 = scalar_select %p115, %s116, %s117
    %p121 = pneg %p115
    %p122 = scmp.eq.s32.totalorder %s10, 3
    %p123 = por %p121, %p122
    %p124 = scmp.ne.s32.totalorder %s116, %s119
    %p125 = scmp.eq.s32.totalorder %s10, 0
    %p126 = por %p124, %p125
    %p127 = scmp.ne.s32.totalorder %s116, %s119
    %p128 = scmp.eq.s32.totalorder %s15, 3
    %p129 = por %p127, %p128
    %p130 = scmp.ne.s32.totalorder %s119, %s120
    %p131 = scmp.eq.s32.totalorder %s15, 0
    %p132 = por %p130, %p131
    %p133 = scmp.ne.s32.totalorder %s119, %s120
    %p134 = scmp.eq.s32.totalorder %s16, 3
    %p135 = por %p133, %p134
    %p137 = scmp.ne.s32.totalorder %s120, %s136
    %p138 = scmp.eq.s32.totalorder %s16, 0
    %p139 = por %p137, %p138
    %p140 = scmp.le.s32.totalorder 1, %s10
    %p141 = scmp.lt.s32.totalorder %s10, 5
    %p142 = pnand %p140, %p141
    %p143 = pneg %p142
    // Predicated region
    $region9: #{generator_forward.11} parent=5 // pred_check
      _
    $region10: #{generator_forward.11} parent=5 // pred_check_branch
      %145 = sbr.rel (%p142) target = $region12
    $region11: #{generator_forward.11} parent=5 // pred_region
      %s146 = ssub.s32 %s10, 1
    $region12: #{generator_forward.11} parent=5 // pred_fallthru
      _
    %p147 = scmp.lt.s32.totalorder %s10, 4
    // Predicated region
    $region13: #{generator_forward.11} parent=5 // pred_check
      %p148 = pneg %p147
    $region14: #{generator_forward.11} parent=5 // pred_check_branch
      %150 = sbr.rel (%p148) target = $region16
    $region15: #{generator_forward.11} parent=5 // pred_region
      // Predicated region
      $region17: #{generator_forward.11} parent=15 // pred_check
        %p151 = pneg %p44
      $region18: #{generator_forward.11} parent=15 // pred_check_branch
        %153 = sbr.rel (%p151) target = $region20
      $region19: #{generator_forward.11} parent=15 // pred_region
        %s154 = smul.u32 16, %s18
        %p155 = scmp.lt.s32.totalorder %s17, 3
        %s156 = scalar_select %p155, %s17, 3
        %p157 = scmp.lt.s32.totalorder %s154, 15
        %s158 = scalar_select %p157, %s154, 15
        %s159 = smul.addr %s156, 16
        %s160 = sadd.s32 %s158, %s159
        %s161 = smul.addr %s160, 4
        %s162 = scalar_lea.vmem %s0, %s161
        %s163 = smul.u32 16, %s18
      $region20: #{generator_forward.11} parent=15 // pred_fallthru
        _
      // Predicated region
      $region21: #{generator_forward.11} parent=15 // pred_check
        %p164 = pneg %p70
      $region22: #{generator_forward.11} parent=15 // pred_check_branch
        %166 = sbr.rel (%p164) target = $region24
      $region23: #{generator_forward.11} parent=15 // pred_region
        %p167 = scmp.lt.s32.totalorder %s17, 3
        %s168 = scalar_select %p167, %s17, 3
        %s169 = smul.addr %s168, 8
        %s170 = smul.addr %s169, 4
        %s171 = scalar_lea.vmem %s1, %s170
      $region24: #{generator_forward.11} parent=15 // pred_fallthru
        _
    $region16: #{generator_forward.11} parent=5 // pred_fallthru
      _
    %p172 = scmp.le.s32.totalorder 1, %s10
    %p173 = scmp.lt.s32.totalorder %s10, 5
    %p174 = pnand %p172, %p173
    %p175 = pneg %p174
    // Predicated region
    $region25: #{generator_forward.11} parent=5 // pred_check
      _
    $region26: #{generator_forward.11} parent=5 // pred_check_branch
      %177 = sbr.rel (%p174) target = $region28
    $region27: #{generator_forward.11} parent=5 // pred_region
      %s178 = ssub.s32 %s10, 1
      %s179 = smul.u32 16, %s20
      %p180 = scmp.lt.s32.totalorder %s19, 3
      %s181 = scalar_select %p180, %s19, 3
      %p182 = scmp.lt.s32.totalorder %s179, 15
      %s183 = scalar_select %p182, %s179, 15
      %s184 = smul.addr %s181, 16
      %s185 = sadd.s32 %s183, %s184
      %s186 = smul.addr %s185, 4
      %s187 = scalar_lea.vmem %s0, %s186
      %p188 = pneg %p50
      %p189 = pneg %p47
      %p190 = scmp.lt.s32.totalorder %s19, 3
      %s191 = scalar_select %p190, %s19, 3
      %s192 = smul.addr %s191, 8
      %s193 = smul.addr %s192, 4
      %s194 = scalar_lea.vmem %s1, %s193
      %p195 = pneg %p76
      %p196 = pneg %p73
      %p197 = pneg %p104
      %p198 = pneg %p101
      %s199 = smul.u32 16, %s20
      %p200 = scmp.lt.s32.totalorder %s19, 3
      %s201 = scalar_select %p200, %s19, 3
      %p202 = scmp.lt.s32.totalorder %s199, 15
      %s203 = scalar_select %p202, %s199, 15
      %s204 = smul.addr %s201, 16
      %s205 = sadd.s32 %s203, %s204
      %s206 = smul.addr %s205, 8
      %s207 = scalar_lea.vmem %s2, %s206
      %p208 = pneg %p132
      %p209 = pneg %p129
      %p210 = scmp.lt.s32.totalorder %s19, 3
      %s211 = scalar_select %p210, %s19, 3
      %p212 = scmp.lt.s32.totalorder %s20, 0
      %s213 = scalar_select %p212, %s20, 0
      %s214 = sadd.s32 %s213, %s211
      %s215 = smul.addr %s214, 2
      %s216 = scalar_lea.vmem %s3, %s215
      %s217 = smul.u32 16, %s20
      %p218 = scmp.lt.s32.totalorder %s19, 3
      %s219 = scalar_select %p218, %s19, 3
      %p220 = scmp.lt.s32.totalorder %s217, 15
      %s221 = scalar_select %p220, %s217, 15
      %s222 = smul.addr %s219, 16
      %s223 = sadd.s32 %s221, %s222
      %s224 = smul.addr %s223, 4
      %s225 = scalar_lea.vmem %s0, %s224
      %s226 = smul.u32 16, %s20
      %p227 = scmp.lt.s32.totalorder %s19, 3
      %s228 = scalar_select %p227, %s19, 3
      %s229 = smul.addr %s228, 8
      %s230 = smul.addr %s229, 4
      %s231 = scalar_lea.vmem %s1, %s230
      %s232 = smul.u32 16, %s20
      %p233 = scmp.lt.s32.totalorder %s19, 3
      %s234 = scalar_select %p233, %s19, 3
      %p235 = scmp.lt.s32.totalorder %s232, 15
      %s236 = scalar_select %p235, %s232, 15
      %s237 = smul.addr %s234, 16
      %s238 = sadd.s32 %s236, %s237
      %s239 = smul.addr %s238, 8
      %s240 = scalar_lea.vmem %s2, %s239
      %s241 = smul.u32 16, %s20
      %p242 = scmp.lt.s32.totalorder %s19, 3
      %s243 = scalar_select %p242, %s19, 3
      %p244 = scmp.lt.s32.totalorder %s20, 0
      %s245 = scalar_select %p244, %s20, 0
      %s246 = sadd.s32 %s245, %s243
      %s247 = smul.addr %s246, 2
      %s248 = scalar_lea.vmem %s3, %s247
      %v250 = vld [vmem:[%s225] sm:$0xf]
      %v251 = vld [vmem:[%s225 + $0x4] sm:$0xf]
      %v252 = vld [vmem:[%s225 + $0x8] sm:$0xf]
      %v253 = vld [vmem:[%s225 + $0xc] sm:$0xf]
      %v254 = vld [vmem:[%s225 + $0x10] sm:$0xf]
      %v255 = vld [vmem:[%s225 + $0x14] sm:$0xf]
      %v256 = vld [vmem:[%s225 + $0x18] sm:$0xf]
      %v257 = vld [vmem:[%s225 + $0x1c] sm:$0xf]
      %v258 = vld [vmem:[%s225 + $0x20] sm:$0xf]
      %v259 = vld [vmem:[%s225 + $0x24] sm:$0xf]
      %v260 = vld [vmem:[%s225 + $0x28] sm:$0xf]
      %v261 = vld [vmem:[%s225 + $0x2c] sm:$0xf]
      %v262 = vld [vmem:[%s225 + $0x30] sm:$0xf]
      %v263 = vld [vmem:[%s225 + $0x34] sm:$0xf]
      %v264 = vld [vmem:[%s225 + $0x38] sm:$0xf]
      %v265 = vld [vmem:[%s225 + $0x3c] sm:$0xf]
      %v266 = vld [vmem:[%s231] sm:$0xf]
      %v267 = vld [vmem:[%s231 + $0x4] sm:$0xf]
      %v268 = vld [vmem:[%s231 + $0x8] sm:$0xf]
      %v269 = vld [vmem:[%s231 + $0xc] sm:$0xf]
      %v270 = vld [vmem:[%s231 + $0x10] sm:$0xf]
      %v271 = vld [vmem:[%s231 + $0x14] sm:$0xf]
      %v272 = vld [vmem:[%s231 + $0x18] sm:$0xf]
      %v273 = vld [vmem:[%s231 + $0x1c] sm:$0xf]
      %v290 = vunpack.c.l.b16 %v250
      %v291 = vunpack.c.l.b16 %v251
      %v292 = vunpack.c.l.b16 %v252
      %v293 = vunpack.c.l.b16 %v253
      %v294 = vunpack.c.l.b16 %v254
      %v295 = vunpack.c.l.b16 %v255
      %v296 = vunpack.c.l.b16 %v256
      %v297 = vunpack.c.l.b16 %v257
      %v298 = vunpack.c.l.b16 %v258
      %v299 = vunpack.c.l.b16 %v259
      %v300 = vunpack.c.l.b16 %v260
      %v301 = vunpack.c.l.b16 %v261
      %v302 = vunpack.c.l.b16 %v262
      %v303 = vunpack.c.l.b16 %v263
      %v304 = vunpack.c.l.b16 %v264
      %v305 = vunpack.c.l.b16 %v265
      %v306 = vpack.c.b16 %v291, %v290
      %v307 = vpack.c.b16 %v293, %v292
      %v308 = vpack.c.b16 %v295, %v294
      %v309 = vpack.c.b16 %v297, %v296
      %v310 = vpack.c.b16 %v299, %v298
      %v311 = vpack.c.b16 %v301, %v300
      %v312 = vpack.c.b16 %v303, %v302
      %v313 = vpack.c.b16 %v305, %v304
      %v322 = vunpack.c.l.b16 %v266
      %v323 = vunpack.c.l.b16 %v267
      %v324 = vunpack.c.l.b16 %v268
      %v325 = vunpack.c.l.b16 %v269
      %v326 = vunpack.c.l.b16 %v270
      %v327 = vunpack.c.l.b16 %v271
      %v328 = vunpack.c.l.b16 %v272
      %v329 = vunpack.c.l.b16 %v273
      %v330 = vpack.c.b16 %v323, %v322
      %v331 = vpack.c.b16 %v325, %v324
      %v332 = vpack.c.b16 %v327, %v326
      %v333 = vpack.c.b16 %v329, %v328
      %vm338 = vcmask 523264
      %v340 = vsel %vm338, %v306, 0
      %v343 = vsel %vm338, %v307, 0
      %v346 = vsel %vm338, %v308, 0
      %v349 = vsel %vm338, %v309, 0
      %v352 = vsel %vm338, %v310, 0
      %v355 = vsel %vm338, %v311, 0
      %v358 = vsel %vm338, %v312, 0
      %v361 = vsel %vm338, %v313, 0
      %363 = vmatprep.subr.bf16.mxu0 0
      %364 = vmatpush1.bf16.msra.mxu0 0
      %365 = vmatprep.subr.bf16.mxu0 0
      %366 = vmatpush1.bf16.msra.mxu0 0
      %367 = vmatprep.subr.bf16.mxu0 0
      %368 = vmatpush1.bf16.msra.mxu0 0
      %369 = vmatprep.subr.bf16.mxu0 0
      %370 = vmatpush1.bf16.msra.mxu0 0
      %371 = vmatprep.subr.bf16.mxu0 0
      %372 = vmatpush1.bf16.msra.mxu0 %v333
      %373 = vmatprep.subr.bf16.mxu0 0
      %374 = vmatpush1.bf16.msra.mxu0 %v332
      %375 = vmatprep.subr.bf16.mxu0 0
      %376 = vmatpush1.bf16.msra.mxu0 %v331
      %377 = vmatprep.subr.bf16.mxu0 0
      %378 = vmatpush1.bf16.msra.mxu0 %v330
      %379 = vmatprep.subr.bf16.mxu0 0
      %380 = vmatpush2.bf16.msra.mxu0 0
      %381 = vmatprep.subr.bf16.mxu0 0
      %382 = vmatpush2.bf16.msra.mxu0 0
      %383 = vmatprep.subr.bf16.mxu0 0
      %384 = vmatpush2.bf16.msra.mxu0 0
      %385 = vmatprep.subr.bf16.mxu0 0
      %386 = vmatpush2.bf16.msra.mxu0 0
      %387 = vmatprep.subr.bf16.mxu0 0
      %388 = vmatpush2.bf16.msra.mxu0 0
      %389 = vmatprep.subr.bf16.mxu0 0
      %390 = vmatpush2.bf16.msra.mxu0 0
      %391 = vmatprep.subr.bf16.mxu0 0
      %392 = vmatpush2.bf16.msra.mxu0 0
      %393 = vmatprep.subr.bf16.mxu0 0
      %394 = vmatpush2.bf16.msra.mxu0 0
      %395 = vmatprep.mubr.bf16.mxu0 0
      %396 = vmatmul.mubr.bf16.gmra.mxu0 %v340
      %v397 = vpop.f32.mrf.mxu0
      %v398 = vadd.f32 0.0, %v397
      %v399 = vpop.f32.mrf.mxu0
      %v400 = vpop.f32.mrf.mxu0
      %v401 = vadd.f32 0.0, %v400
      %v402 = vpop.f32.mrf.mxu0
      %403 = vmatprep.mubr.bf16.mxu0 0
      %404 = vmatmul.mubr.bf16.gmra.mxu0 %v343
      %v405 = vpop.f32.mrf.mxu0
      %v406 = vadd.f32 0.0, %v405
      %v407 = vpop.f32.mrf.mxu0
      %v408 = vpop.f32.mrf.mxu0
      %v409 = vadd.f32 0.0, %v408
      %v410 = vpop.f32.mrf.mxu0
      %411 = vmatprep.mubr.bf16.mxu0 0
      %412 = vmatmul.mubr.bf16.gmra.mxu0 %v346
      %v413 = vpop.f32.mrf.mxu0
      %v414 = vadd.f32 0.0, %v413
      %v415 = vpop.f32.mrf.mxu0
      %v416 = vpop.f32.mrf.mxu0
      %v417 = vadd.f32 0.0, %v416
      %v418 = vpop.f32.mrf.mxu0
      %419 = vmatprep.mubr.bf16.mxu0 0
      %420 = vmatmul.mubr.bf16.gmra.mxu0 %v349
      %v421 = vpop.f32.mrf.mxu0
      %v422 = vadd.f32 0.0, %v421
      %v423 = vpop.f32.mrf.mxu0
      %v424 = vpop.f32.mrf.mxu0
      %v425 = vadd.f32 0.0, %v424
      %v426 = vpop.f32.mrf.mxu0
      %427 = vmatprep.mubr.bf16.mxu0 0
      %428 = vmatmul.mubr.bf16.gmra.mxu0 %v352
      %v429 = vpop.f32.mrf.mxu0
      %v430 = vadd.f32 0.0, %v429
      %v431 = vpop.f32.mrf.mxu0
      %v432 = vpop.f32.mrf.mxu0
      %v433 = vadd.f32 0.0, %v432
      %v434 = vpop.f32.mrf.mxu0
      %435 = vmatprep.mubr.bf16.mxu0 0
      %436 = vmatmul.mubr.bf16.gmra.mxu0 %v355
      %v437 = vpop.f32.mrf.mxu0
      %v438 = vadd.f32 0.0, %v437
      %v439 = vpop.f32.mrf.mxu0
      %v440 = vpop.f32.mrf.mxu0
      %v441 = vadd.f32 0.0, %v440
      %v442 = vpop.f32.mrf.mxu0
      %443 = vmatprep.mubr.bf16.mxu0 0
      %444 = vmatmul.mubr.bf16.gmra.mxu0 %v358
      %v445 = vpop.f32.mrf.mxu0
      %v446 = vadd.f32 0.0, %v445
      %v447 = vpop.f32.mrf.mxu0
      %v448 = vpop.f32.mrf.mxu0
      %v449 = vadd.f32 0.0, %v448
      %v450 = vpop.f32.mrf.mxu0
      %451 = vmatprep.mubr.bf16.mxu0 0
      %452 = vmatmul.mubr.bf16.gmra.mxu0 %v361
      %v453 = vpop.f32.mrf.mxu0
      %v454 = vadd.f32 0.0, %v453
      %v455 = vpop.f32.mrf.mxu0
      %v456 = vpop.f32.mrf.mxu0
      %v457 = vadd.f32 0.0, %v456
      %v458 = vpop.f32.mrf.mxu0
      %459 = vdwg.mxu0
      %460 = vst [vmem:[%s240] sm:$0xff] %v398
      %461 = vst [vmem:[%s240 + $0x8] sm:$0xff] %v401
      %462 = vst [vmem:[%s240 + $0x10] sm:$0xff] %v406
      %463 = vst [vmem:[%s240 + $0x18] sm:$0xff] %v409
      %464 = vst [vmem:[%s240 + $0x20] sm:$0xff] %v414
      %465 = vst [vmem:[%s240 + $0x28] sm:$0xff] %v417
      %466 = vst [vmem:[%s240 + $0x30] sm:$0xff] %v422
      %467 = vst [vmem:[%s240 + $0x38] sm:$0xff] %v425
      %468 = vst [vmem:[%s240 + $0x40] sm:$0xff] %v430
      %469 = vst [vmem:[%s240 + $0x48] sm:$0xff] %v433
      %470 = vst [vmem:[%s240 + $0x50] sm:$0xff] %v438
      %471 = vst [vmem:[%s240 + $0x58] sm:$0xff] %v441
      %472 = vst [vmem:[%s240 + $0x60] sm:$0xff] %v446
      %473 = vst [vmem:[%s240 + $0x68] sm:$0xff] %v449
      %474 = vst [vmem:[%s240 + $0x70] sm:$0xff] %v454
      %475 = vst [vmem:[%s240 + $0x78] sm:$0xff] %v457
      %v476 = vadd.f32 %v398, %v401
      %v477 = vadd.f32 %v476, %v406
      %v478 = vadd.f32 %v477, %v409
      %v479 = vadd.f32 %v478, %v414
      %v480 = vadd.f32 %v479, %v417
      %v481 = vadd.f32 %v480, %v422
      %v482 = vadd.f32 %v481, %v425
      %v483 = vadd.f32 %v482, %v430
      %v484 = vadd.f32 %v483, %v433
      %v485 = vadd.f32 %v484, %v438
      %v486 = vadd.f32 %v485, %v441
      %v487 = vadd.f32 %v486, %v446
      %v488 = vadd.f32 %v487, %v449
      %v489 = vadd.f32 %v488, %v454
      %v490 = vadd.f32 %v489, %v457
      %v491 = vrot.slane %v490, 4
      %v492 = vadd.f32 %v490, %v491
      %v493 = vrot.slane %v492, 2
      %v494 = vadd.f32 %v492, %v493
      %v495 = vrot.slane %v494, 1
      %v496 = vadd.f32 %v494, %v495
      %v497 = vmul.f32 %v398, %v398
      %v498 = vmul.f32 %v401, %v401
      %v499 = vmul.f32 %v406, %v406
      %v500 = vmul.f32 %v409, %v409
      %v501 = vmul.f32 %v414, %v414
      %v502 = vmul.f32 %v417, %v417
      %v503 = vmul.f32 %v422, %v422
      %v504 = vmul.f32 %v425, %v425
      %v505 = vmul.f32 %v430, %v430
      %v506 = vmul.f32 %v433, %v433
      %v507 = vmul.f32 %v438, %v438
      %v508 = vmul.f32 %v441, %v441
      %v509 = vmul.f32 %v446, %v446
      %v510 = vmul.f32 %v449, %v449
      %v511 = vmul.f32 %v454, %v454
      %v512 = vmul.f32 %v457, %v457
      %v513 = vadd.f32 %v497, %v498
      %v514 = vadd.f32 %v513, %v499
      %v515 = vadd.f32 %v514, %v500
      %v516 = vadd.f32 %v515, %v501
      %v517 = vadd.f32 %v516, %v502
      %v518 = vadd.f32 %v517, %v503
      %v519 = vadd.f32 %v518, %v504
      %v520 = vadd.f32 %v519, %v505
      %v521 = vadd.f32 %v520, %v506
      %v522 = vadd.f32 %v521, %v507
      %v523 = vadd.f32 %v522, %v508
      %v524 = vadd.f32 %v523, %v509
      %v525 = vadd.f32 %v524, %v510
      %v526 = vadd.f32 %v525, %v511
      %v527 = vadd.f32 %v526, %v512
      %v528 = vrot.slane %v527, 4
      %v529 = vadd.f32 %v527, %v528
      %v530 = vrot.slane %v529, 2
      %v531 = vadd.f32 %v529, %v530
      %v532 = vrot.slane %v531, 1
      %v533 = vadd.f32 %v531, %v532
      %vm534 = vcmask 1040384
      %v535 = vsel %vm534, %v496, %v533
      %536 = vst [vmem:[%s248] sm:$0x3] %v535
      %s537 = smul.u32 16, %s20
      %p538 = scmp.lt.s32.totalorder %s19, 3
      %s539 = scalar_select %p538, %s19, 3
      %p540 = scmp.lt.s32.totalorder %s537, 15
      %s541 = scalar_select %p540, %s537, 15
      %s542 = smul.addr %s539, 16
      %s543 = sadd.s32 %s541, %s542
      %s544 = smul.addr %s543, 8
      %s545 = scalar_lea.vmem %s2, %s544
      %p546 = scmp.lt.s32.totalorder %s19, 3
      %s547 = scalar_select %p546, %s19, 3
      %p548 = scmp.lt.s32.totalorder %s20, 0
      %s549 = scalar_select %p548, %s20, 0
      %s550 = sadd.s32 %s549, %s547
      %s551 = smul.addr %s550, 2
      %s552 = scalar_lea.vmem %s3, %s551
      // Predicated region
      $region29: #{generator_forward.11} parent=27 // pred_check
        %p553 = pneg %p101
      $region30: #{generator_forward.11} parent=27 // pred_check_branch
        %555 = sbr.rel (%p553) target = $region32
      $region31: #{generator_forward.11} parent=27 // pred_region
        %s556 = smul.u32 16, %s20
      $region32: #{generator_forward.11} parent=27 // pred_fallthru
        _
      // Predicated region
      $region33: #{generator_forward.11} parent=27 // pred_check
        %p557 = pneg %p129
      $region34: #{generator_forward.11} parent=27 // pred_check_branch
        %559 = sbr.rel (%p557) target = $region36
      $region35: #{generator_forward.11} parent=27 // pred_region
        _
      $region36: #{generator_forward.11} parent=27 // pred_fallthru
        _
    $region28: #{generator_forward.11} parent=5 // pred_fallthru
      _
    %p560 = scmp.le.s32.totalorder 2, %s10
    // Predicated region
    $region37: #{generator_forward.11} parent=5 // pred_check
      %p561 = pneg %p560
    $region38: #{generator_forward.11} parent=5 // pred_check_branch
      %563 = sbr.rel (%p561) target = $region40
    $region39: #{generator_forward.11} parent=5 // pred_region
      %s564 = ssub.s32 %s10, 2
      // Predicated region
      $region41: #{generator_forward.11} parent=39 // pred_check
        %p565 = pneg %p107
      $region42: #{generator_forward.11} parent=39 // pred_check_branch
        %567 = sbr.rel (%p565) target = $region44
      $region43: #{generator_forward.11} parent=39 // pred_region
        %s568 = smul.u32 16, %s22
        %p569 = scmp.lt.s32.totalorder %s21, 3
        %s570 = scalar_select %p569, %s21, 3
        %p571 = scmp.lt.s32.totalorder %s568, 15
        %s572 = scalar_select %p571, %s568, 15
        %s573 = smul.addr %s570, 16
        %s574 = sadd.s32 %s572, %s573
        %s575 = smul.addr %s574, 8
        %s576 = scalar_lea.vmem %s2, %s575
      $region44: #{generator_forward.11} parent=39 // pred_fallthru
        _
      // Predicated region
      $region45: #{generator_forward.11} parent=39 // pred_check
        %p577 = pneg %p135
      $region46: #{generator_forward.11} parent=39 // pred_check_branch
        %579 = sbr.rel (%p577) target = $region48
      $region47: #{generator_forward.11} parent=39 // pred_region
        %p580 = scmp.lt.s32.totalorder %s21, 3
        %s581 = scalar_select %p580, %s21, 3
        %p582 = scmp.lt.s32.totalorder %s22, 0
        %s583 = scalar_select %p582, %s22, 0
        %s584 = sadd.s32 %s583, %s581
        %s585 = smul.addr %s584, 2
        %s586 = scalar_lea.vmem %s3, %s585
      $region48: #{generator_forward.11} parent=39 // pred_fallthru
        _
    $region40: #{generator_forward.11} parent=5 // pred_fallthru
      _
  $region6: #{generator_forward.11} parent=0 // loop_footer
    %s14 = sadd.s32 1, %s10
  $region7: #{generator_forward.11} parent=0 // loop_footer_branch
    %9 = sbr.rel target = $region3
  $region8: #{generator_forward.11} parent=0 // loop_exit
    _

// kernel: generator_forward.12
$region0: #{generator_forward.12}
  #allocation0 [shape = 'u32[]', space=smem, size = 0x4, offset = 0x4, fixed_abs, tag = 'smem constant byte address 0x4 - core index']
  #allocation1 [shape = 'u32[144,128]{1,0:T(1,128)}', space=vmem, size = 0x12000, scoped, tag = 'internal scratch']
  %s0 = inlined_call_operand.vmem [shape: f32[512,128], index: 0, kind: input, shape index: {}]
  %s1 = inlined_call_operand.vmem [shape: f32[1,128], index: 1, kind: input, shape index: {}]
  %s2 = inlined_call_operand.vmem [shape: f32[1,128], index: 2, kind: input, shape index: {}]
  %s3 = inlined_call_operand.vmem [shape: bf16[512,128], index: 3, kind: output, shape index: {}]
  %s4 = sld [smem:[#allocation0]]
  $region22: #{generator_forward.12} parent=0
    _
  %s6 = ssub.s32 1, %s4
  %s7 = scalar_select 0, %s6, %s4
  // Predicated region
  $region2: #{generator_forward.12} parent=0 // pred_check
    _
  $region3: #{generator_forward.12} parent=0 // pred_check_branch
    %9 = sbr.rel (0) target = $region5
  $region4: #{generator_forward.12} parent=0 // pred_region
    _
  $region5: #{generator_forward.12} parent=0 // pred_fallthru
    _
  // Predicated region
  $region6: #{generator_forward.12} parent=0 // pred_check
    _
  $region7: #{generator_forward.12} parent=0 // pred_check_branch
    %11 = sbr.rel (0) target = $region9
  $region8: #{generator_forward.12} parent=0 // pred_region
    _
  $region9: #{generator_forward.12} parent=0 // pred_fallthru
    _
  // Predicated region
  $region10: #{generator_forward.12} parent=0 // pred_check
    _
  $region11: #{generator_forward.12} parent=0 // pred_check_branch
    %13 = sbr.rel (0) target = $region13
  $region12: #{generator_forward.12} parent=0 // pred_region
    _
  $region13: #{generator_forward.12} parent=0 // pred_fallthru
    _
  %v14 = vld [vmem:[%s0] sm:$0xff]
  %v15 = vld [vmem:[%s0 + $0x8] sm:$0xff]
  %v16 = vld [vmem:[%s0 + $0x10] sm:$0xff]
  %v17 = vld [vmem:[%s0 + $0x18] sm:$0xff]
  %v18 = vld [vmem:[%s0 + $0x20] sm:$0xff]
  %v19 = vld [vmem:[%s0 + $0x28] sm:$0xff]
  %v20 = vld [vmem:[%s0 + $0x30] sm:$0xff]
  %v21 = vld [vmem:[%s0 + $0x38] sm:$0xff]
  %v22 = vld [vmem:[%s0 + $0x40] sm:$0xff]
  %v23 = vld [vmem:[%s0 + $0x48] sm:$0xff]
  %v24 = vld [vmem:[%s0 + $0x50] sm:$0xff]
  %v25 = vld [vmem:[%s0 + $0x58] sm:$0xff]
  %v26 = vld [vmem:[%s0 + $0x60] sm:$0xff]
  %v27 = vld [vmem:[%s0 + $0x68] sm:$0xff]
  %v28 = vld [vmem:[%s0 + $0x70] sm:$0xff]
  %v29 = vld [vmem:[%s0 + $0x78] sm:$0xff]
  %v30 = vld [vmem:[%s0 + $0x80] sm:$0xff]
  %v31 = vld [vmem:[%s0 + $0x88] sm:$0xff]
  %v32 = vld [vmem:[%s0 + $0x90] sm:$0xff]
  %v33 = vld [vmem:[%s0 + $0x98] sm:$0xff]
  %v34 = vld [vmem:[%s0 + $0xa0] sm:$0xff]
  %v35 = vld [vmem:[%s0 + $0xa8] sm:$0xff]
  %v36 = vld [vmem:[%s0 + $0xb0] sm:$0xff]
  %v37 = vld [vmem:[%s0 + $0xb8] sm:$0xff]
  %v38 = vld [vmem:[%s0 + $0xc0] sm:$0xff]
  %v39 = vld [vmem:[%s0 + $0xc8] sm:$0xff]
  %v40 = vld [vmem:[%s0 + $0xd0] sm:$0xff]
  %v41 = vld [vmem:[%s0 + $0xd8] sm:$0xff]
  %v42 = vld [vmem:[%s0 + $0xe0] sm:$0xff]
  %v43 = vld [vmem:[%s0 + $0xe8] sm:$0xff]
  %v44 = vld [vmem:[%s0 + $0xf0] sm:$0xff]
  %v45 = vld [vmem:[%s0 + $0xf8] sm:$0xff]
  %v46 = vld [vmem:[%s0 + $0x100] sm:$0xff]
  %v47 = vld [vmem:[%s0 + $0x108] sm:$0xff]
  %v48 = vld [vmem:[%s0 + $0x110] sm:$0xff]
  %v49 = vld [vmem:[%s0 + $0x118] sm:$0xff]
  %v50 = vld [vmem:[%s0 + $0x120] sm:$0xff]
  %v51 = vld [vmem:[%s0 + $0x128] sm:$0xff]
  %v52 = vld [vmem:[%s0 + $0x130] sm:$0xff]
  %v53 = vld [vmem:[%s0 + $0x138] sm:$0xff]
  %v54 = vld [vmem:[%s0 + $0x140] sm:$0xff]
  %v55 = vld [vmem:[%s0 + $0x148] sm:$0xff]
  %v56 = vld [vmem:[%s0 + $0x150] sm:$0xff]
  %v57 = vld [vmem:[%s0 + $0x158] sm:$0xff]
  %v58 = vld [vmem:[%s0 + $0x160] sm:$0xff]
  %v59 = vld [vmem:[%s0 + $0x168] sm:$0xff]
  %v60 = vld [vmem:[%s0 + $0x170] sm:$0xff]
  %v61 = vld [vmem:[%s0 + $0x178] sm:$0xff]
  %v62 = vld [vmem:[%s0 + $0x180] sm:$0xff]
  %v63 = vld [vmem:[%s0 + $0x188] sm:$0xff]
  %v64 = vld [vmem:[%s0 + $0x190] sm:$0xff]
  %v65 = vld [vmem:[%s0 + $0x198] sm:$0xff]
  %v66 = vld [vmem:[%s0 + $0x1a0] sm:$0xff]
  %v67 = vld [vmem:[%s0 + $0x1a8] sm:$0xff]
  %v68 = vld [vmem:[%s0 + $0x1b0] sm:$0xff]
  %v69 = vld [vmem:[%s0 + $0x1b8] sm:$0xff]
  %v70 = vld [vmem:[%s0 + $0x1c0] sm:$0xff]
  %v71 = vld [vmem:[%s0 + $0x1c8] sm:$0xff]
  %v72 = vld [vmem:[%s0 + $0x1d0] sm:$0xff]
  %v73 = vld [vmem:[%s0 + $0x1d8] sm:$0xff]
  %v74 = vld [vmem:[%s0 + $0x1e0] sm:$0xff]
  %v75 = vld [vmem:[%s0 + $0x1e8] sm:$0xff]
  %v76 = vld [vmem:[%s0 + $0x1f0] sm:$0xff]
  %v77 = vld [vmem:[%s0 + $0x1f8] sm:$0xff]
  %v78 = vld [vmem:[%s1] sm:$0x1]
  %v80 = vlaneseq
  %v81 = vshrl.u32 %v80, 7
  %v82 = vsub.s32 0, %v81
  %v83 = vrot.slane %v78, %v82
  %v85 = vmul.f32 %v14, %v83
  %v86 = vmul.f32 %v15, %v83
  %v87 = vmul.f32 %v16, %v83
  %v88 = vmul.f32 %v17, %v83
  %v89 = vmul.f32 %v18, %v83
  %v90 = vmul.f32 %v19, %v83
  %v91 = vmul.f32 %v20, %v83
  %v92 = vmul.f32 %v21, %v83
  %v93 = vmul.f32 %v22, %v83
  %v94 = vmul.f32 %v23, %v83
  %v95 = vmul.f32 %v24, %v83
  %v96 = vmul.f32 %v25, %v83
  %v97 = vmul.f32 %v26, %v83
  %v98 = vmul.f32 %v27, %v83
  %v99 = vmul.f32 %v28, %v83
  %v100 = vmul.f32 %v29, %v83
  %v101 = vmul.f32 %v30, %v83
  %v102 = vmul.f32 %v31, %v83
  %v103 = vmul.f32 %v32, %v83
  %v104 = vmul.f32 %v33, %v83
  %v105 = vmul.f32 %v34, %v83
  %v106 = vmul.f32 %v35, %v83
  %v107 = vmul.f32 %v36, %v83
  %v108 = vmul.f32 %v37, %v83
  %v109 = vmul.f32 %v38, %v83
  %v110 = vmul.f32 %v39, %v83
  %v111 = vmul.f32 %v40, %v83
  %v112 = vmul.f32 %v41, %v83
  %v113 = vmul.f32 %v42, %v83
  %v114 = vmul.f32 %v43, %v83
  %v115 = vmul.f32 %v44, %v83
  %v116 = vmul.f32 %v45, %v83
  %v117 = vmul.f32 %v46, %v83
  %v118 = vmul.f32 %v47, %v83
  %v119 = vmul.f32 %v48, %v83
  %v120 = vmul.f32 %v49, %v83
  %v121 = vmul.f32 %v50, %v83
  %v122 = vmul.f32 %v51, %v83
  %v123 = vmul.f32 %v52, %v83
  %v124 = vmul.f32 %v53, %v83
  %v125 = vmul.f32 %v54, %v83
  %v126 = vmul.f32 %v55, %v83
  %v127 = vmul.f32 %v56, %v83
  %v128 = vmul.f32 %v57, %v83
  %v129 = vmul.f32 %v58, %v83
  %v130 = vmul.f32 %v59, %v83
  %v131 = vmul.f32 %v60, %v83
  %v132 = vmul.f32 %v61, %v83
  %v133 = vmul.f32 %v62, %v83
  %v134 = vmul.f32 %v63, %v83
  %v135 = vmul.f32 %v64, %v83
  %v136 = vmul.f32 %v65, %v83
  %v137 = vmul.f32 %v66, %v83
  %v138 = vmul.f32 %v67, %v83
  %v139 = vmul.f32 %v68, %v83
  %v140 = vmul.f32 %v69, %v83
  %v141 = vmul.f32 %v70, %v83
  %v142 = vmul.f32 %v71, %v83
  %v143 = vmul.f32 %v72, %v83
  %v144 = vmul.f32 %v73, %v83
  %v145 = vmul.f32 %v74, %v83
  %v146 = vmul.f32 %v75, %v83
  %v147 = vmul.f32 %v76, %v83
  %v148 = vmul.f32 %v77, %v83
  %v149 = vld [vmem:[%s2] sm:$0x1]
  %v151 = vlaneseq
  %v152 = vshrl.u32 %v151, 7
  %v153 = vsub.s32 0, %v152
  %v154 = vrot.slane %v149, %v153
  %v156 = vadd.f32 %v85, %v154
  %v157 = vadd.f32 %v86, %v154
  %v158 = vadd.f32 %v87, %v154
  %v159 = vadd.f32 %v88, %v154
  %v160 = vadd.f32 %v89, %v154
  %v161 = vadd.f32 %v90, %v154
  %v162 = vadd.f32 %v91, %v154
  %v163 = vadd.f32 %v92, %v154
  %v164 = vadd.f32 %v93, %v154
  %v165 = vadd.f32 %v94, %v154
  %v166 = vadd.f32 %v95, %v154
  %v167 = vadd.f32 %v96, %v154
  %v168 = vadd.f32 %v97, %v154
  %v169 = vadd.f32 %v98, %v154
  %v170 = vadd.f32 %v99, %v154
  %v171 = vadd.f32 %v100, %v154
  %v172 = vadd.f32 %v101, %v154
  %v173 = vadd.f32 %v102, %v154
  %v174 = vadd.f32 %v103, %v154
  %v175 = vadd.f32 %v104, %v154
  %v176 = vadd.f32 %v105, %v154
  %v177 = vadd.f32 %v106, %v154
  %v178 = vadd.f32 %v107, %v154
  %v179 = vadd.f32 %v108, %v154
  %v180 = vadd.f32 %v109, %v154
  %v181 = vadd.f32 %v110, %v154
  %v182 = vadd.f32 %v111, %v154
  %v183 = vadd.f32 %v112, %v154
  %v184 = vadd.f32 %v113, %v154
  %v185 = vadd.f32 %v114, %v154
  %v186 = vadd.f32 %v115, %v154
  %v187 = vadd.f32 %v116, %v154
  %v188 = vadd.f32 %v117, %v154
  %v189 = vadd.f32 %v118, %v154
  %v190 = vadd.f32 %v119, %v154
  %v191 = vadd.f32 %v120, %v154
  %v192 = vadd.f32 %v121, %v154
  %v193 = vadd.f32 %v122, %v154
  %v194 = vadd.f32 %v123, %v154
  %v195 = vadd.f32 %v124, %v154
  %v196 = vadd.f32 %v125, %v154
  %v197 = vadd.f32 %v126, %v154
  %v198 = vadd.f32 %v127, %v154
  %v199 = vadd.f32 %v128, %v154
  %v200 = vadd.f32 %v129, %v154
  %v201 = vadd.f32 %v130, %v154
  %v202 = vadd.f32 %v131, %v154
  %v203 = vadd.f32 %v132, %v154
  %v204 = vadd.f32 %v133, %v154
  %v205 = vadd.f32 %v134, %v154
  %v206 = vadd.f32 %v135, %v154
  %v207 = vadd.f32 %v136, %v154
  %v208 = vadd.f32 %v137, %v154
  %v209 = vadd.f32 %v138, %v154
  %v210 = vadd.f32 %v139, %v154
  %v211 = vadd.f32 %v140, %v154
  %v212 = vadd.f32 %v141, %v154
  %v213 = vadd.f32 %v142, %v154
  %v214 = vadd.f32 %v143, %v154
  %v215 = vadd.f32 %v144, %v154
  %v216 = vadd.f32 %v145, %v154
  %v217 = vadd.f32 %v146, %v154
  %v218 = vadd.f32 %v147, %v154
  %v219 = vadd.f32 %v148, %v154
  %v220 = vmax.f32 %v156, 0.0
  %v221 = vmax.f32 %v157, 0.0
  %v222 = vmax.f32 %v158, 0.0
  %v223 = vmax.f32 %v159, 0.0
  %v224 = vmax.f32 %v160, 0.0
  %v225 = vmax.f32 %v161, 0.0
  %v226 = vmax.f32 %v162, 0.0
  %v227 = vmax.f32 %v163, 0.0
  %v228 = vmax.f32 %v164, 0.0
  %v229 = vmax.f32 %v165, 0.0
  %v230 = vmax.f32 %v166, 0.0
  %v231 = vmax.f32 %v167, 0.0
  %v232 = vmax.f32 %v168, 0.0
  %v233 = vmax.f32 %v169, 0.0
  %v234 = vmax.f32 %v170, 0.0
  %v235 = vmax.f32 %v171, 0.0
  %v236 = vmax.f32 %v172, 0.0
  %v237 = vmax.f32 %v173, 0.0
  %v238 = vmax.f32 %v174, 0.0
  %v239 = vmax.f32 %v175, 0.0
  %v240 = vmax.f32 %v176, 0.0
  %v241 = vmax.f32 %v177, 0.0
  %v242 = vmax.f32 %v178, 0.0
  %v243 = vmax.f32 %v179, 0.0
  %v244 = vmax.f32 %v180, 0.0
  %v245 = vmax.f32 %v181, 0.0
  %v246 = vmax.f32 %v182, 0.0
  %v247 = vmax.f32 %v183, 0.0
  %v248 = vmax.f32 %v184, 0.0
  %v249 = vmax.f32 %v185, 0.0
  %v250 = vmax.f32 %v186, 0.0
  %v251 = vmax.f32 %v187, 0.0
  %v252 = vmax.f32 %v188, 0.0
  %v253 = vmax.f32 %v189, 0.0
  %v254 = vmax.f32 %v190, 0.0
  %v255 = vmax.f32 %v191, 0.0
  %v256 = vmax.f32 %v192, 0.0
  %v257 = vmax.f32 %v193, 0.0
  %v258 = vmax.f32 %v194, 0.0
  %v259 = vmax.f32 %v195, 0.0
  %v260 = vmax.f32 %v196, 0.0
  %v261 = vmax.f32 %v197, 0.0
  %v262 = vmax.f32 %v198, 0.0
  %v263 = vmax.f32 %v199, 0.0
  %v264 = vmax.f32 %v200, 0.0
  %v265 = vmax.f32 %v201, 0.0
  %v266 = vmax.f32 %v202, 0.0
  %v267 = vmax.f32 %v203, 0.0
  %v268 = vmax.f32 %v204, 0.0
  %v269 = vmax.f32 %v205, 0.0
  %v270 = vmax.f32 %v206, 0.0
  %v271 = vmax.f32 %v207, 0.0
  %v272 = vmax.f32 %v208, 0.0
  %v273 = vmax.f32 %v209, 0.0
  %v274 = vmax.f32 %v210, 0.0
  %v275 = vmax.f32 %v211, 0.0
  %v276 = vmax.f32 %v212, 0.0
  %v277 = vmax.f32 %v213, 0.0
  %v278 = vmax.f32 %v214, 0.0
  %v279 = vmax.f32 %v215, 0.0
  %v280 = vmax.f32 %v216, 0.0
  %v281 = vmax.f32 %v217, 0.0
  %v282 = vmax.f32 %v218, 0.0
  %v283 = vmax.f32 %v219, 0.0
  %v284 = vpack.c.bf16 %v221, %v220
  %v285 = vpack.c.bf16 %v223, %v222
  %v286 = vpack.c.bf16 %v225, %v224
  %v287 = vpack.c.bf16 %v227, %v226
  %v288 = vpack.c.bf16 %v229, %v228
  %v289 = vpack.c.bf16 %v231, %v230
  %v290 = vpack.c.bf16 %v233, %v232
  %v291 = vpack.c.bf16 %v235, %v234
  %v292 = vpack.c.bf16 %v237, %v236
  %v293 = vpack.c.bf16 %v239, %v238
  %v294 = vpack.c.bf16 %v241, %v240
  %v295 = vpack.c.bf16 %v243, %v242
  %v296 = vpack.c.bf16 %v245, %v244
  %v297 = vpack.c.bf16 %v247, %v246
  %v298 = vpack.c.bf16 %v249, %v248
  %v299 = vpack.c.bf16 %v251, %v250
  %v300 = vpack.c.bf16 %v253, %v252
  %v301 = vpack.c.bf16 %v255, %v254
  %v302 = vpack.c.bf16 %v257, %v256
  %v303 = vpack.c.bf16 %v259, %v258
  %v304 = vpack.c.bf16 %v261, %v260
  %v305 = vpack.c.bf16 %v263, %v262
  %v306 = vpack.c.bf16 %v265, %v264
  %v307 = vpack.c.bf16 %v267, %v266
  %v308 = vpack.c.bf16 %v269, %v268
  %v309 = vpack.c.bf16 %v271, %v270
  %v310 = vpack.c.bf16 %v273, %v272
  %v311 = vpack.c.bf16 %v275, %v274
  %v312 = vpack.c.bf16 %v277, %v276
  %v313 = vpack.c.bf16 %v279, %v278
  %v314 = vpack.c.bf16 %v281, %v280
  %v315 = vpack.c.bf16 %v283, %v282
  %v348 = vunpack.c.l.b16 %v284
  %v349 = vunpack.c.h.b16 %v284
  %v350 = vunpack.c.l.b16 %v285
  %v351 = vunpack.c.h.b16 %v285
  %v352 = vunpack.c.l.b16 %v286
  %v353 = vunpack.c.h.b16 %v286
  %v354 = vunpack.c.l.b16 %v287
  %v355 = vunpack.c.h.b16 %v287
  %v356 = vunpack.c.l.b16 %v288
  %v357 = vunpack.c.h.b16 %v288
  %v358 = vunpack.c.l.b16 %v289
  %v359 = vunpack.c.h.b16 %v289
  %v360 = vunpack.c.l.b16 %v290
  %v361 = vunpack.c.h.b16 %v290
  %v362 = vunpack.c.l.b16 %v291
  %v363 = vunpack.c.h.b16 %v291
  %v364 = vunpack.c.l.b16 %v292
  %v365 = vunpack.c.h.b16 %v292
  %v366 = vunpack.c.l.b16 %v293
  %v367 = vunpack.c.h.b16 %v293
  %v368 = vunpack.c.l.b16 %v294
  %v369 = vunpack.c.h.b16 %v294
  %v370 = vunpack.c.l.b16 %v295
  %v371 = vunpack.c.h.b16 %v295
  %v372 = vunpack.c.l.b16 %v296
  %v373 = vunpack.c.h.b16 %v296
  %v374 = vunpack.c.l.b16 %v297
  %v375 = vunpack.c.h.b16 %v297
  %v376 = vunpack.c.l.b16 %v298
  %v377 = vunpack.c.h.b16 %v298
  %v378 = vunpack.c.l.b16 %v299
  %v379 = vunpack.c.h.b16 %v299
  %v380 = vunpack.c.l.b16 %v300
  %v381 = vunpack.c.h.b16 %v300
  %v382 = vunpack.c.l.b16 %v301
  %v383 = vunpack.c.h.b16 %v301
  %v384 = vunpack.c.l.b16 %v302
  %v385 = vunpack.c.h.b16 %v302
  %v386 = vunpack.c.l.b16 %v303
  %v387 = vunpack.c.h.b16 %v303
  %v388 = vunpack.c.l.b16 %v304
  %v389 = vunpack.c.h.b16 %v304
  %v390 = vunpack.c.l.b16 %v305
  %v391 = vunpack.c.h.b16 %v305
  %v392 = vunpack.c.l.b16 %v306
  %v393 = vunpack.c.h.b16 %v306
  %v394 = vunpack.c.l.b16 %v307
  %v395 = vunpack.c.h.b16 %v307
  %v396 = vunpack.c.l.b16 %v308
  %v397 = vunpack.c.h.b16 %v308
  %v398 = vunpack.c.l.b16 %v309
  %v399 = vunpack.c.h.b16 %v309
  %v400 = vunpack.c.l.b16 %v310
  %v401 = vunpack.c.h.b16 %v310
  %v402 = vunpack.c.l.b16 %v311
  %v403 = vunpack.c.h.b16 %v311
  %v404 = vunpack.c.l.b16 %v312
  %v405 = vunpack.c.h.b16 %v312
  %v406 = vunpack.c.l.b16 %v313
  %v407 = vunpack.c.h.b16 %v313
  %v408 = vunpack.c.l.b16 %v314
  %v409 = vunpack.c.h.b16 %v314
  %v410 = vunpack.c.l.b16 %v315
  %v411 = vunpack.c.h.b16 %v315
  %v412 = vpack.c.b16 %v348, %v348
  %v413 = vpack.c.b16 %v349, %v349
  %v414 = vpack.c.b16 %v350, %v350
  %v415 = vpack.c.b16 %v351, %v351
  %v416 = vpack.c.b16 %v352, %v352
  %v417 = vpack.c.b16 %v353, %v353
  %v418 = vpack.c.b16 %v354, %v354
  %v419 = vpack.c.b16 %v355, %v355
  %v420 = vpack.c.b16 %v356, %v356
  %v421 = vpack.c.b16 %v357, %v357
  %v422 = vpack.c.b16 %v358, %v358
  %v423 = vpack.c.b16 %v359, %v359
  %v424 = vpack.c.b16 %v360, %v360
  %v425 = vpack.c.b16 %v361, %v361
  %v426 = vpack.c.b16 %v362, %v362
  %v427 = vpack.c.b16 %v363, %v363
  %v428 = vpack.c.b16 %v364, %v364
  %v429 = vpack.c.b16 %v365, %v365
  %v430 = vpack.c.b16 %v366, %v366
  %v431 = vpack.c.b16 %v367, %v367
  %v432 = vpack.c.b16 %v368, %v368
  %v433 = vpack.c.b16 %v369, %v369
  %v434 = vpack.c.b16 %v370, %v370
  %v435 = vpack.c.b16 %v371, %v371
  %v436 = vpack.c.b16 %v372, %v372
  %v437 = vpack.c.b16 %v373, %v373
  %v438 = vpack.c.b16 %v374, %v374
  %v439 = vpack.c.b16 %v375, %v375
  %v440 = vpack.c.b16 %v376, %v376
  %v441 = vpack.c.b16 %v377, %v377
  %v442 = vpack.c.b16 %v378, %v378
  %v443 = vpack.c.b16 %v379, %v379
  %v444 = vpack.c.b16 %v380, %v380
  %v445 = vpack.c.b16 %v381, %v381
  %v446 = vpack.c.b16 %v382, %v382
  %v447 = vpack.c.b16 %v383, %v383
  %v448 = vpack.c.b16 %v384, %v384
  %v449 = vpack.c.b16 %v385, %v385
  %v450 = vpack.c.b16 %v386, %v386
  %v451 = vpack.c.b16 %v387, %v387
  %v452 = vpack.c.b16 %v388, %v388
  %v453 = vpack.c.b16 %v389, %v389
  %v454 = vpack.c.b16 %v390, %v390
  %v455 = vpack.c.b16 %v391, %v391
  %v456 = vpack.c.b16 %v392, %v392
  %v457 = vpack.c.b16 %v393, %v393
  %v458 = vpack.c.b16 %v394, %v394
  %v459 = vpack.c.b16 %v395, %v395
  %v460 = vpack.c.b16 %v396, %v396
  %v461 = vpack.c.b16 %v397, %v397
  %v462 = vpack.c.b16 %v398, %v398
  %v463 = vpack.c.b16 %v399, %v399
  %v464 = vpack.c.b16 %v400, %v400
  %v465 = vpack.c.b16 %v401, %v401
  %v466 = vpack.c.b16 %v402, %v402
  %v467 = vpack.c.b16 %v403, %v403
  %v468 = vpack.c.b16 %v404, %v404
  %v469 = vpack.c.b16 %v405, %v405
  %v470 = vpack.c.b16 %v406, %v406
  %v471 = vpack.c.b16 %v407, %v407
  %v472 = vpack.c.b16 %v408, %v408
  %v473 = vpack.c.b16 %v409, %v409
  %v474 = vpack.c.b16 %v410, %v410
  %v475 = vpack.c.b16 %v411, %v411
  %540 = vst [vmem:[%s3] sm:$0xf] %v412
  %541 = vst [vmem:[%s3 + $0x4] sm:$0xf] %v413
  %542 = vst [vmem:[%s3 + $0x8] sm:$0xf] %v414
  %543 = vst [vmem:[%s3 + $0xc] sm:$0xf] %v415
  %544 = vst [vmem:[%s3 + $0x10] sm:$0xf] %v416
  %545 = vst [vmem:[%s3 + $0x14] sm:$0xf] %v417
  %546 = vst [vmem:[%s3 + $0x18] sm:$0xf] %v418
  %547 = vst [vmem:[%s3 + $0x1c] sm:$0xf] %v419
  %548 = vst [vmem:[%s3 + $0x20] sm:$0xf] %v420
  %549 = vst [vmem:[%s3 + $0x24] sm:$0xf] %v421
  %550 = vst [vmem:[%s3 + $0x28] sm:$0xf] %v422
  %551 = vst [vmem:[%s3 + $0x2c] sm:$0xf] %v423
  %552 = vst [vmem:[%s3 + $0x30] sm:$0xf] %v424
  %553 = vst [vmem:[%s3 + $0x34] sm:$0xf] %v425
  %554 = vst [vmem:[%s3 + $0x38] sm:$0xf] %v426
  %555 = vst [vmem:[%s3 + $0x3c] sm:$0xf] %v427
  %556 = vst [vmem:[%s3 + $0x40] sm:$0xf] %v428
  %557 = vst [vmem:[%s3 + $0x44] sm:$0xf] %v429
  %558 = vst [vmem:[%s3 + $0x48] sm:$0xf] %v430
  %559 = vst [vmem:[%s3 + $0x4c] sm:$0xf] %v431
  %560 = vst [vmem:[%s3 + $0x50] sm:$0xf] %v432
  %561 = vst [vmem:[%s3 + $0x54] sm:$0xf] %v433
  %562 = vst [vmem:[%s3 + $0x58] sm:$0xf] %v434
  %563 = vst [vmem:[%s3 + $0x5c] sm:$0xf] %v435
  %564 = vst [vmem:[%s3 + $0x60] sm:$0xf] %v436
  %565 = vst [vmem:[%s3 + $0x64] sm:$0xf] %v437
  %566 = vst [vmem:[%s3 + $0x68] sm:$0xf] %v438
  %567 = vst [vmem:[%s3 + $0x6c] sm:$0xf] %v439
  %568 = vst [vmem:[%s3 + $0x70] sm:$0xf] %v440
  %569 = vst [vmem:[%s3 + $0x74] sm:$0xf] %v441
  %570 = vst [vmem:[%s3 + $0x78] sm:$0xf] %v442
  %571 = vst [vmem:[%s3 + $0x7c] sm:$0xf] %v443
  %572 = vst [vmem:[%s3 + $0x80] sm:$0xf] %v444
  %573 = vst [vmem:[%s3 + $0x84] sm:$0xf] %v445
  %574 = vst [vmem:[%s3 + $0x88] sm:$0xf] %v446
  %575 = vst [vmem:[%s3 + $0x8c] sm:$0xf] %v447
  %576 = vst [vmem:[%s3 + $0x90] sm:$0xf] %v448
  %577 = vst [vmem:[%s3 + $0x94] sm:$0xf] %v449
  %578 = vst [vmem:[%s3 + $0x98] sm:$0xf] %v450
  %579 = vst [vmem:[%s3 + $0x9c] sm:$0xf] %v451
  %580 = vst [vmem:[%s3 + $0xa0] sm:$0xf] %v452
  %581 = vst [vmem:[%s3 + $0xa4] sm:$0xf] %v453
  %582 = vst [vmem:[%s3 + $0xa8] sm:$0xf] %v454
  %583 = vst [vmem:[%s3 + $0xac] sm:$0xf] %v455
  %584 = vst [vmem:[%s3 + $0xb0] sm:$0xf] %v456
  %585 = vst [vmem:[%s3 + $0xb4] sm:$0xf] %v457
  %586 = vst [vmem:[%s3 + $0xb8] sm:$0xf] %v458
  %587 = vst [vmem:[%s3 + $0xbc] sm:$0xf] %v459
  %588 = vst [vmem:[%s3 + $0xc0] sm:$0xf] %v460
  %589 = vst [vmem:[%s3 + $0xc4] sm:$0xf] %v461
  %590 = vst [vmem:[%s3 + $0xc8] sm:$0xf] %v462
  %591 = vst [vmem:[%s3 + $0xcc] sm:$0xf] %v463
  %592 = vst [vmem:[%s3 + $0xd0] sm:$0xf] %v464
  %593 = vst [vmem:[%s3 + $0xd4] sm:$0xf] %v465
  %594 = vst [vmem:[%s3 + $0xd8] sm:$0xf] %v466
  %595 = vst [vmem:[%s3 + $0xdc] sm:$0xf] %v467
  %596 = vst [vmem:[%s3 + $0xe0] sm:$0xf] %v468
  %597 = vst [vmem:[%s3 + $0xe4] sm:$0xf] %v469
  %598 = vst [vmem:[%s3 + $0xe8] sm:$0xf] %v470
  %599 = vst [vmem:[%s3 + $0xec] sm:$0xf] %v471
  %600 = vst [vmem:[%s3 + $0xf0] sm:$0xf] %v472
  %601 = vst [vmem:[%s3 + $0xf4] sm:$0xf] %v473
  %602 = vst [vmem:[%s3 + $0xf8] sm:$0xf] %v474
  %603 = vst [vmem:[%s3 + $0xfc] sm:$0xf] %v475
  // Predicated region
  $region14: #{generator_forward.12} parent=0 // pred_check
    _
  $region15: #{generator_forward.12} parent=0 // pred_check_branch
    %605 = sbr.rel (0) target = $region17
  $region16: #{generator_forward.12} parent=0 // pred_region
    _
  $region17: #{generator_forward.12} parent=0 // pred_fallthru
    _
  // Predicated region
  $region18: #{generator_forward.12} parent=0 // pred_check
    _
  $region19: #{generator_forward.12} parent=0 // pred_check_branch
    %607 = sbr.rel (0) target = $region21
  $region20: #{generator_forward.12} parent=0 // pred_region
    _
  $region21: #{generator_forward.12} parent=0 // pred_fallthru
    _

// kernel: generator_forward.13
$region0: #{generator_forward.13}
  #allocation0 [shape = 'u32[]', space=smem, size = 0x4, offset = 0x4, fixed_abs, tag = 'smem constant byte address 0x4 - core index']
  #allocation1 [shape = 'u32[144,128]{1,0:T(1,128)}', space=vmem, size = 0x12000, scoped, tag = 'internal scratch']
  #allocation2 [shape = 'f32[1,1]{1,0:T(1,128)S(1)}', space=vmem, size = 0x200, scoped, tag = 'scoped memory for generator_forward.13']
  %s0 = inlined_call_operand.vmem [shape: bf16[4,1,32], index: 0, kind: input, shape index: {}]
  %s1 = inlined_call_operand.vmem [shape: bf16[4,32,512], index: 1, kind: input, shape index: {}]
  %s2 = inlined_call_operand.<no memory space> [shape: f32[1,1], index: 2, kind: input, shape index: {}]
  %s3 = inlined_call_operand.vmem [shape: f32[4,1,512], index: 3, kind: output, shape index: {}]
  %s4 = sld [smem:[#allocation0]]
  $region45: #{generator_forward.13} parent=0
    _
  %s6 = ssub.s32 1, %s4
  %s7 = scalar_select 0, %s6, %s4
  %v8 = vstv %s2
  %9 = vst [vmem:[#allocation2] sm:$0x1] %v8
  loop: start=0, step=1, limit=6
  $region2: #{generator_forward.13} parent=0 // loop_pre_header
    _
  $region3: #{generator_forward.13} parent=0 // loop_header
    %s11 = sphi 0, %s15
    %p12 = scmp.ge.s32.totalorder %s11, 6
    %s18 = sphi 0, %s30
    %s19 = sphi 0, %s26
    %s20 = sphi 0, %s18
    %s21 = sphi 0, %s19
    %s22 = sphi 0, %s20
    %s23 = sphi 0, %s21
    %s33 = sphi 0, %s35
    %s36 = sphi 0, %s33
    %s37 = sphi 0, %s36
    %s53 = sphi 0, %s37
    %s61 = sphi 0, %s63
    %s64 = sphi 0, %s61
    %s65 = sphi 0, %s64
    %s81 = sphi 0, %s65
    %s85 = sphi 0, %s85
    %s87 = sphi 0, %s85
    %s88 = sphi 0, %s87
    %s102 = sphi 0, %s88
    %s110 = sphi 0, %s112
    %s113 = sphi 0, %s110
    %s114 = sphi 0, %s113
    %s130 = sphi 0, %s114
  $region4: #{generator_forward.13} parent=0 // loop_header_branch
    %14 = sbr.rel (%p12) target = $region8
  $region5: #{generator_forward.13} parent=0 // loop_body
    %s16 = ssub.s32 %s11, 1
    %s17 = ssub.s32 %s11, 2
    %s24 = sadd.s32 1, %s19
    %p25 = scmp.ge.s32.totalorder %s24, 1
    %s26 = scalar_select %p25, 0, %s24
    %s27 = sadd.s32 1, %s18
    %s28 = scalar_select %p25, %s27, %s18
    %p29 = scmp.ge.s32.totalorder %s28, 4
    %s30 = scalar_select %p29, 0, %s28
    %s31 = ssub.s32 %s18, %s30
    %p32 = scmp.eq.s32.totalorder %s31, 0
    %s34 = sadd.s32 %s33, 1
    %s35 = scalar_select %p32, %s33, %s34
    %p38 = pneg %p32
    %p39 = scmp.eq.s32.totalorder %s11, 3
    %p40 = por %p38, %p39
    %p41 = scmp.ne.s32.totalorder %s33, %s36
    %p42 = scmp.eq.s32.totalorder %s11, 0
    %p43 = por %p41, %p42
    %p44 = scmp.ne.s32.totalorder %s33, %s36
    %p45 = scmp.eq.s32.totalorder %s16, 3
    %p46 = por %p44, %p45
    %p47 = scmp.ne.s32.totalorder %s36, %s37
    %p48 = scmp.eq.s32.totalorder %s16, 0
    %p49 = por %p47, %p48
    %p50 = scmp.ne.s32.totalorder %s36, %s37
    %p51 = scmp.eq.s32.totalorder %s17, 3
    %p52 = por %p50, %p51
    %p54 = scmp.ne.s32.totalorder %s37, %s53
    %p55 = scmp.eq.s32.totalorder %s17, 0
    %p56 = por %p54, %p55
    %s57 = ssub.s32 %s18, %s30
    %s58 = ssub.s32 %s19, %s26
    %s59 = sor.u32 %s57, %s58
    %p60 = scmp.eq.s32.totalorder %s59, 0
    %s62 = sadd.s32 %s61, 1
    %s63 = scalar_select %p60, %s61, %s62
    %p66 = pneg %p60
    %p67 = scmp.eq.s32.totalorder %s11, 3
    %p68 = por %p66, %p67
    %p69 = scmp.ne.s32.totalorder %s61, %s64
    %p70 = scmp.eq.s32.totalorder %s11, 0
    %p71 = por %p69, %p70
    %p72 = scmp.ne.s32.totalorder %s61, %s64
    %p73 = scmp.eq.s32.totalorder %s16, 3
    %p74 = por %p72, %p73
    %p75 = scmp.ne.s32.totalorder %s64, %s65
    %p76 = scmp.eq.s32.totalorder %s16, 0
    %p77 = por %p75, %p76
    %p78 = scmp.ne.s32.totalorder %s64, %s65
    %p79 = scmp.eq.s32.totalorder %s17, 3
    %p80 = por %p78, %p79
    %p82 = scmp.ne.s32.totalorder %s65, %s81
    %p83 = scmp.eq.s32.totalorder %s17, 0
    %p84 = por %p82, %p83
    %s86 = sadd.s32 %s85, 1
    %p89 = scmp.eq.s32.totalorder %s11, 3
    %p90 = scmp.ne.s32.totalorder %s85, %s87
    %p91 = scmp.eq.s32.totalorder %s11, 0
    %p92 = por %p90, %p91
    %p93 = scmp.ne.s32.totalorder %s85, %s87
    %p94 = scmp.eq.s32.totalorder %s16, 3
    %p95 = por %p93, %p94
    %p96 = scmp.ne.s32.totalorder %s87, %s88
    %p97 = scmp.eq.s32.totalorder %s16, 0
    %p98 = por %p96, %p97
    %p99 = scmp.ne.s32.totalorder %s87, %s88
    %p100 = scmp.eq.s32.totalorder %s17, 3
    %p101 = por %p99, %p100
    %p103 = scmp.ne.s32.totalorder %s88, %s102
    %p104 = scmp.eq.s32.totalorder %s17, 0
    %p105 = por %p103, %p104
    %s106 = ssub.s32 %s18, %s30
    %s107 = ssub.s32 %s19, %s26
    %s108 = sor.u32 %s106, %s107
    %p109 = scmp.eq.s32.totalorder %s108, 0
    %s111 = sadd.s32 %s110, 1
    %s112 = scalar_select %p109, %s110, %s111
    %p115 = pneg %p109
    %p116 = scmp.eq.s32.totalorder %s11, 3
    %p117 = por %p115, %p116
    %p118 = scmp.ne.s32.totalorder %s110, %s113
    %p119 = scmp.eq.s32.totalorder %s11, 0
    %p120 = por %p118, %p119
    %p121 = scmp.ne.s32.totalorder %s110, %s113
    %p122 = scmp.eq.s32.totalorder %s16, 3
    %p123 = por %p121, %p122
    %p124 = scmp.ne.s32.totalorder %s113, %s114
    %p125 = scmp.eq.s32.totalorder %s16, 0
    %p126 = por %p124, %p125
    %p127 = scmp.ne.s32.totalorder %s113, %s114
    %p128 = scmp.eq.s32.totalorder %s17, 3
    %p129 = por %p127, %p128
    %p131 = scmp.ne.s32.totalorder %s114, %s130
    %p132 = scmp.eq.s32.totalorder %s17, 0
    %p133 = por %p131, %p132
    %p134 = scmp.le.s32.totalorder 1, %s11
    %p135 = scmp.lt.s32.totalorder %s11, 5
    %p136 = pnand %p134, %p135
    %p137 = pneg %p136
    // Predicated region
    $region9: #{generator_forward.13} parent=5 // pred_check
      _
    $region10: #{generator_forward.13} parent=5 // pred_check_branch
      %139 = sbr.rel (%p136) target = $region12
    $region11: #{generator_forward.13} parent=5 // pred_region
      %s140 = ssub.s32 %s11, 1
      // Predicated region
      $region13: #{generator_forward.13} parent=11 // pred_check
        %p141 = pneg %p98
      $region14: #{generator_forward.13} parent=11 // pred_check_branch
        %143 = sbr.rel (%p141) target = $region16
      $region15: #{generator_forward.13} parent=11 // pred_region
        _
      $region16: #{generator_forward.13} parent=11 // pred_fallthru
        _
    $region12: #{generator_forward.13} parent=5 // pred_fallthru
      _
    %p144 = scmp.lt.s32.totalorder %s11, 4
    // Predicated region
    $region17: #{generator_forward.13} parent=5 // pred_check
      %p145 = pneg %p144
    $region18: #{generator_forward.13} parent=5 // pred_check_branch
      %147 = sbr.rel (%p145) target = $region20
    $region19: #{generator_forward.13} parent=5 // pred_region
      // Predicated region
      $region21: #{generator_forward.13} parent=19 // pred_check
        %p148 = pneg %p43
      $region22: #{generator_forward.13} parent=19 // pred_check_branch
        %150 = sbr.rel (%p148) target = $region24
      $region23: #{generator_forward.13} parent=19 // pred_region
        %p151 = scmp.lt.s32.totalorder %s18, 3
        %s152 = scalar_select %p151, %s18, 3
        %s153 = scalar_lea.vmem %s0, %s152
      $region24: #{generator_forward.13} parent=19 // pred_fallthru
        _
      // Predicated region
      $region25: #{generator_forward.13} parent=19 // pred_check
        %p154 = pneg %p71
      $region26: #{generator_forward.13} parent=19 // pred_check_branch
        %156 = sbr.rel (%p154) target = $region28
      $region27: #{generator_forward.13} parent=19 // pred_region
        %s157 = smul.u32 4, %s19
        %p158 = scmp.lt.s32.totalorder %s18, 3
        %s159 = scalar_select %p158, %s18, 3
        %p160 = scmp.lt.s32.totalorder %s157, 3
        %s161 = scalar_select %p160, %s157, 3
        %s162 = smul.addr %s159, 16
        %s163 = sadd.s32 %s161, %s162
        %s164 = smul.addr %s163, 4
        %s165 = scalar_lea.vmem %s1, %s164
        %s166 = smul.u32 4, %s19
      $region28: #{generator_forward.13} parent=19 // pred_fallthru
        _
    $region20: #{generator_forward.13} parent=5 // pred_fallthru
      _
    %p167 = scmp.le.s32.totalorder 1, %s11
    %p168 = scmp.lt.s32.totalorder %s11, 5
    %p169 = pnand %p167, %p168
    %p170 = pneg %p169
    // Predicated region
    $region29: #{generator_forward.13} parent=5 // pred_check
      _
    $region30: #{generator_forward.13} parent=5 // pred_check_branch
      %172 = sbr.rel (%p169) target = $region32
    $region31: #{generator_forward.13} parent=5 // pred_region
      %s173 = ssub.s32 %s11, 1
      %p174 = scmp.lt.s32.totalorder %s20, 3
      %s175 = scalar_select %p174, %s20, 3
      %s176 = scalar_lea.vmem %s0, %s175
      %p177 = pneg %p49
      %p178 = pneg %p46
      %s179 = smul.u32 4, %s21
      %p180 = scmp.lt.s32.totalorder %s20, 3
      %s181 = scalar_select %p180, %s20, 3
      %p182 = scmp.lt.s32.totalorder %s179, 3
      %s183 = scalar_select %p182, %s179, 3
      %s184 = smul.addr %s181, 16
      %s185 = sadd.s32 %s183, %s184
      %s186 = smul.addr %s185, 4
      %s187 = scalar_lea.vmem %s1, %s186
      %p188 = pneg %p77
      %p189 = pneg %p74
      %p190 = pneg %p98
      %p191 = pneg %p95
      %p192 = pneg %p126
      %p193 = pneg %p123
      %s194 = smul.u32 4, %s21
      %p195 = scmp.lt.s32.totalorder %s20, 3
      %s196 = scalar_select %p195, %s20, 3
      %p197 = scmp.lt.s32.totalorder %s194, 3
      %s198 = scalar_select %p197, %s194, 3
      %s199 = smul.addr %s196, 4
      %s200 = sadd.s32 %s198, %s199
      %s201 = scalar_lea.vmem %s3, %s200
      %p202 = scmp.lt.s32.totalorder %s20, 3
      %s203 = scalar_select %p202, %s20, 3
      %s204 = scalar_lea.vmem %s0, %s203
      %s205 = smul.u32 4, %s21
      %p206 = scmp.lt.s32.totalorder %s20, 3
      %s207 = scalar_select %p206, %s20, 3
      %p208 = scmp.lt.s32.totalorder %s205, 3
      %s209 = scalar_select %p208, %s205, 3
      %s210 = smul.addr %s207, 16
      %s211 = sadd.s32 %s209, %s210
      %s212 = smul.addr %s211, 4
      %s213 = scalar_lea.vmem %s1, %s212
      %s214 = smul.u32 4, %s21
      %s215 = smul.u32 4, %s21
      %p216 = scmp.lt.s32.totalorder %s20, 3
      %s217 = scalar_select %p216, %s20, 3
      %p218 = scmp.lt.s32.totalorder %s215, 3
      %s219 = scalar_select %p218, %s215, 3
      %s220 = smul.addr %s217, 4
      %s221 = sadd.s32 %s219, %s220
      %s222 = scalar_lea.vmem %s3, %s221
      %s223 = smul.u32 4, %s21
      %v225 = vld [vmem:[%s204] sm:$0x1]
      %v226 = vld [vmem:[%s213] sm:$0xff]
      %v227 = vld [vmem:[%s213 + $0x8] sm:$0xff]
      %v228 = vld [vmem:[%s213 + $0x10] sm:$0xff]
      %v229 = vld [vmem:[%s213 + $0x18] sm:$0xff]
      %v230 = vld [vmem:[%s213 + $0x20] sm:$0xff]
      %v231 = vld [vmem:[%s213 + $0x28] sm:$0xff]
      %v232 = vld [vmem:[%s213 + $0x30] sm:$0xff]
      %v233 = vld [vmem:[%s213 + $0x38] sm:$0xff]
      %v234 = vld [vmem:[#allocation2] sm:$0x1]
      %236 = vset.pattern.permute.xlu0 0
      %237 = vperm.xlu0 %236, %v234
      %v238 = vpop.permute.xlu0 %237
      %v240 = vlaneseq
      %v241 = vshrl.u32 %v240, 7
      %v242 = vsub.s32 0, %v241
      %v243 = vrot.slane %v238, %v242
      %v252 = vunpack.c.l.b16 %v226
      %v253 = vunpack.c.h.b16 %v226
      %v254 = vunpack.c.l.b16 %v227
      %v255 = vunpack.c.h.b16 %v227
      %v256 = vunpack.c.l.b16 %v228
      %v257 = vunpack.c.h.b16 %v228
      %v258 = vunpack.c.l.b16 %v229
      %v259 = vunpack.c.h.b16 %v229
      %v260 = vunpack.c.l.b16 %v230
      %v261 = vunpack.c.h.b16 %v230
      %v262 = vunpack.c.l.b16 %v231
      %v263 = vunpack.c.h.b16 %v231
      %v264 = vunpack.c.l.b16 %v232
      %v265 = vunpack.c.h.b16 %v232
      %v266 = vunpack.c.l.b16 %v233
      %v267 = vunpack.c.h.b16 %v233
      %v268 = vpack.c.b16 %v256, %v252
      %v269 = vpack.c.b16 %v257, %v253
      %v270 = vpack.c.b16 %v258, %v254
      %v271 = vpack.c.b16 %v259, %v255
      %v272 = vpack.c.b16 %v264, %v260
      %v273 = vpack.c.b16 %v265, %v261
      %v274 = vpack.c.b16 %v266, %v262
      %v275 = vpack.c.b16 %v267, %v263
      %vm284 = vcmask 261120
      %v286 = vsel %vm284, %v225, 0
      %288 = vmatprep.subr.bf16.mxu0 0
      %289 = vmatpush1.bf16.msra.mxu0 0
      %290 = vmatprep.subr.bf16.mxu0 0
      %291 = vmatpush1.bf16.msra.mxu0 0
      %292 = vmatprep.subr.bf16.mxu0 0
      %293 = vmatpush1.bf16.msra.mxu0 0
      %294 = vmatprep.subr.bf16.mxu0 0
      %295 = vmatpush1.bf16.msra.mxu0 0
      %296 = vmatprep.subr.bf16.mxu0 0
      %297 = vmatpush1.bf16.msra.mxu0 0
      %298 = vmatprep.subr.bf16.mxu0 0
      %299 = vmatpush1.bf16.msra.mxu0 0
      %300 = vmatprep.subr.bf16.mxu0 %v273
      %301 = vmatpush1.bf16.msra.mxu0 %v272
      %302 = vmatprep.subr.bf16.mxu0 %v269
      %303 = vmatpush1.bf16.msra.mxu0 %v268
      %304 = vmatprep.subr.bf16.mxu0 0
      %305 = vmatpush2.bf16.msra.mxu0 0
      %306 = vmatprep.subr.bf16.mxu0 0
      %307 = vmatpush2.bf16.msra.mxu0 0
      %308 = vmatprep.subr.bf16.mxu0 0
      %309 = vmatpush2.bf16.msra.mxu0 0
      %310 = vmatprep.subr.bf16.mxu0 0
      %311 = vmatpush2.bf16.msra.mxu0 0
      %312 = vmatprep.subr.bf16.mxu0 0
      %313 = vmatpush2.bf16.msra.mxu0 0
      %314 = vmatprep.subr.bf16.mxu0 0
      %315 = vmatpush2.bf16.msra.mxu0 0
      %316 = vmatprep.subr.bf16.mxu0 0
      %317 = vmatpush2.bf16.msra.mxu0 0
      %318 = vmatprep.subr.bf16.mxu0 0
      %319 = vmatpush2.bf16.msra.mxu0 0
      %320 = vmatprep.mubr.bf16.mxu0 0
      %321 = vmatmul.mubr.bf16.gmra.mxu0 %v286
      %v322 = vpop.f32.mrf.mxu0
      %v323 = vadd.f32 %v243, %v322
      %v324 = vpop.f32.mrf.mxu0
      %v325 = vadd.f32 %v243, %v324
      %v326 = vpop.f32.mrf.mxu0
      %v327 = vpop.f32.mrf.mxu0
      %328 = vdwg.mxu0
      %329 = vmatprep.subr.bf16.mxu0 0
      %330 = vmatpush1.bf16.msra.mxu0 0
      %331 = vmatprep.subr.bf16.mxu0 0
      %332 = vmatpush1.bf16.msra.mxu0 0
      %333 = vmatprep.subr.bf16.mxu0 0
      %334 = vmatpush1.bf16.msra.mxu0 0
      %335 = vmatprep.subr.bf16.mxu0 0
      %336 = vmatpush1.bf16.msra.mxu0 0
      %337 = vmatprep.subr.bf16.mxu0 0
      %338 = vmatpush1.bf16.msra.mxu0 0
      %339 = vmatprep.subr.bf16.mxu0 0
      %340 = vmatpush1.bf16.msra.mxu0 0
      %341 = vmatprep.subr.bf16.mxu0 %v275
      %342 = vmatpush1.bf16.msra.mxu0 %v274
      %343 = vmatprep.subr.bf16.mxu0 %v271
      %344 = vmatpush1.bf16.msra.mxu0 %v270
      %345 = vmatprep.subr.bf16.mxu0 0
      %346 = vmatpush2.bf16.msra.mxu0 0
      %347 = vmatprep.subr.bf16.mxu0 0
      %348 = vmatpush2.bf16.msra.mxu0 0
      %349 = vmatprep.subr.bf16.mxu0 0
      %350 = vmatpush2.bf16.msra.mxu0 0
      %351 = vmatprep.subr.bf16.mxu0 0
      %352 = vmatpush2.bf16.msra.mxu0 0
      %353 = vmatprep.subr.bf16.mxu0 0
      %354 = vmatpush2.bf16.msra.mxu0 0
      %355 = vmatprep.subr.bf16.mxu0 0
      %356 = vmatpush2.bf16.msra.mxu0 0
      %357 = vmatprep.subr.bf16.mxu0 0
      %358 = vmatpush2.bf16.msra.mxu0 0
      %359 = vmatprep.subr.bf16.mxu0 0
      %360 = vmatpush2.bf16.msra.mxu0 0
      %361 = vmatprep.mubr.bf16.mxu0 0
      %362 = vmatmul.mubr.bf16.gmra.mxu0 %v286
      %v363 = vpop.f32.mrf.mxu0
      %v364 = vadd.f32 %v243, %v363
      %v365 = vpop.f32.mrf.mxu0
      %v366 = vadd.f32 %v243, %v365
      %v367 = vpop.f32.mrf.mxu0
      %v368 = vpop.f32.mrf.mxu0
      %369 = vdwg.mxu0
      %v370 = vtanh.pop %v323
      %v371 = vtanh.pop %v325
      %v372 = vtanh.pop %v364
      %v373 = vtanh.pop %v366
      %v378 = vcombine.low %v370, %v371
      %v379 = vcombine.low %v372, %v373
      %v381 = vunpack.c.l.s4 1966171168
      %v382 = vunpack.c.0.s8 %v381
      %v383 = vlaneseq
      %v384 = vshrl.u32 %v383, 7
      %v385 = vsub.s32 %v382, %v384
      %v386 = vrot.slane %v378, %v385
      %v388 = vunpack.c.l.s4 1966171168
      %v389 = vunpack.c.0.s8 %v388
      %v390 = vlaneseq
      %v391 = vshrl.u32 %v390, 7
      %v392 = vsub.s32 %v389, %v391
      %v393 = vrot.slane %v379, %v392
      %v394 = vcombine.low %v386, %v393
      %v396 = vunpack.c.l.s4 1966171168
      %v397 = vunpack.c.0.s8 %v396
      %v398 = vlaneseq
      %v399 = vshrl.u32 %v398, 7
      %v400 = vsub.s32 %v397, %v399
      %v401 = vrot.slane %v394, %v400
      %v403 = vlaneseq
      %vm404 = vcmp.ge.s32.totalorder %v403, 0
      %vm405 = vcmp.lt.s32.totalorder %v403, 512
      %vm406 = vmand %vm404, %vm405
      %407 = vst.msk [vmem:[%s222] sm:$0xf] %vm406, %v401
      %s408 = smul.u32 4, %s21
      %p409 = scmp.lt.s32.totalorder %s20, 3
      %s410 = scalar_select %p409, %s20, 3
      %p411 = scmp.lt.s32.totalorder %s408, 3
      %s412 = scalar_select %p411, %s408, 3
      %s413 = smul.addr %s410, 4
      %s414 = sadd.s32 %s412, %s413
      %s415 = scalar_lea.vmem %s3, %s414
      // Predicated region
      $region33: #{generator_forward.13} parent=31 // pred_check
        %p416 = pneg %p123
      $region34: #{generator_forward.13} parent=31 // pred_check_branch
        %418 = sbr.rel (%p416) target = $region36
      $region35: #{generator_forward.13} parent=31 // pred_region
        %s419 = smul.u32 4, %s21
      $region36: #{generator_forward.13} parent=31 // pred_fallthru
        _
    $region32: #{generator_forward.13} parent=5 // pred_fallthru
      _
    %p420 = scmp.le.s32.totalorder 2, %s11
    // Predicated region
    $region37: #{generator_forward.13} parent=5 // pred_check
      %p421 = pneg %p420
    $region38: #{generator_forward.13} parent=5 // pred_check_branch
      %423 = sbr.rel (%p421) target = $region40
    $region39: #{generator_forward.13} parent=5 // pred_region
      %s424 = ssub.s32 %s11, 2
      // Predicated region
      $region41: #{generator_forward.13} parent=39 // pred_check
        %p425 = pneg %p129
      $region42: #{generator_forward.13} parent=39 // pred_check_branch
        %427 = sbr.rel (%p425) target = $region44
      $region43: #{generator_forward.13} parent=39 // pred_region
        %s428 = smul.u32 4, %s23
        %p429 = scmp.lt.s32.totalorder %s22, 3
        %s430 = scalar_select %p429, %s22, 3
        %p431 = scmp.lt.s32.totalorder %s428, 3
        %s432 = scalar_select %p431, %s428, 3
        %s433 = smul.addr %s430, 4
        %s434 = sadd.s32 %s432, %s433
        %s435 = scalar_lea.vmem %s3, %s434
      $region44: #{generator_forward.13} parent=39 // pred_fallthru
        _
    $region40: #{generator_forward.13} parent=5 // pred_fallthru
      _
  $region6: #{generator_forward.13} parent=0 // loop_footer
    %s15 = sadd.s32 1, %s11
  $region7: #{generator_forward.13} parent=0 // loop_footer_branch
    %10 = sbr.rel target = $region3
  $region8: #{generator_forward.13} parent=0 // loop_exit
    _

</llo_original>
